<compile_context>
chip_gen: v5e
topology: v5e:2x2
jax: 0.10.0
libtpu: 0.0.40
codegen_flags: <defaults>
</compile_context>

<pallas_src>
import functools
import math

import jax
import jax.numpy as jnp
from jax import lax
from jax.experimental import pallas as pl
from jax.experimental.pallas import tpu as pltpu


_MASKED = -1e9          # matches attention_scores.masked_fill_(mask == 0, -1e9)
_UNMASKED_CAP = 3.0e38  # effectively +inf for jnp.minimum (fits f32)


# ----------------------------------------------------------------------------
# In-kernel helpers
# ----------------------------------------------------------------------------
def _cond_layer_norm(x, g_row, c_row, *, eps):
    """x: (S,F) f32; g_row/c_row: (1,F) f32  ->  g * norm(x) + c  (f32).

    torch.std default is unbiased (ddof=1); eps is added to std (not var)."""
    f = x.shape[-1]
    mean = jnp.mean(x, axis=-1, keepdims=True)
    var = jnp.sum((x - mean) ** 2, axis=-1, keepdims=True) * (1.0 / max(f - 1, 1))
    inv = 1.0 / (jnp.sqrt(var) + eps)       # exact: scales the residual path
    return g_row * ((x - mean) * inv) + c_row


def _mha(q, k, v, cap, w_o_ref, *, num_heads, mm_dtype, approx_recip):
    """Multi-head attention on already-projected q:(S,F), k/v:(Skv,F) (f32).

    cap: (S,Skv) f32 with -1e9 at masked positions and +BIG elsewhere;
    jnp.minimum(scores, cap) == masked_fill_(mask==0, -1e9).

    Per-head outputs never touch VMEM: W_o is applied per head-row block and the
    (S,F) contributions are accumulated in f32 registers."""
    f = q.shape[-1]
    d_k = f // num_heads
    scale = 1.0 / math.sqrt(d_k)
    y = None
    for h in range(num_heads):                       # static unroll
        sl = slice(h * d_k, (h + 1) * d_k)
        qh, kh, vh = q[:, sl], k[:, sl], v[:, sl]
        s = lax.dot_general(qh, kh, (((1,), (1,)), ((), ())),
                            preferred_element_type=jnp.float32) * scale   # (S, Skv)
        s = jnp.minimum(s, cap)                      # hoisted mask, 1 VPU op / head
        m = jnp.max(s, axis=-1, keepdims=True)
        p = jnp.exp(s - m)
        denom = jnp.sum(p, axis=-1, keepdims=True)
        p = p * (pl.reciprocal(denom, approx=True) if approx_recip else 1.0 / denom)
        # TODO(synk): attention-score dropout (eval-mode identity).
        oh = jnp.dot(p.astype(mm_dtype), vh.astype(mm_dtype),
                     preferred_element_type=jnp.float32)                  # (S, d_k)
        wo_h = w_o_ref[pl.ds(h * d_k, d_k), :]                            # (d_k, F) bf16
        contrib = jnp.dot(oh.astype(mm_dtype), wo_h,
                          preferred_element_type=jnp.float32)             # (S, F)
        y = contrib if y is None else y + contrib
    return y


# ----------------------------------------------------------------------------
# The single fused kernel (one batch element per grid step)
# ----------------------------------------------------------------------------
def _decoder_block_kernel(x_ref, enc_ref, gc_ref, tcap_ref, scap_ref,
                          w_sqkv_ref, w_so_ref, w_cq_ref, w_ckv_ref, w_co_ref,
                          w_f1_ref, b_f1_ref, w_f2_ref, b_f2_ref,
                          o_ref, *, num_heads, eps, approx_recip):
    f = x_ref.shape[-1]
    mm = w_sqkv_ref.dtype                               # bf16 fast path
    x = x_ref[0].astype(jnp.float32)                    # (S, F)
    gc = gc_ref[0]                                      # (6, F) f32: [g0,c0,g1,c1,g2,c2]
    tcap = tcap_ref[...]                                # (S, S)  f32
    scap = scap_ref[...]                                # (S, Skv) f32

    # --- 1) self-attention residual ------------------------------------------
    n0 = _cond_layer_norm(x, gc[0:1], gc[1:2], eps=eps)
    qkv = jnp.dot(n0.astype(mm), w_sqkv_ref[...],
                  preferred_element_type=jnp.float32)                     # (S, 3F)
    y = _mha(qkv[:, :f], qkv[:, f:2 * f], qkv[:, 2 * f:], tcap, w_so_ref,
             num_heads=num_heads, mm_dtype=mm, approx_recip=approx_recip)
    x = x + y                                           # residual dropout: identity

    # --- 2) cross-attention residual ------------------------------------------
    n1 = _cond_layer_norm(x, gc[2:3], gc[3:4], eps=eps)
    q2 = jnp.dot(n1.astype(mm), w_cq_ref[...],
                 preferred_element_type=jnp.float32)                      # (S, F)
    kv = jnp.dot(enc_ref[0].astype(mm), w_ckv_ref[...],
                 preferred_element_type=jnp.float32)                      # (Skv, 2F)
    y = _mha(q2, kv[:, :f], kv[:, f:], scap, w_co_ref,
             num_heads=num_heads, mm_dtype=mm, approx_recip=approx_recip)
    x = x + y

    # --- 3) feed-forward residual ----------------------------------------------
    n2 = _cond_layer_norm(x, gc[4:5], gc[5:6], eps=eps)
    h = jnp.dot(n2.astype(mm), w_f1_ref[...],
                preferred_element_type=jnp.float32) + b_f1_ref[...]       # (S, d_ff)
    h = jnp.maximum(h, 0.0)
    # TODO(synk): FFN-internal dropout (eval-mode identity).
    y = jnp.dot(h.astype(mm), w_f2_ref[...],
                preferred_element_type=jnp.float32) + b_f2_ref[...]       # (S, F)

    o_ref[0] = (x + y).astype(o_ref.dtype)


# ----------------------------------------------------------------------------
# One-time parameter preparation (transpose, bf16 cast, weight fusion)
# ----------------------------------------------------------------------------
def prepare_params(params, *, matmul_dtype=jnp.bfloat16):
    """Pre-transpose Linear weights to (in,out), pre-cast matmul weights to bf16,
    fuse Q/K/V (self) and K/V (cross), and fuse the six lang-conditioning
    projections into a single (E, 6F) matmul. Call once, reuse per forward."""
    t = lambda w: jnp.asarray(w).T
    wc = lambda w: t(w).astype(matmul_dtype)
    prep = {
        "w_self_qkv": jnp.concatenate(
            [wc(params["self_wq"]), wc(params["self_wk"]), wc(params["self_wv"])],
            axis=-1),                                                     # (F, 3F)
        "w_self_o": wc(params["self_wo"]),                                # (F, F)
        "w_cross_q": wc(params["cross_wq"]),                              # (F, F)
        "w_cross_kv": jnp.concatenate(
            [wc(params["cross_wk"]), wc(params["cross_wv"])], axis=-1),   # (F, 2F)
        "w_cross_o": wc(params["cross_wo"]),                              # (F, F)
        "w_ffn1": wc(params["ffn_w1"]),                                   # (F, d_ff)
        "b_ffn1": params["ffn_b1"].reshape(1, -1).astype(jnp.float32),    # (1, d_ff)
        "w_ffn2": wc(params["ffn_w2"]),                                   # (d_ff, F)
        "b_ffn2": params["ffn_b2"].reshape(1, -1).astype(jnp.float32),    # (1, F)
    }
    ws, bs = [], []
    for i in range(3):
        ws += [t(params[f"ln{i}_scale_w"]), t(params[f"ln{i}_bias_w"])]   # (E, F)
        bs += [params[f"ln{i}_scale_b"], params[f"ln{i}_bias_b"]]         # (F,)
    prep["cond_w"] = jnp.concatenate(ws, axis=-1).astype(jnp.float32)     # (E, 6F)
    prep["cond_b"] = jnp.concatenate(bs, axis=-1).astype(jnp.float32)     # (6F,)
    prep["alpha"] = jnp.stack(
        [params[f"ln{i}_alpha"] for i in range(3)]).astype(jnp.float32)   # (3, F)
    prep["beta"] = jnp.stack(
        [params[f"ln{i}_beta"] for i in range(3)]).astype(jnp.float32)    # (3, F)
    return prep


# ----------------------------------------------------------------------------
# Forward wrapper: hoisted conditioning + mask caps + ONE pallas_call
# ----------------------------------------------------------------------------
@functools.partial(jax.jit, static_argnames=("num_heads", "eps", "approx_recip"))
def decoder_block_forward(x, encoder_output, src_mask, tgt_mask, lang_emb, prep, *,
                          num_heads, eps=1e-6, approx_recip=True):
    """Pallas forward of DecoderBlock (eval mode). x/enc: (B,S,F); lang: (B,E)."""
    B, S, F = x.shape
    Skv = encoder_output.shape[1]
    d_ff = prep["w_ffn1"].shape[-1]

    # All six conditioning projections as ONE (B,E)@(E,6F) matmul (hoisted).
    cond = jnp.matmul(lang_emb.astype(jnp.float32), prep["cond_w"],
                      precision="highest") + prep["cond_b"]               # (B, 6F)
    parts = jnp.split(cond, 6, axis=-1)
    rows = []
    for i in range(3):
        rows.append(prep["alpha"][i] * parts[2 * i])        # g_i = alpha * cond_scale
        rows.append(prep["beta"][i] + parts[2 * i + 1])     # c_i = beta  + cond_bias
    gc = jnp.stack(rows, axis=1)                            # (B, 6, F) f32

    # Mask caps: jnp.minimum(scores, cap) reproduces masked_fill_(mask==0, -1e9),
    # hoisted out of the per-head loop (1 VPU op per head instead of cmp+select).
    tcap = jnp.where(tgt_mask == 0, _MASKED, _UNMASKED_CAP).astype(jnp.float32)  # (S, S)
    scap = jnp.where(src_mask == 0, _MASKED, _UNMASKED_CAP).astype(jnp.float32)  # (S, Skv)

    kernel = functools.partial(_decoder_block_kernel, num_heads=num_heads,
                               eps=eps, approx_recip=approx_recip)

    batch3 = lambda shp: pl.BlockSpec(shp, lambda b: (b, 0, 0))
    const2 = lambda shp: pl.BlockSpec(shp, lambda b: (0, 0))

    return pl.pallas_call(
        kernel,
        out_shape=jax.ShapeDtypeStruct((B, S, F), x.dtype),
        grid_spec=pltpu.PrefetchScalarGridSpec(
            num_scalar_prefetch=0,
            grid=(B,),
            in_specs=[
                batch3((1, S, F)),        # x
                batch3((1, Skv, F)),      # encoder_output
                batch3((1, 6, F)),        # gc rows [g0,c0,g1,c1,g2,c2]
                const2((S, S)),           # tgt mask cap
                const2((S, Skv)),         # src mask cap
                const2((F, 3 * F)),       # fused self Q/K/V
                const2((F, F)),           # self  W_o
                const2((F, F)),           # cross W_q
                const2((F, 2 * F)),       # fused cross K/V
                const2((F, F)),           # cross W_o
                const2((F, d_ff)),        # FFN W1^T
                const2((1, d_ff)),        # FFN b1
                const2((d_ff, F)),        # FFN W2^T
                const2((1, F)),           # FFN b2
            ],
            out_specs=pl.BlockSpec((1, S, F), lambda b: (b, 0, 0)),
        ),
        compiler_params=pltpu.CompilerParams(dimension_semantics=("parallel",)),
    )(x, encoder_output, gc, tcap, scap,
      prep["w_self_qkv"], prep["w_self_o"], prep["w_cross_q"],
      prep["w_cross_kv"], prep["w_cross_o"],
      prep["w_ffn1"], prep["b_ffn1"], prep["w_ffn2"], prep["b_ffn2"])


# ----------------------------------------------------------------------------
# Plain-JAX reference mirroring the PyTorch module (f32, eval mode)
# ----------------------------------------------------------------------------
def _cond_ln_ref(x, lang, alpha, beta, wsc, bsc, wbi, bbi, eps):
    xf = x.astype(jnp.float32)
    mean = xf.mean(axis=-1, keepdims=True)
    std = jnp.sqrt(((xf - mean) ** 2).sum(-1, keepdims=True) / (xf.shape[-1] - 1))
    nx = (xf - mean) / (std + eps)
    cs = jnp.matmul(lang, wsc.T, precision="highest") + bsc
    cb = jnp.matmul(lang, wbi.T, precision="highest") + bbi
    return alpha * cs[:, None, :] * nx + beta + cb[:, None, :]


def _mha_ref(q, k, v, mask, wq, wk, wv, wo, num_heads):
    B, Sq, F = q.shape
    d_k = F // num_heads

    def proj(t, w):
        t = jnp.matmul(t, w.T, precision="highest")
        return t.reshape(B, -1, num_heads, d_k).transpose(0, 2, 1, 3)    # (B, h, S, d_k)

    qh, kh, vh = proj(q, wq), proj(k, wk), proj(v, wv)
    scores = jnp.einsum("bhqd,bhkd->bhqk", qh, kh, precision="highest") / math.sqrt(d_k)
    scores = jnp.where(mask == 0, -1e9, scores)
    p = jax.nn.softmax(scores, axis=-1)
    out = jnp.einsum("bhqk,bhkd->bhqd", p, vh, precision="highest")
    out = out.transpose(0, 2, 1, 3).reshape(B, Sq, F)
    return jnp.matmul(out, wo.T, precision="highest")


def _ffn_ref(x, w1, b1, w2, b2):
    h = jnp.maximum(jnp.matmul(x, w1.T, precision="highest") + b1, 0.0)
    return jnp.matmul(h, w2.T, precision="highest") + b2


def decoder_block_reference(x, enc, src_mask, tgt_mask, lang, params, *,
                            num_heads, eps=1e-6):
    def cond(i, xx):
        return _cond_ln_ref(xx, lang,
                            params[f"ln{i}_alpha"], params[f"ln{i}_beta"],
                            params[f"ln{i}_scale_w"], params[f"ln{i}_scale_b"],
                            params[f"ln{i}_bias_w"], params[f"ln{i}_bias_b"], eps)

    n0 = cond(0, x)
    x = x + _mha_ref(n0, n0, n0, tgt_mask,
                     params["self_wq"], params["self_wk"],
                     params["self_wv"], params["self_wo"], num_heads)
    n1 = cond(1, x)
    x = x + _mha_ref(n1, enc, enc, src_mask,
                     params["cross_wq"], params["cross_wk"],
                     params["cross_wv"], params["cross_wo"], num_heads)
    n2 = cond(2, x)
    x = x + _ffn_ref(n2, params["ffn_w1"], params["ffn_b1"],
                     params["ffn_w2"], params["ffn_b2"])
    return x


# ----------------------------------------------------------------------------
if __name__ == "__main__":
    B, S_TGT, S_SRC = 2, 16, 16
    D_MODEL, D_FF, N_HEADS, E = 128, 256, 4, 16      # d_model=128 -> lane-dense

    key = jax.random.PRNGKey(0)
    keys = iter(jax.random.split(key, 48))

    def rnd(shape, scale=1.0):
        return scale * jax.random.normal(next(keys), shape, jnp.float32)

    x = rnd((B, S_TGT, D_MODEL))
    enc = rnd((B, S_SRC, D_MODEL))
    lang_emb = rnd((B, E))
    tgt_mask = jnp.tril(jnp.ones((S_TGT, S_TGT), jnp.int32))   # causal
    src_mask = jnp.ones((S_TGT, S_SRC), jnp.int32)             # no source masking

    params = {}
    for i in range(3):
        params[f"ln{i}_alpha"] = jnp.ones((D_MODEL,), jnp.float32)
        params[f"ln{i}_beta"] = jnp.zeros((D_MODEL,), jnp.float32)
        params[f"ln{i}_scale_w"] = rnd((D_MODEL, E), 0.05)
        params[f"ln{i}_scale_b"] = 1.0 + rnd((D_MODEL,), 0.05)
        params[f"ln{i}_bias_w"] = rnd((D_MODEL, E), 0.05)
        params[f"ln{i}_bias_b"] = rnd((D_MODEL,), 0.05)
    for p in ("self", "cross"):
        for w in ("wq", "wk", "wv", "wo"):
            params[f"{p}_{w}"] = rnd((D_MODEL, D_MODEL), 0.08)
    params["ffn_w1"] = rnd((D_FF, D_MODEL), 0.08)
    params["ffn_b1"] = rnd((D_FF,), 0.05)
    params["ffn_w2"] = rnd((D_MODEL, D_FF), 0.08)
    params["ffn_b2"] = rnd((D_MODEL,), 0.05)

    prep = prepare_params(params)                              # one-time weight prep
    out = decoder_block_forward(x, enc, src_mask, tgt_mask, lang_emb, prep,
                                num_heads=N_HEADS)
    out = jax.block_until_ready(out)

    ref = decoder_block_reference(x, enc, src_mask, tgt_mask, lang_emb, params,
                                  num_heads=N_HEADS)
    assert out.shape == (B, S_TGT, D_MODEL) and out.dtype == x.dtype
    # Tolerance sized for the bf16-MXU + approx softmax-reciprocal fast path vs f32 ref.
    assert jnp.allclose(out, ref, atol=5e-2, rtol=5e-2), "mismatch vs reference"

    print("KERNEL_OK")
</pallas_src>

<mosaic_0001>
module attributes {stable_mosaic.version = 11 : i64} {
  func.func @_decoder_block_kernel(%arg0: i32, %arg1: memref<1x16x128xf32, #tpu.memory_space<vmem>>, %arg2: memref<1x16x128xf32, #tpu.memory_space<vmem>>, %arg3: memref<1x6x128xf32, #tpu.memory_space<vmem>>, %arg4: memref<16x16xf32, #tpu.memory_space<vmem>>, %arg5: memref<16x16xf32, #tpu.memory_space<vmem>>, %arg6: memref<128x384xbf16, #tpu.memory_space<vmem>>, %arg7: memref<128x128xbf16, #tpu.memory_space<vmem>>, %arg8: memref<128x128xbf16, #tpu.memory_space<vmem>>, %arg9: memref<128x256xbf16, #tpu.memory_space<vmem>>, %arg10: memref<128x128xbf16, #tpu.memory_space<vmem>>, %arg11: memref<128x256xbf16, #tpu.memory_space<vmem>>, %arg12: memref<1x256xf32, #tpu.memory_space<vmem>>, %arg13: memref<256x128xbf16, #tpu.memory_space<vmem>>, %arg14: memref<1x128xf32, #tpu.memory_space<vmem>>, %arg15: memref<1x16x128xf32, #tpu.memory_space<vmem>>) attributes {dimension_semantics = [#tpu.dimension_semantics<parallel>], iteration_bounds = array<i64: 2>, scalar_prefetch = 0 : i64, scratch_operands = 0 : i64, tpu.core_type = #tpu.core_type<tc>, window_params = [{transform_indices = @transform_0, window_bounds = array<i64: 1, 16, 128>}, {transform_indices = @transform_1, window_bounds = array<i64: 1, 16, 128>}, {transform_indices = @transform_2, window_bounds = array<i64: 1, 6, 128>}, {pipeline_mode = #tpu.pipeline_mode<synchronous>, transform_indices = @transform_3, window_bounds = array<i64: 16, 16>}, {pipeline_mode = #tpu.pipeline_mode<synchronous>, transform_indices = @transform_4, window_bounds = array<i64: 16, 16>}, {pipeline_mode = #tpu.pipeline_mode<synchronous>, transform_indices = @transform_5, window_bounds = array<i64: 128, 384>}, {pipeline_mode = #tpu.pipeline_mode<synchronous>, transform_indices = @transform_6, window_bounds = array<i64: 128, 128>}, {pipeline_mode = #tpu.pipeline_mode<synchronous>, transform_indices = @transform_7, window_bounds = array<i64: 128, 128>}, {pipeline_mode = #tpu.pipeline_mode<synchronous>, transform_indices = @transform_8, window_bounds = array<i64: 128, 256>}, {pipeline_mode = #tpu.pipeline_mode<synchronous>, transform_indices = @transform_9, window_bounds = array<i64: 128, 128>}, {pipeline_mode = #tpu.pipeline_mode<synchronous>, transform_indices = @transform_10, window_bounds = array<i64: 128, 256>}, {pipeline_mode = #tpu.pipeline_mode<synchronous>, transform_indices = @transform_11, window_bounds = array<i64: 1, 256>}, {pipeline_mode = #tpu.pipeline_mode<synchronous>, transform_indices = @transform_12, window_bounds = array<i64: 256, 128>}, {pipeline_mode = #tpu.pipeline_mode<synchronous>, transform_indices = @transform_13, window_bounds = array<i64: 1, 128>}, {transform_indices = @transform_14, window_bounds = array<i64: 1, 16, 128>}]} {
    %c0 = arith.constant 0 : index
    %c0_0 = arith.constant 0 : index
    %c0_1 = arith.constant 0 : index
    %0 = vector.load %arg1[%c0, %c0_0, %c0_1] : memref<1x16x128xf32, #tpu.memory_space<vmem>>, vector<1x16x128xf32>
    %1 = vector.shape_cast %0 : vector<1x16x128xf32> to vector<16x128xf32>
    %c0_2 = arith.constant 0 : index
    %c0_3 = arith.constant 0 : index
    %c0_4 = arith.constant 0 : index
    %2 = vector.load %arg3[%c0_2, %c0_3, %c0_4] : memref<1x6x128xf32, #tpu.memory_space<vmem>>, vector<1x6x128xf32>
    %3 = vector.shape_cast %2 : vector<1x6x128xf32> to vector<6x128xf32>
    %c0_5 = arith.constant 0 : index
    %c0_6 = arith.constant 0 : index
    %4 = vector.load %arg4[%c0_5, %c0_6] : memref<16x16xf32, #tpu.memory_space<vmem>>, vector<16x16xf32>
    %c0_7 = arith.constant 0 : index
    %c0_8 = arith.constant 0 : index
    %5 = vector.load %arg5[%c0_7, %c0_8] : memref<16x16xf32, #tpu.memory_space<vmem>>, vector<16x16xf32>
    %6 = vector.extract_strided_slice %3 {offsets = [0, 0], sizes = [1, 128], strides = [1, 1]} : vector<6x128xf32> to vector<1x128xf32>
    %7 = vector.extract_strided_slice %3 {offsets = [1, 0], sizes = [1, 128], strides = [1, 1]} : vector<6x128xf32> to vector<1x128xf32>
    %cst = arith.constant dense<0.000000e+00> : vector<16xf32>
    %8 = vector.multi_reduction <add>, %1, %cst [1] : vector<16x128xf32> to vector<16xf32>
    %9 = vector.shape_cast %8 : vector<16xf32> to vector<16x1xf32>
    %cst_9 = arith.constant 1.280000e+02 : f32
    %10 = vector.broadcast %cst_9 : f32 to vector<16x1xf32>
    %11 = arith.divf %9, %10 : vector<16x1xf32>
    %12 = vector.broadcast %11 : vector<16x1xf32> to vector<16x128xf32>
    %13 = arith.subf %1, %12 : vector<16x128xf32>
    %14 = arith.mulf %13, %13 : vector<16x128xf32>
    %cst_10 = arith.constant dense<0.000000e+00> : vector<16xf32>
    %15 = vector.multi_reduction <add>, %14, %cst_10 [1] : vector<16x128xf32> to vector<16xf32>
    %16 = vector.shape_cast %15 : vector<16xf32> to vector<16x1xf32>
    %cst_11 = arith.constant 0.00787401571 : f32
    %17 = vector.broadcast %cst_11 : f32 to vector<16x1xf32>
    %18 = arith.mulf %16, %17 : vector<16x1xf32>
    %19 = math.sqrt %18 : vector<16x1xf32>
    %cst_12 = arith.constant 9.99999997E-7 : f32
    %20 = vector.broadcast %cst_12 : f32 to vector<16x1xf32>
    %21 = arith.addf %19, %20 : vector<16x1xf32>
    %cst_13 = arith.constant 1.000000e+00 : f32
    %22 = vector.broadcast %cst_13 : f32 to vector<16x1xf32>
    %23 = arith.divf %22, %21 : vector<16x1xf32>
    %24 = vector.broadcast %11 : vector<16x1xf32> to vector<16x128xf32>
    %25 = arith.subf %1, %24 : vector<16x128xf32>
    %26 = vector.broadcast %23 : vector<16x1xf32> to vector<16x128xf32>
    %27 = arith.mulf %25, %26 : vector<16x128xf32>
    %28 = vector.broadcast %6 : vector<1x128xf32> to vector<16x128xf32>
    %29 = arith.mulf %28, %27 : vector<16x128xf32>
    %30 = vector.broadcast %7 : vector<1x128xf32> to vector<16x128xf32>
    %31 = arith.addf %29, %30 : vector<16x128xf32>
    %32 = arith.truncf %31 : vector<16x128xf32> to vector<16x128xbf16>
    %c0_14 = arith.constant 0 : index
    %c0_15 = arith.constant 0 : index
    %33 = vector.load %arg6[%c0_14, %c0_15] : memref<128x384xbf16, #tpu.memory_space<vmem>>, vector<128x384xbf16>
    %cst_16 = arith.constant dense<0.000000e+00> : vector<16x384xf32>
    %34 = tpu.matmul %32, %33, %cst_16 {dimension_numbers = #tpu.dot_dimension_numbers<[1], [0], [0], [1], [0, 0, 1, 1], [], []>} : vector<16x128xbf16>, vector<128x384xbf16>, vector<16x384xf32> -> vector<16x384xf32>
    %35 = vector.extract_strided_slice %34 {offsets = [0, 0], sizes = [16, 128], strides = [1, 1]} : vector<16x384xf32> to vector<16x128xf32>
    %36 = vector.extract_strided_slice %34 {offsets = [0, 128], sizes = [16, 128], strides = [1, 1]} : vector<16x384xf32> to vector<16x128xf32>
    %37 = vector.extract_strided_slice %34 {offsets = [0, 256], sizes = [16, 128], strides = [1, 1]} : vector<16x384xf32> to vector<16x128xf32>
    %38 = vector.extract_strided_slice %35 {offsets = [0, 0], sizes = [16, 32], strides = [1, 1]} : vector<16x128xf32> to vector<16x32xf32>
    %39 = vector.extract_strided_slice %36 {offsets = [0, 0], sizes = [16, 32], strides = [1, 1]} : vector<16x128xf32> to vector<16x32xf32>
    %40 = vector.extract_strided_slice %37 {offsets = [0, 0], sizes = [16, 32], strides = [1, 1]} : vector<16x128xf32> to vector<16x32xf32>
    %cst_17 = arith.constant dense<0.000000e+00> : vector<16x16xf32>
    %41 = tpu.matmul %38, %39, %cst_17 {dimension_numbers = #tpu.dot_dimension_numbers<[1], [1], [0], [0], [0, 0, 1, 0], [], []>} : vector<16x32xf32>, vector<16x32xf32>, vector<16x16xf32> -> vector<16x16xf32>
    %cst_18 = arith.constant 0.176776692 : f32
    %42 = vector.broadcast %cst_18 : f32 to vector<16x16xf32>
    %43 = arith.mulf %41, %42 : vector<16x16xf32>
    %44 = arith.minimumf %43, %4 : vector<16x16xf32>
    %cst_19 = arith.constant dense<0xFF800000> : vector<16xf32>
    %45 = vector.multi_reduction <maximumf>, %44, %cst_19 [1] : vector<16x16xf32> to vector<16xf32>
    %46 = vector.shape_cast %45 : vector<16xf32> to vector<16x1xf32>
    %47 = vector.broadcast %46 : vector<16x1xf32> to vector<16x16xf32>
    %48 = arith.subf %44, %47 : vector<16x16xf32>
    %49 = math.exp %48 : vector<16x16xf32>
    %cst_20 = arith.constant dense<0.000000e+00> : vector<16xf32>
    %50 = vector.multi_reduction <add>, %49, %cst_20 [1] : vector<16x16xf32> to vector<16xf32>
    %51 = vector.shape_cast %50 : vector<16xf32> to vector<16x1xf32>
    %52 = tpu.reciprocal %51 {approx = true} : vector<16x1xf32> -> vector<16x1xf32>
    %53 = vector.broadcast %52 : vector<16x1xf32> to vector<16x16xf32>
    %54 = arith.mulf %49, %53 : vector<16x16xf32>
    %55 = arith.truncf %54 : vector<16x16xf32> to vector<16x16xbf16>
    %56 = arith.truncf %40 : vector<16x32xf32> to vector<16x32xbf16>
    %cst_21 = arith.constant dense<0.000000e+00> : vector<16x32xf32>
    %57 = tpu.matmul %55, %56, %cst_21 {dimension_numbers = #tpu.dot_dimension_numbers<[1], [0], [0], [1], [0, 0, 1, 1], [], []>} : vector<16x16xbf16>, vector<16x32xbf16>, vector<16x32xf32> -> vector<16x32xf32>
    %c0_22 = arith.constant 0 : index
    %c0_23 = arith.constant 0 : index
    %58 = vector.load %arg7[%c0_22, %c0_23] : memref<128x128xbf16, #tpu.memory_space<vmem>>, vector<32x128xbf16>
    %59 = arith.truncf %57 : vector<16x32xf32> to vector<16x32xbf16>
    %cst_24 = arith.constant dense<0.000000e+00> : vector<16x128xf32>
    %60 = tpu.matmul %59, %58, %cst_24 {dimension_numbers = #tpu.dot_dimension_numbers<[1], [0], [0], [1], [0, 0, 1, 1], [], []>} : vector<16x32xbf16>, vector<32x128xbf16>, vector<16x128xf32> -> vector<16x128xf32>
    %61 = vector.extract_strided_slice %35 {offsets = [0, 32], sizes = [16, 32], strides = [1, 1]} : vector<16x128xf32> to vector<16x32xf32>
    %62 = vector.extract_strided_slice %36 {offsets = [0, 32], sizes = [16, 32], strides = [1, 1]} : vector<16x128xf32> to vector<16x32xf32>
    %63 = vector.extract_strided_slice %37 {offsets = [0, 32], sizes = [16, 32], strides = [1, 1]} : vector<16x128xf32> to vector<16x32xf32>
    %cst_25 = arith.constant dense<0.000000e+00> : vector<16x16xf32>
    %64 = tpu.matmul %61, %62, %cst_25 {dimension_numbers = #tpu.dot_dimension_numbers<[1], [1], [0], [0], [0, 0, 1, 0], [], []>} : vector<16x32xf32>, vector<16x32xf32>, vector<16x16xf32> -> vector<16x16xf32>
    %cst_26 = arith.constant 0.176776692 : f32
    %65 = vector.broadcast %cst_26 : f32 to vector<16x16xf32>
    %66 = arith.mulf %64, %65 : vector<16x16xf32>
    %67 = arith.minimumf %66, %4 : vector<16x16xf32>
    %cst_27 = arith.constant dense<0xFF800000> : vector<16xf32>
    %68 = vector.multi_reduction <maximumf>, %67, %cst_27 [1] : vector<16x16xf32> to vector<16xf32>
    %69 = vector.shape_cast %68 : vector<16xf32> to vector<16x1xf32>
    %70 = vector.broadcast %69 : vector<16x1xf32> to vector<16x16xf32>
    %71 = arith.subf %67, %70 : vector<16x16xf32>
    %72 = math.exp %71 : vector<16x16xf32>
    %cst_28 = arith.constant dense<0.000000e+00> : vector<16xf32>
    %73 = vector.multi_reduction <add>, %72, %cst_28 [1] : vector<16x16xf32> to vector<16xf32>
    %74 = vector.shape_cast %73 : vector<16xf32> to vector<16x1xf32>
    %75 = tpu.reciprocal %74 {approx = true} : vector<16x1xf32> -> vector<16x1xf32>
    %76 = vector.broadcast %75 : vector<16x1xf32> to vector<16x16xf32>
    %77 = arith.mulf %72, %76 : vector<16x16xf32>
    %78 = arith.truncf %77 : vector<16x16xf32> to vector<16x16xbf16>
    %79 = arith.truncf %63 : vector<16x32xf32> to vector<16x32xbf16>
    %cst_29 = arith.constant dense<0.000000e+00> : vector<16x32xf32>
    %80 = tpu.matmul %78, %79, %cst_29 {dimension_numbers = #tpu.dot_dimension_numbers<[1], [0], [0], [1], [0, 0, 1, 1], [], []>} : vector<16x16xbf16>, vector<16x32xbf16>, vector<16x32xf32> -> vector<16x32xf32>
    %c32 = arith.constant 32 : index
    %c0_30 = arith.constant 0 : index
    %81 = vector.load %arg7[%c32, %c0_30] : memref<128x128xbf16, #tpu.memory_space<vmem>>, vector<32x128xbf16>
    %82 = arith.truncf %80 : vector<16x32xf32> to vector<16x32xbf16>
    %cst_31 = arith.constant dense<0.000000e+00> : vector<16x128xf32>
    %83 = tpu.matmul %82, %81, %cst_31 {dimension_numbers = #tpu.dot_dimension_numbers<[1], [0], [0], [1], [0, 0, 1, 1], [], []>} : vector<16x32xbf16>, vector<32x128xbf16>, vector<16x128xf32> -> vector<16x128xf32>
    %84 = arith.addf %60, %83 : vector<16x128xf32>
    %85 = vector.extract_strided_slice %35 {offsets = [0, 64], sizes = [16, 32], strides = [1, 1]} : vector<16x128xf32> to vector<16x32xf32>
    %86 = vector.extract_strided_slice %36 {offsets = [0, 64], sizes = [16, 32], strides = [1, 1]} : vector<16x128xf32> to vector<16x32xf32>
    %87 = vector.extract_strided_slice %37 {offsets = [0, 64], sizes = [16, 32], strides = [1, 1]} : vector<16x128xf32> to vector<16x32xf32>
    %cst_32 = arith.constant dense<0.000000e+00> : vector<16x16xf32>
    %88 = tpu.matmul %85, %86, %cst_32 {dimension_numbers = #tpu.dot_dimension_numbers<[1], [1], [0], [0], [0, 0, 1, 0], [], []>} : vector<16x32xf32>, vector<16x32xf32>, vector<16x16xf32> -> vector<16x16xf32>
    %cst_33 = arith.constant 0.176776692 : f32
    %89 = vector.broadcast %cst_33 : f32 to vector<16x16xf32>
    %90 = arith.mulf %88, %89 : vector<16x16xf32>
    %91 = arith.minimumf %90, %4 : vector<16x16xf32>
    %cst_34 = arith.constant dense<0xFF800000> : vector<16xf32>
    %92 = vector.multi_reduction <maximumf>, %91, %cst_34 [1] : vector<16x16xf32> to vector<16xf32>
    %93 = vector.shape_cast %92 : vector<16xf32> to vector<16x1xf32>
    %94 = vector.broadcast %93 : vector<16x1xf32> to vector<16x16xf32>
    %95 = arith.subf %91, %94 : vector<16x16xf32>
    %96 = math.exp %95 : vector<16x16xf32>
    %cst_35 = arith.constant dense<0.000000e+00> : vector<16xf32>
    %97 = vector.multi_reduction <add>, %96, %cst_35 [1] : vector<16x16xf32> to vector<16xf32>
    %98 = vector.shape_cast %97 : vector<16xf32> to vector<16x1xf32>
    %99 = tpu.reciprocal %98 {approx = true} : vector<16x1xf32> -> vector<16x1xf32>
    %100 = vector.broadcast %99 : vector<16x1xf32> to vector<16x16xf32>
    %101 = arith.mulf %96, %100 : vector<16x16xf32>
    %102 = arith.truncf %101 : vector<16x16xf32> to vector<16x16xbf16>
    %103 = arith.truncf %87 : vector<16x32xf32> to vector<16x32xbf16>
    %cst_36 = arith.constant dense<0.000000e+00> : vector<16x32xf32>
    %104 = tpu.matmul %102, %103, %cst_36 {dimension_numbers = #tpu.dot_dimension_numbers<[1], [0], [0], [1], [0, 0, 1, 1], [], []>} : vector<16x16xbf16>, vector<16x32xbf16>, vector<16x32xf32> -> vector<16x32xf32>
    %c64 = arith.constant 64 : index
    %c0_37 = arith.constant 0 : index
    %105 = vector.load %arg7[%c64, %c0_37] : memref<128x128xbf16, #tpu.memory_space<vmem>>, vector<32x128xbf16>
    %106 = arith.truncf %104 : vector<16x32xf32> to vector<16x32xbf16>
    %cst_38 = arith.constant dense<0.000000e+00> : vector<16x128xf32>
    %107 = tpu.matmul %106, %105, %cst_38 {dimension_numbers = #tpu.dot_dimension_numbers<[1], [0], [0], [1], [0, 0, 1, 1], [], []>} : vector<16x32xbf16>, vector<32x128xbf16>, vector<16x128xf32> -> vector<16x128xf32>
    %108 = arith.addf %84, %107 : vector<16x128xf32>
    %109 = vector.extract_strided_slice %35 {offsets = [0, 96], sizes = [16, 32], strides = [1, 1]} : vector<16x128xf32> to vector<16x32xf32>
    %110 = vector.extract_strided_slice %36 {offsets = [0, 96], sizes = [16, 32], strides = [1, 1]} : vector<16x128xf32> to vector<16x32xf32>
    %111 = vector.extract_strided_slice %37 {offsets = [0, 96], sizes = [16, 32], strides = [1, 1]} : vector<16x128xf32> to vector<16x32xf32>
    %cst_39 = arith.constant dense<0.000000e+00> : vector<16x16xf32>
    %112 = tpu.matmul %109, %110, %cst_39 {dimension_numbers = #tpu.dot_dimension_numbers<[1], [1], [0], [0], [0, 0, 1, 0], [], []>} : vector<16x32xf32>, vector<16x32xf32>, vector<16x16xf32> -> vector<16x16xf32>
    %cst_40 = arith.constant 0.176776692 : f32
    %113 = vector.broadcast %cst_40 : f32 to vector<16x16xf32>
    %114 = arith.mulf %112, %113 : vector<16x16xf32>
    %115 = arith.minimumf %114, %4 : vector<16x16xf32>
    %cst_41 = arith.constant dense<0xFF800000> : vector<16xf32>
    %116 = vector.multi_reduction <maximumf>, %115, %cst_41 [1] : vector<16x16xf32> to vector<16xf32>
    %117 = vector.shape_cast %116 : vector<16xf32> to vector<16x1xf32>
    %118 = vector.broadcast %117 : vector<16x1xf32> to vector<16x16xf32>
    %119 = arith.subf %115, %118 : vector<16x16xf32>
    %120 = math.exp %119 : vector<16x16xf32>
    %cst_42 = arith.constant dense<0.000000e+00> : vector<16xf32>
    %121 = vector.multi_reduction <add>, %120, %cst_42 [1] : vector<16x16xf32> to vector<16xf32>
    %122 = vector.shape_cast %121 : vector<16xf32> to vector<16x1xf32>
    %123 = tpu.reciprocal %122 {approx = true} : vector<16x1xf32> -> vector<16x1xf32>
    %124 = vector.broadcast %123 : vector<16x1xf32> to vector<16x16xf32>
    %125 = arith.mulf %120, %124 : vector<16x16xf32>
    %126 = arith.truncf %125 : vector<16x16xf32> to vector<16x16xbf16>
    %127 = arith.truncf %111 : vector<16x32xf32> to vector<16x32xbf16>
    %cst_43 = arith.constant dense<0.000000e+00> : vector<16x32xf32>
    %128 = tpu.matmul %126, %127, %cst_43 {dimension_numbers = #tpu.dot_dimension_numbers<[1], [0], [0], [1], [0, 0, 1, 1], [], []>} : vector<16x16xbf16>, vector<16x32xbf16>, vector<16x32xf32> -> vector<16x32xf32>
    %c96 = arith.constant 96 : index
    %c0_44 = arith.constant 0 : index
    %129 = vector.load %arg7[%c96, %c0_44] : memref<128x128xbf16, #tpu.memory_space<vmem>>, vector<32x128xbf16>
    %130 = arith.truncf %128 : vector<16x32xf32> to vector<16x32xbf16>
    %cst_45 = arith.constant dense<0.000000e+00> : vector<16x128xf32>
    %131 = tpu.matmul %130, %129, %cst_45 {dimension_numbers = #tpu.dot_dimension_numbers<[1], [0], [0], [1], [0, 0, 1, 1], [], []>} : vector<16x32xbf16>, vector<32x128xbf16>, vector<16x128xf32> -> vector<16x128xf32>
    %132 = arith.addf %108, %131 : vector<16x128xf32>
    %133 = arith.addf %1, %132 : vector<16x128xf32>
    %134 = vector.extract_strided_slice %3 {offsets = [2, 0], sizes = [1, 128], strides = [1, 1]} : vector<6x128xf32> to vector<1x128xf32>
    %135 = vector.extract_strided_slice %3 {offsets = [3, 0], sizes = [1, 128], strides = [1, 1]} : vector<6x128xf32> to vector<1x128xf32>
    %cst_46 = arith.constant dense<0.000000e+00> : vector<16xf32>
    %136 = vector.multi_reduction <add>, %133, %cst_46 [1] : vector<16x128xf32> to vector<16xf32>
    %137 = vector.shape_cast %136 : vector<16xf32> to vector<16x1xf32>
    %cst_47 = arith.constant 1.280000e+02 : f32
    %138 = vector.broadcast %cst_47 : f32 to vector<16x1xf32>
    %139 = arith.divf %137, %138 : vector<16x1xf32>
    %140 = vector.broadcast %139 : vector<16x1xf32> to vector<16x128xf32>
    %141 = arith.subf %133, %140 : vector<16x128xf32>
    %142 = arith.mulf %141, %141 : vector<16x128xf32>
    %cst_48 = arith.constant dense<0.000000e+00> : vector<16xf32>
    %143 = vector.multi_reduction <add>, %142, %cst_48 [1] : vector<16x128xf32> to vector<16xf32>
    %144 = vector.shape_cast %143 : vector<16xf32> to vector<16x1xf32>
    %cst_49 = arith.constant 0.00787401571 : f32
    %145 = vector.broadcast %cst_49 : f32 to vector<16x1xf32>
    %146 = arith.mulf %144, %145 : vector<16x1xf32>
    %147 = math.sqrt %146 : vector<16x1xf32>
    %cst_50 = arith.constant 9.99999997E-7 : f32
    %148 = vector.broadcast %cst_50 : f32 to vector<16x1xf32>
    %149 = arith.addf %147, %148 : vector<16x1xf32>
    %cst_51 = arith.constant 1.000000e+00 : f32
    %150 = vector.broadcast %cst_51 : f32 to vector<16x1xf32>
    %151 = arith.divf %150, %149 : vector<16x1xf32>
    %152 = vector.broadcast %139 : vector<16x1xf32> to vector<16x128xf32>
    %153 = arith.subf %133, %152 : vector<16x128xf32>
    %154 = vector.broadcast %151 : vector<16x1xf32> to vector<16x128xf32>
    %155 = arith.mulf %153, %154 : vector<16x128xf32>
    %156 = vector.broadcast %134 : vector<1x128xf32> to vector<16x128xf32>
    %157 = arith.mulf %156, %155 : vector<16x128xf32>
    %158 = vector.broadcast %135 : vector<1x128xf32> to vector<16x128xf32>
    %159 = arith.addf %157, %158 : vector<16x128xf32>
    %160 = arith.truncf %159 : vector<16x128xf32> to vector<16x128xbf16>
    %c0_52 = arith.constant 0 : index
    %c0_53 = arith.constant 0 : index
    %161 = vector.load %arg8[%c0_52, %c0_53] : memref<128x128xbf16, #tpu.memory_space<vmem>>, vector<128x128xbf16>
    %cst_54 = arith.constant dense<0.000000e+00> : vector<16x128xf32>
    %162 = tpu.matmul %160, %161, %cst_54 {dimension_numbers = #tpu.dot_dimension_numbers<[1], [0], [0], [1], [0, 0, 1, 1], [], []>} : vector<16x128xbf16>, vector<128x128xbf16>, vector<16x128xf32> -> vector<16x128xf32>
    %c0_55 = arith.constant 0 : index
    %c0_56 = arith.constant 0 : index
    %c0_57 = arith.constant 0 : index
    %163 = vector.load %arg2[%c0_55, %c0_56, %c0_57] : memref<1x16x128xf32, #tpu.memory_space<vmem>>, vector<1x16x128xf32>
    %164 = vector.shape_cast %163 : vector<1x16x128xf32> to vector<16x128xf32>
    %165 = arith.truncf %164 : vector<16x128xf32> to vector<16x128xbf16>
    %c0_58 = arith.constant 0 : index
    %c0_59 = arith.constant 0 : index
    %166 = vector.load %arg9[%c0_58, %c0_59] : memref<128x256xbf16, #tpu.memory_space<vmem>>, vector<128x256xbf16>
    %cst_60 = arith.constant dense<0.000000e+00> : vector<16x256xf32>
    %167 = tpu.matmul %165, %166, %cst_60 {dimension_numbers = #tpu.dot_dimension_numbers<[1], [0], [0], [1], [0, 0, 1, 1], [], []>} : vector<16x128xbf16>, vector<128x256xbf16>, vector<16x256xf32> -> vector<16x256xf32>
    %168 = vector.extract_strided_slice %167 {offsets = [0, 0], sizes = [16, 128], strides = [1, 1]} : vector<16x256xf32> to vector<16x128xf32>
    %169 = vector.extract_strided_slice %167 {offsets = [0, 128], sizes = [16, 128], strides = [1, 1]} : vector<16x256xf32> to vector<16x128xf32>
    %170 = vector.extract_strided_slice %162 {offsets = [0, 0], sizes = [16, 32], strides = [1, 1]} : vector<16x128xf32> to vector<16x32xf32>
    %171 = vector.extract_strided_slice %168 {offsets = [0, 0], sizes = [16, 32], strides = [1, 1]} : vector<16x128xf32> to vector<16x32xf32>
    %172 = vector.extract_strided_slice %169 {offsets = [0, 0], sizes = [16, 32], strides = [1, 1]} : vector<16x128xf32> to vector<16x32xf32>
    %cst_61 = arith.constant dense<0.000000e+00> : vector<16x16xf32>
    %173 = tpu.matmul %170, %171, %cst_61 {dimension_numbers = #tpu.dot_dimension_numbers<[1], [1], [0], [0], [0, 0, 1, 0], [], []>} : vector<16x32xf32>, vector<16x32xf32>, vector<16x16xf32> -> vector<16x16xf32>
    %cst_62 = arith.constant 0.176776692 : f32
    %174 = vector.broadcast %cst_62 : f32 to vector<16x16xf32>
    %175 = arith.mulf %173, %174 : vector<16x16xf32>
    %176 = arith.minimumf %175, %5 : vector<16x16xf32>
    %cst_63 = arith.constant dense<0xFF800000> : vector<16xf32>
    %177 = vector.multi_reduction <maximumf>, %176, %cst_63 [1] : vector<16x16xf32> to vector<16xf32>
    %178 = vector.shape_cast %177 : vector<16xf32> to vector<16x1xf32>
    %179 = vector.broadcast %178 : vector<16x1xf32> to vector<16x16xf32>
    %180 = arith.subf %176, %179 : vector<16x16xf32>
    %181 = math.exp %180 : vector<16x16xf32>
    %cst_64 = arith.constant dense<0.000000e+00> : vector<16xf32>
    %182 = vector.multi_reduction <add>, %181, %cst_64 [1] : vector<16x16xf32> to vector<16xf32>
    %183 = vector.shape_cast %182 : vector<16xf32> to vector<16x1xf32>
    %184 = tpu.reciprocal %183 {approx = true} : vector<16x1xf32> -> vector<16x1xf32>
    %185 = vector.broadcast %184 : vector<16x1xf32> to vector<16x16xf32>
    %186 = arith.mulf %181, %185 : vector<16x16xf32>
    %187 = arith.truncf %186 : vector<16x16xf32> to vector<16x16xbf16>
    %188 = arith.truncf %172 : vector<16x32xf32> to vector<16x32xbf16>
    %cst_65 = arith.constant dense<0.000000e+00> : vector<16x32xf32>
    %189 = tpu.matmul %187, %188, %cst_65 {dimension_numbers = #tpu.dot_dimension_numbers<[1], [0], [0], [1], [0, 0, 1, 1], [], []>} : vector<16x16xbf16>, vector<16x32xbf16>, vector<16x32xf32> -> vector<16x32xf32>
    %c0_66 = arith.constant 0 : index
    %c0_67 = arith.constant 0 : index
    %190 = vector.load %arg10[%c0_66, %c0_67] : memref<128x128xbf16, #tpu.memory_space<vmem>>, vector<32x128xbf16>
    %191 = arith.truncf %189 : vector<16x32xf32> to vector<16x32xbf16>
    %cst_68 = arith.constant dense<0.000000e+00> : vector<16x128xf32>
    %192 = tpu.matmul %191, %190, %cst_68 {dimension_numbers = #tpu.dot_dimension_numbers<[1], [0], [0], [1], [0, 0, 1, 1], [], []>} : vector<16x32xbf16>, vector<32x128xbf16>, vector<16x128xf32> -> vector<16x128xf32>
    %193 = vector.extract_strided_slice %162 {offsets = [0, 32], sizes = [16, 32], strides = [1, 1]} : vector<16x128xf32> to vector<16x32xf32>
    %194 = vector.extract_strided_slice %168 {offsets = [0, 32], sizes = [16, 32], strides = [1, 1]} : vector<16x128xf32> to vector<16x32xf32>
    %195 = vector.extract_strided_slice %169 {offsets = [0, 32], sizes = [16, 32], strides = [1, 1]} : vector<16x128xf32> to vector<16x32xf32>
    %cst_69 = arith.constant dense<0.000000e+00> : vector<16x16xf32>
    %196 = tpu.matmul %193, %194, %cst_69 {dimension_numbers = #tpu.dot_dimension_numbers<[1], [1], [0], [0], [0, 0, 1, 0], [], []>} : vector<16x32xf32>, vector<16x32xf32>, vector<16x16xf32> -> vector<16x16xf32>
    %cst_70 = arith.constant 0.176776692 : f32
    %197 = vector.broadcast %cst_70 : f32 to vector<16x16xf32>
    %198 = arith.mulf %196, %197 : vector<16x16xf32>
    %199 = arith.minimumf %198, %5 : vector<16x16xf32>
    %cst_71 = arith.constant dense<0xFF800000> : vector<16xf32>
    %200 = vector.multi_reduction <maximumf>, %199, %cst_71 [1] : vector<16x16xf32> to vector<16xf32>
    %201 = vector.shape_cast %200 : vector<16xf32> to vector<16x1xf32>
    %202 = vector.broadcast %201 : vector<16x1xf32> to vector<16x16xf32>
    %203 = arith.subf %199, %202 : vector<16x16xf32>
    %204 = math.exp %203 : vector<16x16xf32>
    %cst_72 = arith.constant dense<0.000000e+00> : vector<16xf32>
    %205 = vector.multi_reduction <add>, %204, %cst_72 [1] : vector<16x16xf32> to vector<16xf32>
    %206 = vector.shape_cast %205 : vector<16xf32> to vector<16x1xf32>
    %207 = tpu.reciprocal %206 {approx = true} : vector<16x1xf32> -> vector<16x1xf32>
    %208 = vector.broadcast %207 : vector<16x1xf32> to vector<16x16xf32>
    %209 = arith.mulf %204, %208 : vector<16x16xf32>
    %210 = arith.truncf %209 : vector<16x16xf32> to vector<16x16xbf16>
    %211 = arith.truncf %195 : vector<16x32xf32> to vector<16x32xbf16>
    %cst_73 = arith.constant dense<0.000000e+00> : vector<16x32xf32>
    %212 = tpu.matmul %210, %211, %cst_73 {dimension_numbers = #tpu.dot_dimension_numbers<[1], [0], [0], [1], [0, 0, 1, 1], [], []>} : vector<16x16xbf16>, vector<16x32xbf16>, vector<16x32xf32> -> vector<16x32xf32>
    %c32_74 = arith.constant 32 : index
    %c0_75 = arith.constant 0 : index
    %213 = vector.load %arg10[%c32_74, %c0_75] : memref<128x128xbf16, #tpu.memory_space<vmem>>, vector<32x128xbf16>
    %214 = arith.truncf %212 : vector<16x32xf32> to vector<16x32xbf16>
    %cst_76 = arith.constant dense<0.000000e+00> : vector<16x128xf32>
    %215 = tpu.matmul %214, %213, %cst_76 {dimension_numbers = #tpu.dot_dimension_numbers<[1], [0], [0], [1], [0, 0, 1, 1], [], []>} : vector<16x32xbf16>, vector<32x128xbf16>, vector<16x128xf32> -> vector<16x128xf32>
    %216 = arith.addf %192, %215 : vector<16x128xf32>
    %217 = vector.extract_strided_slice %162 {offsets = [0, 64], sizes = [16, 32], strides = [1, 1]} : vector<16x128xf32> to vector<16x32xf32>
    %218 = vector.extract_strided_slice %168 {offsets = [0, 64], sizes = [16, 32], strides = [1, 1]} : vector<16x128xf32> to vector<16x32xf32>
    %219 = vector.extract_strided_slice %169 {offsets = [0, 64], sizes = [16, 32], strides = [1, 1]} : vector<16x128xf32> to vector<16x32xf32>
    %cst_77 = arith.constant dense<0.000000e+00> : vector<16x16xf32>
    %220 = tpu.matmul %217, %218, %cst_77 {dimension_numbers = #tpu.dot_dimension_numbers<[1], [1], [0], [0], [0, 0, 1, 0], [], []>} : vector<16x32xf32>, vector<16x32xf32>, vector<16x16xf32> -> vector<16x16xf32>
    %cst_78 = arith.constant 0.176776692 : f32
    %221 = vector.broadcast %cst_78 : f32 to vector<16x16xf32>
    %222 = arith.mulf %220, %221 : vector<16x16xf32>
    %223 = arith.minimumf %222, %5 : vector<16x16xf32>
    %cst_79 = arith.constant dense<0xFF800000> : vector<16xf32>
    %224 = vector.multi_reduction <maximumf>, %223, %cst_79 [1] : vector<16x16xf32> to vector<16xf32>
    %225 = vector.shape_cast %224 : vector<16xf32> to vector<16x1xf32>
    %226 = vector.broadcast %225 : vector<16x1xf32> to vector<16x16xf32>
    %227 = arith.subf %223, %226 : vector<16x16xf32>
    %228 = math.exp %227 : vector<16x16xf32>
    %cst_80 = arith.constant dense<0.000000e+00> : vector<16xf32>
    %229 = vector.multi_reduction <add>, %228, %cst_80 [1] : vector<16x16xf32> to vector<16xf32>
    %230 = vector.shape_cast %229 : vector<16xf32> to vector<16x1xf32>
    %231 = tpu.reciprocal %230 {approx = true} : vector<16x1xf32> -> vector<16x1xf32>
    %232 = vector.broadcast %231 : vector<16x1xf32> to vector<16x16xf32>
    %233 = arith.mulf %228, %232 : vector<16x16xf32>
    %234 = arith.truncf %233 : vector<16x16xf32> to vector<16x16xbf16>
    %235 = arith.truncf %219 : vector<16x32xf32> to vector<16x32xbf16>
    %cst_81 = arith.constant dense<0.000000e+00> : vector<16x32xf32>
    %236 = tpu.matmul %234, %235, %cst_81 {dimension_numbers = #tpu.dot_dimension_numbers<[1], [0], [0], [1], [0, 0, 1, 1], [], []>} : vector<16x16xbf16>, vector<16x32xbf16>, vector<16x32xf32> -> vector<16x32xf32>
    %c64_82 = arith.constant 64 : index
    %c0_83 = arith.constant 0 : index
    %237 = vector.load %arg10[%c64_82, %c0_83] : memref<128x128xbf16, #tpu.memory_space<vmem>>, vector<32x128xbf16>
    %238 = arith.truncf %236 : vector<16x32xf32> to vector<16x32xbf16>
    %cst_84 = arith.constant dense<0.000000e+00> : vector<16x128xf32>
    %239 = tpu.matmul %238, %237, %cst_84 {dimension_numbers = #tpu.dot_dimension_numbers<[1], [0], [0], [1], [0, 0, 1, 1], [], []>} : vector<16x32xbf16>, vector<32x128xbf16>, vector<16x128xf32> -> vector<16x128xf32>
    %240 = arith.addf %216, %239 : vector<16x128xf32>
    %241 = vector.extract_strided_slice %162 {offsets = [0, 96], sizes = [16, 32], strides = [1, 1]} : vector<16x128xf32> to vector<16x32xf32>
    %242 = vector.extract_strided_slice %168 {offsets = [0, 96], sizes = [16, 32], strides = [1, 1]} : vector<16x128xf32> to vector<16x32xf32>
    %243 = vector.extract_strided_slice %169 {offsets = [0, 96], sizes = [16, 32], strides = [1, 1]} : vector<16x128xf32> to vector<16x32xf32>
    %cst_85 = arith.constant dense<0.000000e+00> : vector<16x16xf32>
    %244 = tpu.matmul %241, %242, %cst_85 {dimension_numbers = #tpu.dot_dimension_numbers<[1], [1], [0], [0], [0, 0, 1, 0], [], []>} : vector<16x32xf32>, vector<16x32xf32>, vector<16x16xf32> -> vector<16x16xf32>
    %cst_86 = arith.constant 0.176776692 : f32
    %245 = vector.broadcast %cst_86 : f32 to vector<16x16xf32>
    %246 = arith.mulf %244, %245 : vector<16x16xf32>
    %247 = arith.minimumf %246, %5 : vector<16x16xf32>
    %cst_87 = arith.constant dense<0xFF800000> : vector<16xf32>
    %248 = vector.multi_reduction <maximumf>, %247, %cst_87 [1] : vector<16x16xf32> to vector<16xf32>
    %249 = vector.shape_cast %248 : vector<16xf32> to vector<16x1xf32>
    %250 = vector.broadcast %249 : vector<16x1xf32> to vector<16x16xf32>
    %251 = arith.subf %247, %250 : vector<16x16xf32>
    %252 = math.exp %251 : vector<16x16xf32>
    %cst_88 = arith.constant dense<0.000000e+00> : vector<16xf32>
    %253 = vector.multi_reduction <add>, %252, %cst_88 [1] : vector<16x16xf32> to vector<16xf32>
    %254 = vector.shape_cast %253 : vector<16xf32> to vector<16x1xf32>
    %255 = tpu.reciprocal %254 {approx = true} : vector<16x1xf32> -> vector<16x1xf32>
    %256 = vector.broadcast %255 : vector<16x1xf32> to vector<16x16xf32>
    %257 = arith.mulf %252, %256 : vector<16x16xf32>
    %258 = arith.truncf %257 : vector<16x16xf32> to vector<16x16xbf16>
    %259 = arith.truncf %243 : vector<16x32xf32> to vector<16x32xbf16>
    %cst_89 = arith.constant dense<0.000000e+00> : vector<16x32xf32>
    %260 = tpu.matmul %258, %259, %cst_89 {dimension_numbers = #tpu.dot_dimension_numbers<[1], [0], [0], [1], [0, 0, 1, 1], [], []>} : vector<16x16xbf16>, vector<16x32xbf16>, vector<16x32xf32> -> vector<16x32xf32>
    %c96_90 = arith.constant 96 : index
    %c0_91 = arith.constant 0 : index
    %261 = vector.load %arg10[%c96_90, %c0_91] : memref<128x128xbf16, #tpu.memory_space<vmem>>, vector<32x128xbf16>
    %262 = arith.truncf %260 : vector<16x32xf32> to vector<16x32xbf16>
    %cst_92 = arith.constant dense<0.000000e+00> : vector<16x128xf32>
    %263 = tpu.matmul %262, %261, %cst_92 {dimension_numbers = #tpu.dot_dimension_numbers<[1], [0], [0], [1], [0, 0, 1, 1], [], []>} : vector<16x32xbf16>, vector<32x128xbf16>, vector<16x128xf32> -> vector<16x128xf32>
    %264 = arith.addf %240, %263 : vector<16x128xf32>
    %265 = arith.addf %133, %264 : vector<16x128xf32>
    %266 = vector.extract_strided_slice %3 {offsets = [4, 0], sizes = [1, 128], strides = [1, 1]} : vector<6x128xf32> to vector<1x128xf32>
    %267 = vector.extract_strided_slice %3 {offsets = [5, 0], sizes = [1, 128], strides = [1, 1]} : vector<6x128xf32> to vector<1x128xf32>
    %cst_93 = arith.constant dense<0.000000e+00> : vector<16xf32>
    %268 = vector.multi_reduction <add>, %265, %cst_93 [1] : vector<16x128xf32> to vector<16xf32>
    %269 = vector.shape_cast %268 : vector<16xf32> to vector<16x1xf32>
    %cst_94 = arith.constant 1.280000e+02 : f32
    %270 = vector.broadcast %cst_94 : f32 to vector<16x1xf32>
    %271 = arith.divf %269, %270 : vector<16x1xf32>
    %272 = vector.broadcast %271 : vector<16x1xf32> to vector<16x128xf32>
    %273 = arith.subf %265, %272 : vector<16x128xf32>
    %274 = arith.mulf %273, %273 : vector<16x128xf32>
    %cst_95 = arith.constant dense<0.000000e+00> : vector<16xf32>
    %275 = vector.multi_reduction <add>, %274, %cst_95 [1] : vector<16x128xf32> to vector<16xf32>
    %276 = vector.shape_cast %275 : vector<16xf32> to vector<16x1xf32>
    %cst_96 = arith.constant 0.00787401571 : f32
    %277 = vector.broadcast %cst_96 : f32 to vector<16x1xf32>
    %278 = arith.mulf %276, %277 : vector<16x1xf32>
    %279 = math.sqrt %278 : vector<16x1xf32>
    %cst_97 = arith.constant 9.99999997E-7 : f32
    %280 = vector.broadcast %cst_97 : f32 to vector<16x1xf32>
    %281 = arith.addf %279, %280 : vector<16x1xf32>
    %cst_98 = arith.constant 1.000000e+00 : f32
    %282 = vector.broadcast %cst_98 : f32 to vector<16x1xf32>
    %283 = arith.divf %282, %281 : vector<16x1xf32>
    %284 = vector.broadcast %271 : vector<16x1xf32> to vector<16x128xf32>
    %285 = arith.subf %265, %284 : vector<16x128xf32>
    %286 = vector.broadcast %283 : vector<16x1xf32> to vector<16x128xf32>
    %287 = arith.mulf %285, %286 : vector<16x128xf32>
    %288 = vector.broadcast %266 : vector<1x128xf32> to vector<16x128xf32>
    %289 = arith.mulf %288, %287 : vector<16x128xf32>
    %290 = vector.broadcast %267 : vector<1x128xf32> to vector<16x128xf32>
    %291 = arith.addf %289, %290 : vector<16x128xf32>
    %292 = arith.truncf %291 : vector<16x128xf32> to vector<16x128xbf16>
    %c0_99 = arith.constant 0 : index
    %c0_100 = arith.constant 0 : index
    %293 = vector.load %arg11[%c0_99, %c0_100] : memref<128x256xbf16, #tpu.memory_space<vmem>>, vector<128x256xbf16>
    %cst_101 = arith.constant dense<0.000000e+00> : vector<16x256xf32>
    %294 = tpu.matmul %292, %293, %cst_101 {dimension_numbers = #tpu.dot_dimension_numbers<[1], [0], [0], [1], [0, 0, 1, 1], [], []>} : vector<16x128xbf16>, vector<128x256xbf16>, vector<16x256xf32> -> vector<16x256xf32>
    %c0_102 = arith.constant 0 : index
    %c0_103 = arith.constant 0 : index
    %295 = vector.load %arg12[%c0_102, %c0_103] : memref<1x256xf32, #tpu.memory_space<vmem>>, vector<1x256xf32>
    %296 = vector.broadcast %295 : vector<1x256xf32> to vector<16x256xf32>
    %297 = arith.addf %294, %296 : vector<16x256xf32>
    %cst_104 = arith.constant 0.000000e+00 : f32
    %298 = vector.broadcast %cst_104 : f32 to vector<16x256xf32>
    %299 = arith.maximumf %297, %298 : vector<16x256xf32>
    %300 = arith.truncf %299 : vector<16x256xf32> to vector<16x256xbf16>
    %c0_105 = arith.constant 0 : index
    %c0_106 = arith.constant 0 : index
    %301 = vector.load %arg13[%c0_105, %c0_106] : memref<256x128xbf16, #tpu.memory_space<vmem>>, vector<256x128xbf16>
    %cst_107 = arith.constant dense<0.000000e+00> : vector<16x128xf32>
    %302 = tpu.matmul %300, %301, %cst_107 {dimension_numbers = #tpu.dot_dimension_numbers<[1], [0], [0], [1], [0, 0, 1, 1], [], []>} : vector<16x256xbf16>, vector<256x128xbf16>, vector<16x128xf32> -> vector<16x128xf32>
    %c0_108 = arith.constant 0 : index
    %c0_109 = arith.constant 0 : index
    %303 = vector.load %arg14[%c0_108, %c0_109] : memref<1x128xf32, #tpu.memory_space<vmem>>, vector<1x128xf32>
    %304 = vector.broadcast %303 : vector<1x128xf32> to vector<16x128xf32>
    %305 = arith.addf %302, %304 : vector<16x128xf32>
    %306 = arith.addf %265, %305 : vector<16x128xf32>
    %c0_110 = arith.constant 0 : index
    %c0_111 = arith.constant 0 : index
    %c0_112 = arith.constant 0 : index
    %307 = vector.load %arg15[%c0_110, %c0_111, %c0_112] : memref<1x16x128xf32, #tpu.memory_space<vmem>>, vector<1x16x128xf32>
    %308 = vector.shape_cast %307 : vector<1x16x128xf32> to vector<16x128xf32>
    %309 = vector.shape_cast %306 : vector<16x128xf32> to vector<1x16x128xf32>
    tpu.vector_store %arg15[%c0_110, %c0_111, %c0_112], %309 {strides = array<i32>} : memref<1x16x128xf32, #tpu.memory_space<vmem>>, vector<1x16x128xf32>,
    return
  }
  func.func @transform_0(%arg0: i32) -> (i32, i32, i32) {
    %c0_i32 = arith.constant 0 : i32
    %c0_i32_0 = arith.constant 0 : i32
    %c0_i32_1 = arith.constant 0 : i32
    return %arg0, %c0_i32, %c0_i32_0 : i32, i32, i32
  }
  func.func @transform_1(%arg0: i32) -> (i32, i32, i32) {
    %c0_i32 = arith.constant 0 : i32
    %c0_i32_0 = arith.constant 0 : i32
    %c0_i32_1 = arith.constant 0 : i32
    return %arg0, %c0_i32, %c0_i32_0 : i32, i32, i32
  }
  func.func @transform_2(%arg0: i32) -> (i32, i32, i32) {
    %c0_i32 = arith.constant 0 : i32
    %c0_i32_0 = arith.constant 0 : i32
    %c0_i32_1 = arith.constant 0 : i32
    return %arg0, %c0_i32, %c0_i32_0 : i32, i32, i32
  }
  func.func @transform_3(%arg0: i32) -> (i32, i32) {
    %c0_i32 = arith.constant 0 : i32
    %c0_i32_0 = arith.constant 0 : i32
    %c0_i32_1 = arith.constant 0 : i32
    return %c0_i32, %c0_i32_0 : i32, i32
  }
  func.func @transform_4(%arg0: i32) -> (i32, i32) {
    %c0_i32 = arith.constant 0 : i32
    %c0_i32_0 = arith.constant 0 : i32
    %c0_i32_1 = arith.constant 0 : i32
    return %c0_i32, %c0_i32_0 : i32, i32
  }
  func.func @transform_5(%arg0: i32) -> (i32, i32) {
    %c0_i32 = arith.constant 0 : i32
    %c0_i32_0 = arith.constant 0 : i32
    %c0_i32_1 = arith.constant 0 : i32
    return %c0_i32, %c0_i32_0 : i32, i32
  }
  func.func @transform_6(%arg0: i32) -> (i32, i32) {
    %c0_i32 = arith.constant 0 : i32
    %c0_i32_0 = arith.constant 0 : i32
    %c0_i32_1 = arith.constant 0 : i32
    return %c0_i32, %c0_i32_0 : i32, i32
  }
  func.func @transform_7(%arg0: i32) -> (i32, i32) {
    %c0_i32 = arith.constant 0 : i32
    %c0_i32_0 = arith.constant 0 : i32
    %c0_i32_1 = arith.constant 0 : i32
    return %c0_i32, %c0_i32_0 : i32, i32
  }
  func.func @transform_8(%arg0: i32) -> (i32, i32) {
    %c0_i32 = arith.constant 0 : i32
    %c0_i32_0 = arith.constant 0 : i32
    %c0_i32_1 = arith.constant 0 : i32
    return %c0_i32, %c0_i32_0 : i32, i32
  }
  func.func @transform_9(%arg0: i32) -> (i32, i32) {
    %c0_i32 = arith.constant 0 : i32
    %c0_i32_0 = arith.constant 0 : i32
    %c0_i32_1 = arith.constant 0 : i32
    return %c0_i32, %c0_i32_0 : i32, i32
  }
  func.func @transform_10(%arg0: i32) -> (i32, i32) {
    %c0_i32 = arith.constant 0 : i32
    %c0_i32_0 = arith.constant 0 : i32
    %c0_i32_1 = arith.constant 0 : i32
    return %c0_i32, %c0_i32_0 : i32, i32
  }
  func.func @transform_11(%arg0: i32) -> (i32, i32) {
    %c0_i32 = arith.constant 0 : i32
    %c0_i32_0 = arith.constant 0 : i32
    %c0_i32_1 = arith.constant 0 : i32
    return %c0_i32, %c0_i32_0 : i32, i32
  }
  func.func @transform_12(%arg0: i32) -> (i32, i32) {
    %c0_i32 = arith.constant 0 : i32
    %c0_i32_0 = arith.constant 0 : i32
    %c0_i32_1 = arith.constant 0 : i32
    return %c0_i32, %c0_i32_0 : i32, i32
  }
  func.func @transform_13(%arg0: i32) -> (i32, i32) {
    %c0_i32 = arith.constant 0 : i32
    %c0_i32_0 = arith.constant 0 : i32
    %c0_i32_1 = arith.constant 0 : i32
    return %c0_i32, %c0_i32_0 : i32, i32
  }
  func.func @transform_14(%arg0: i32) -> (i32, i32, i32) {
    %c0_i32 = arith.constant 0 : i32
    %c0_i32_0 = arith.constant 0 : i32
    %c0_i32_1 = arith.constant 0 : i32
    return %arg0, %c0_i32, %c0_i32_0 : i32, i32, i32
  }
}

</mosaic_0001>

<llo_original>
// kernel: decoder_block_forward.1
$region0: #{decoder_block_forward.1}
  #allocation0 [shape = 'u32[]', space=smem, size = 0x4, offset = 0x4, fixed_abs, tag = 'smem constant byte address 0x4 - core index']
  #allocation1 [shape = 'u32[72,128]{1,0:T(1,128)}', space=vmem, size = 0x9000, scoped, tag = 'internal scratch']
  %s0 = inlined_call_operand.vmem [shape: f32[2,16,128], index: 0, kind: input, shape index: {}]
  %s1 = inlined_call_operand.vmem [shape: f32[2,16,128], index: 1, kind: input, shape index: {}]
  %s2 = inlined_call_operand.vmem [shape: f32[2,6,128], index: 2, kind: input, shape index: {}]
  %s3 = inlined_call_operand.vmem [shape: f32[16,16], index: 3, kind: input, shape index: {}]
  %s4 = inlined_call_operand.vmem [shape: f32[16,16], index: 4, kind: input, shape index: {}]
  %s5 = inlined_call_operand.hbm [shape: bf16[128,384], index: 5, kind: input, shape index: {}]
  %s6 = inlined_call_operand.hbm [shape: bf16[128,128], index: 6, kind: input, shape index: {}]
  %s7 = inlined_call_operand.hbm [shape: bf16[128,128], index: 7, kind: input, shape index: {}]
  %s8 = inlined_call_operand.vmem [shape: bf16[128,256], index: 8, kind: input, shape index: {}]
  %s9 = inlined_call_operand.hbm [shape: bf16[128,128], index: 9, kind: input, shape index: {}]
  %s10 = inlined_call_operand.hbm [shape: bf16[128,256], index: 10, kind: input, shape index: {}]
  %s11 = inlined_call_operand.vmem [shape: f32[1,256], index: 11, kind: input, shape index: {}]
  %s12 = inlined_call_operand.hbm [shape: bf16[256,128], index: 12, kind: input, shape index: {}]
  %s13 = inlined_call_operand.vmem [shape: f32[1,128], index: 13, kind: input, shape index: {}]
  %s14 = inlined_call_operand.hbm [shape: f32[2,16,128], index: 14, kind: output, shape index: {}]
  %s15 = sld [smem:[#allocation0]]
  $region113: #{decoder_block_forward.1} parent=0
    _
  %s17 = ssub.s32 1, %s15
  %s18 = scalar_select 0, %s17, %s15
  $region1: #{decoder_block_forward.1} parent=0
    #allocation2 [shape = 'u8[98304]{0}', space=vmem, size = 0x18000, scoped, tag = 'input window, operand 5, single buffered']
    #allocation3 [shape = 's32[2]{0}', space=sflag, size = 0x8, scoped, tag = 'scoped memory for decoder_block_forward.1']
    #allocation4 [shape = 's32[2]{0}', space=sflag, size = 0x8, scoped, tag = 'scoped memory for decoder_block_forward.1']
    #allocation5 [shape = 'u8[32768]{0}', space=vmem, size = 0x8000, scoped, tag = 'input window, operand 6, single buffered']
    #allocation6 [shape = 's32[1]{0}', space=sflag, size = 0x4, scoped, tag = 'scoped memory for decoder_block_forward.1']
    #allocation7 [shape = 'u8[32768]{0}', space=vmem, size = 0x8000, scoped, tag = 'input window, operand 7, single buffered']
    #allocation8 [shape = 'u8[32768]{0}', space=vmem, size = 0x8000, scoped, tag = 'input window, operand 9, single buffered']
    #allocation9 [shape = 's32[1]{0}', space=sflag, size = 0x4, scoped, tag = 'scoped memory for decoder_block_forward.1']
    #allocation10 [shape = 'u8[65536]{0}', space=vmem, size = 0x10000, scoped, tag = 'input window, operand 10, single buffered']
    #allocation11 [shape = 'u8[65536]{0}', space=vmem, size = 0x10000, scoped, tag = 'input window, operand 12, single buffered']
    #allocation12 [shape = 's32[1]{0}', space=sflag, size = 0x4, scoped, tag = 'scoped memory for decoder_block_forward.1']
    #allocation13 [shape = 'u8[16384]{0}', space=vmem, size = 0x4000, scoped, tag = 'output window, operand 0']
    %19 = vsyncpa [#allocation3], 0
    %20 = vsyncpa [#allocation6], 0
    %21 = vsyncpa [#allocation9], 0
    %22 = vsyncpa [#allocation12], 0
    %23 = vsyncpa [#allocation4], 0
    %s24 = scalar_lea.sflag [#allocation4], 1
    %25 = vsyncpa %s24, 0
    loop: start=0, step=1, limit=4
    $region2: #{decoder_block_forward.1} parent=1 // loop_pre_header
      _
    $region3: #{decoder_block_forward.1} parent=1 // loop_header
      %s27 = sphi 0, %s31
      %p28 = scmp.ge.s32.totalorder %s27, 4
      %s37 = sphi 0, %s39
      %s40 = sphi 0, %s37
      %s41 = sphi 0, %s40
      %s57 = sphi 0, %s41
      %s63 = sphi 0, %s65
      %s66 = sphi 0, %s63
      %s67 = sphi 0, %s66
      %s83 = sphi 0, %s67
      %s89 = sphi 0, %s91
      %s92 = sphi 0, %s89
      %s93 = sphi 0, %s92
      %s109 = sphi 0, %s93
      %s113 = sphi 0, %s113
      %s115 = sphi 0, %s113
      %s116 = sphi 0, %s115
      %s130 = sphi 0, %s116
      %s134 = sphi 0, %s134
      %s136 = sphi 0, %s134
      %s137 = sphi 0, %s136
      %s151 = sphi 0, %s137
      %s155 = sphi 0, %s155
      %s157 = sphi 0, %s155
      %s158 = sphi 0, %s157
      %s172 = sphi 0, %s158
      %s176 = sphi 0, %s176
      %s178 = sphi 0, %s176
      %s179 = sphi 0, %s178
      %s193 = sphi 0, %s179
      %s197 = sphi 0, %s197
      %s199 = sphi 0, %s197
      %s200 = sphi 0, %s199
      %s214 = sphi 0, %s200
      %s218 = sphi 0, %s218
      %s220 = sphi 0, %s218
      %s221 = sphi 0, %s220
      %s235 = sphi 0, %s221
      %s239 = sphi 0, %s239
      %s241 = sphi 0, %s239
      %s242 = sphi 0, %s241
      %s256 = sphi 0, %s242
      %s260 = sphi 0, %s260
      %s262 = sphi 0, %s260
      %s263 = sphi 0, %s262
      %s277 = sphi 0, %s263
      %s281 = sphi 0, %s281
      %s283 = sphi 0, %s281
      %s284 = sphi 0, %s283
      %s298 = sphi 0, %s284
      %s302 = sphi 0, %s302
      %s304 = sphi 0, %s302
      %s305 = sphi 0, %s304
      %s319 = sphi 0, %s305
      %s323 = sphi 0, %s323
      %s325 = sphi 0, %s323
      %s326 = sphi 0, %s325
      %s340 = sphi 0, %s326
      %s346 = sphi 0, %s348
      %s349 = sphi 0, %s346
      %s350 = sphi 0, %s349
      %s366 = sphi 0, %s350
    $region4: #{decoder_block_forward.1} parent=1 // loop_header_branch
      %30 = sbr.rel (%p28) target = $region8
    $region5: #{decoder_block_forward.1} parent=1 // loop_body
      %s32 = ssub.s32 %s27, 1
      %s33 = ssub.s32 %s27, 2
      %s34 = sadd.s32 %s27, 1
      %s35 = ssub.s32 %s27, %s34
      %p36 = scmp.eq.s32.totalorder %s35, 0
      %s38 = sadd.s32 %s37, 1
      %s39 = scalar_select %p36, %s37, %s38
      %p42 = pneg %p36
      %p43 = scmp.eq.s32.totalorder %s27, 1
      %p44 = por %p42, %p43
      %p45 = scmp.ne.s32.totalorder %s37, %s40
      %p46 = scmp.eq.s32.totalorder %s27, 0
      %p47 = por %p45, %p46
      %p48 = scmp.ne.s32.totalorder %s37, %s40
      %p49 = scmp.eq.s32.totalorder %s32, 1
      %p50 = por %p48, %p49
      %p51 = scmp.ne.s32.totalorder %s40, %s41
      %p52 = scmp.eq.s32.totalorder %s32, 0
      %p53 = por %p51, %p52
      %p54 = scmp.ne.s32.totalorder %s40, %s41
      %p55 = scmp.eq.s32.totalorder %s33, 1
      %p56 = por %p54, %p55
      %p58 = scmp.ne.s32.totalorder %s41, %s57
      %p59 = scmp.eq.s32.totalorder %s33, 0
      %p60 = por %p58, %p59
      %s61 = ssub.s32 %s27, %s34
      %p62 = scmp.eq.s32.totalorder %s61, 0
      %s64 = sadd.s32 %s63, 1
      %s65 = scalar_select %p62, %s63, %s64
      %p68 = pneg %p62
      %p69 = scmp.eq.s32.totalorder %s27, 1
      %p70 = por %p68, %p69
      %p71 = scmp.ne.s32.totalorder %s63, %s66
      %p72 = scmp.eq.s32.totalorder %s27, 0
      %p73 = por %p71, %p72
      %p74 = scmp.ne.s32.totalorder %s63, %s66
      %p75 = scmp.eq.s32.totalorder %s32, 1
      %p76 = por %p74, %p75
      %p77 = scmp.ne.s32.totalorder %s66, %s67
      %p78 = scmp.eq.s32.totalorder %s32, 0
      %p79 = por %p77, %p78
      %p80 = scmp.ne.s32.totalorder %s66, %s67
      %p81 = scmp.eq.s32.totalorder %s33, 1
      %p82 = por %p80, %p81
      %p84 = scmp.ne.s32.totalorder %s67, %s83
      %p85 = scmp.eq.s32.totalorder %s33, 0
      %p86 = por %p84, %p85
      %s87 = ssub.s32 %s27, %s34
      %p88 = scmp.eq.s32.totalorder %s87, 0
      %s90 = sadd.s32 %s89, 1
      %s91 = scalar_select %p88, %s89, %s90
      %p94 = pneg %p88
      %p95 = scmp.eq.s32.totalorder %s27, 1
      %p96 = por %p94, %p95
      %p97 = scmp.ne.s32.totalorder %s89, %s92
      %p98 = scmp.eq.s32.totalorder %s27, 0
      %p99 = por %p97, %p98
      %p100 = scmp.ne.s32.totalorder %s89, %s92
      %p101 = scmp.eq.s32.totalorder %s32, 1
      %p102 = por %p100, %p101
      %p103 = scmp.ne.s32.totalorder %s92, %s93
      %p104 = scmp.eq.s32.totalorder %s32, 0
      %p105 = por %p103, %p104
      %p106 = scmp.ne.s32.totalorder %s92, %s93
      %p107 = scmp.eq.s32.totalorder %s33, 1
      %p108 = por %p106, %p107
      %p110 = scmp.ne.s32.totalorder %s93, %s109
      %p111 = scmp.eq.s32.totalorder %s33, 0
      %p112 = por %p110, %p111
      %s114 = sadd.s32 %s113, 1
      %p117 = scmp.eq.s32.totalorder %s27, 1
      %p118 = scmp.ne.s32.totalorder %s113, %s115
      %p119 = scmp.eq.s32.totalorder %s27, 0
      %p120 = por %p118, %p119
      %p121 = scmp.ne.s32.totalorder %s113, %s115
      %p122 = scmp.eq.s32.totalorder %s32, 1
      %p123 = por %p121, %p122
      %p124 = scmp.ne.s32.totalorder %s115, %s116
      %p125 = scmp.eq.s32.totalorder %s32, 0
      %p126 = por %p124, %p125
      %p127 = scmp.ne.s32.totalorder %s115, %s116
      %p128 = scmp.eq.s32.totalorder %s33, 1
      %p129 = por %p127, %p128
      %p131 = scmp.ne.s32.totalorder %s116, %s130
      %p132 = scmp.eq.s32.totalorder %s33, 0
      %p133 = por %p131, %p132
      %s135 = sadd.s32 %s134, 1
      %p138 = scmp.eq.s32.totalorder %s27, 1
      %p139 = scmp.ne.s32.totalorder %s134, %s136
      %p140 = scmp.eq.s32.totalorder %s27, 0
      %p141 = por %p139, %p140
      %p142 = scmp.ne.s32.totalorder %s134, %s136
      %p143 = scmp.eq.s32.totalorder %s32, 1
      %p144 = por %p142, %p143
      %p145 = scmp.ne.s32.totalorder %s136, %s137
      %p146 = scmp.eq.s32.totalorder %s32, 0
      %p147 = por %p145, %p146
      %p148 = scmp.ne.s32.totalorder %s136, %s137
      %p149 = scmp.eq.s32.totalorder %s33, 1
      %p150 = por %p148, %p149
      %p152 = scmp.ne.s32.totalorder %s137, %s151
      %p153 = scmp.eq.s32.totalorder %s33, 0
      %p154 = por %p152, %p153
      %s156 = sadd.s32 %s155, 1
      %p159 = scmp.eq.s32.totalorder %s27, 1
      %p160 = scmp.ne.s32.totalorder %s155, %s157
      %p161 = scmp.eq.s32.totalorder %s27, 0
      %p162 = por %p160, %p161
      %p163 = scmp.ne.s32.totalorder %s155, %s157
      %p164 = scmp.eq.s32.totalorder %s32, 1
      %p165 = por %p163, %p164
      %p166 = scmp.ne.s32.totalorder %s157, %s158
      %p167 = scmp.eq.s32.totalorder %s32, 0
      %p168 = por %p166, %p167
      %p169 = scmp.ne.s32.totalorder %s157, %s158
      %p170 = scmp.eq.s32.totalorder %s33, 1
      %p171 = por %p169, %p170
      %p173 = scmp.ne.s32.totalorder %s158, %s172
      %p174 = scmp.eq.s32.totalorder %s33, 0
      %p175 = por %p173, %p174
      %s177 = sadd.s32 %s176, 1
      %p180 = scmp.eq.s32.totalorder %s27, 1
      %p181 = scmp.ne.s32.totalorder %s176, %s178
      %p182 = scmp.eq.s32.totalorder %s27, 0
      %p183 = por %p181, %p182
      %p184 = scmp.ne.s32.totalorder %s176, %s178
      %p185 = scmp.eq.s32.totalorder %s32, 1
      %p186 = por %p184, %p185
      %p187 = scmp.ne.s32.totalorder %s178, %s179
      %p188 = scmp.eq.s32.totalorder %s32, 0
      %p189 = por %p187, %p188
      %p190 = scmp.ne.s32.totalorder %s178, %s179
      %p191 = scmp.eq.s32.totalorder %s33, 1
      %p192 = por %p190, %p191
      %p194 = scmp.ne.s32.totalorder %s179, %s193
      %p195 = scmp.eq.s32.totalorder %s33, 0
      %p196 = por %p194, %p195
      %s198 = sadd.s32 %s197, 1
      %p201 = scmp.eq.s32.totalorder %s27, 1
      %p202 = scmp.ne.s32.totalorder %s197, %s199
      %p203 = scmp.eq.s32.totalorder %s27, 0
      %p204 = por %p202, %p203
      %p205 = scmp.ne.s32.totalorder %s197, %s199
      %p206 = scmp.eq.s32.totalorder %s32, 1
      %p207 = por %p205, %p206
      %p208 = scmp.ne.s32.totalorder %s199, %s200
      %p209 = scmp.eq.s32.totalorder %s32, 0
      %p210 = por %p208, %p209
      %p211 = scmp.ne.s32.totalorder %s199, %s200
      %p212 = scmp.eq.s32.totalorder %s33, 1
      %p213 = por %p211, %p212
      %p215 = scmp.ne.s32.totalorder %s200, %s214
      %p216 = scmp.eq.s32.totalorder %s33, 0
      %p217 = por %p215, %p216
      %s219 = sadd.s32 %s218, 1
      %p222 = scmp.eq.s32.totalorder %s27, 1
      %p223 = scmp.ne.s32.totalorder %s218, %s220
      %p224 = scmp.eq.s32.totalorder %s27, 0
      %p225 = por %p223, %p224
      %p226 = scmp.ne.s32.totalorder %s218, %s220
      %p227 = scmp.eq.s32.totalorder %s32, 1
      %p228 = por %p226, %p227
      %p229 = scmp.ne.s32.totalorder %s220, %s221
      %p230 = scmp.eq.s32.totalorder %s32, 0
      %p231 = por %p229, %p230
      %p232 = scmp.ne.s32.totalorder %s220, %s221
      %p233 = scmp.eq.s32.totalorder %s33, 1
      %p234 = por %p232, %p233
      %p236 = scmp.ne.s32.totalorder %s221, %s235
      %p237 = scmp.eq.s32.totalorder %s33, 0
      %p238 = por %p236, %p237
      %s240 = sadd.s32 %s239, 1
      %p243 = scmp.eq.s32.totalorder %s27, 1
      %p244 = scmp.ne.s32.totalorder %s239, %s241
      %p245 = scmp.eq.s32.totalorder %s27, 0
      %p246 = por %p244, %p245
      %p247 = scmp.ne.s32.totalorder %s239, %s241
      %p248 = scmp.eq.s32.totalorder %s32, 1
      %p249 = por %p247, %p248
      %p250 = scmp.ne.s32.totalorder %s241, %s242
      %p251 = scmp.eq.s32.totalorder %s32, 0
      %p252 = por %p250, %p251
      %p253 = scmp.ne.s32.totalorder %s241, %s242
      %p254 = scmp.eq.s32.totalorder %s33, 1
      %p255 = por %p253, %p254
      %p257 = scmp.ne.s32.totalorder %s242, %s256
      %p258 = scmp.eq.s32.totalorder %s33, 0
      %p259 = por %p257, %p258
      %s261 = sadd.s32 %s260, 1
      %p264 = scmp.eq.s32.totalorder %s27, 1
      %p265 = scmp.ne.s32.totalorder %s260, %s262
      %p266 = scmp.eq.s32.totalorder %s27, 0
      %p267 = por %p265, %p266
      %p268 = scmp.ne.s32.totalorder %s260, %s262
      %p269 = scmp.eq.s32.totalorder %s32, 1
      %p270 = por %p268, %p269
      %p271 = scmp.ne.s32.totalorder %s262, %s263
      %p272 = scmp.eq.s32.totalorder %s32, 0
      %p273 = por %p271, %p272
      %p274 = scmp.ne.s32.totalorder %s262, %s263
      %p275 = scmp.eq.s32.totalorder %s33, 1
      %p276 = por %p274, %p275
      %p278 = scmp.ne.s32.totalorder %s263, %s277
      %p279 = scmp.eq.s32.totalorder %s33, 0
      %p280 = por %p278, %p279
      %s282 = sadd.s32 %s281, 1
      %p285 = scmp.eq.s32.totalorder %s27, 1
      %p286 = scmp.ne.s32.totalorder %s281, %s283
      %p287 = scmp.eq.s32.totalorder %s27, 0
      %p288 = por %p286, %p287
      %p289 = scmp.ne.s32.totalorder %s281, %s283
      %p290 = scmp.eq.s32.totalorder %s32, 1
      %p291 = por %p289, %p290
      %p292 = scmp.ne.s32.totalorder %s283, %s284
      %p293 = scmp.eq.s32.totalorder %s32, 0
      %p294 = por %p292, %p293
      %p295 = scmp.ne.s32.totalorder %s283, %s284
      %p296 = scmp.eq.s32.totalorder %s33, 1
      %p297 = por %p295, %p296
      %p299 = scmp.ne.s32.totalorder %s284, %s298
      %p300 = scmp.eq.s32.totalorder %s33, 0
      %p301 = por %p299, %p300
      %s303 = sadd.s32 %s302, 1
      %p306 = scmp.eq.s32.totalorder %s27, 1
      %p307 = scmp.ne.s32.totalorder %s302, %s304
      %p308 = scmp.eq.s32.totalorder %s27, 0
      %p309 = por %p307, %p308
      %p310 = scmp.ne.s32.totalorder %s302, %s304
      %p311 = scmp.eq.s32.totalorder %s32, 1
      %p312 = por %p310, %p311
      %p313 = scmp.ne.s32.totalorder %s304, %s305
      %p314 = scmp.eq.s32.totalorder %s32, 0
      %p315 = por %p313, %p314
      %p316 = scmp.ne.s32.totalorder %s304, %s305
      %p317 = scmp.eq.s32.totalorder %s33, 1
      %p318 = por %p316, %p317
      %p320 = scmp.ne.s32.totalorder %s305, %s319
      %p321 = scmp.eq.s32.totalorder %s33, 0
      %p322 = por %p320, %p321
      %s324 = sadd.s32 %s323, 1
      %p327 = scmp.eq.s32.totalorder %s27, 1
      %p328 = scmp.ne.s32.totalorder %s323, %s325
      %p329 = scmp.eq.s32.totalorder %s27, 0
      %p330 = por %p328, %p329
      %p331 = scmp.ne.s32.totalorder %s323, %s325
      %p332 = scmp.eq.s32.totalorder %s32, 1
      %p333 = por %p331, %p332
      %p334 = scmp.ne.s32.totalorder %s325, %s326
      %p335 = scmp.eq.s32.totalorder %s32, 0
      %p336 = por %p334, %p335
      %p337 = scmp.ne.s32.totalorder %s325, %s326
      %p338 = scmp.eq.s32.totalorder %s33, 1
      %p339 = por %p337, %p338
      %p341 = scmp.ne.s32.totalorder %s326, %s340
      %p342 = scmp.eq.s32.totalorder %s33, 0
      %p343 = por %p341, %p342
      %s344 = ssub.s32 %s27, %s34
      %p345 = scmp.eq.s32.totalorder %s344, 0
      %s347 = sadd.s32 %s346, 1
      %s348 = scalar_select %p345, %s346, %s347
      %p351 = pneg %p345
      %p352 = scmp.eq.s32.totalorder %s27, 1
      %p353 = por %p351, %p352
      %p354 = scmp.ne.s32.totalorder %s346, %s349
      %p355 = scmp.eq.s32.totalorder %s27, 0
      %p356 = por %p354, %p355
      %p357 = scmp.ne.s32.totalorder %s346, %s349
      %p358 = scmp.eq.s32.totalorder %s32, 1
      %p359 = por %p357, %p358
      %p360 = scmp.ne.s32.totalorder %s349, %s350
      %p361 = scmp.eq.s32.totalorder %s32, 0
      %p362 = por %p360, %p361
      %p363 = scmp.ne.s32.totalorder %s349, %s350
      %p364 = scmp.eq.s32.totalorder %s33, 1
      %p365 = por %p363, %p364
      %p367 = scmp.ne.s32.totalorder %s350, %s366
      %p368 = scmp.eq.s32.totalorder %s33, 0
      %p369 = por %p367, %p368
      %p370 = scmp.le.s32.totalorder 1, %s27
      %p371 = scmp.lt.s32.totalorder %s27, 3
      %p372 = pnand %p370, %p371
      %p373 = pneg %p372
      // Predicated region
      $region9: #{decoder_block_forward.1} parent=5 // pred_check
        _
      $region10: #{decoder_block_forward.1} parent=5 // pred_check_branch
        %375 = sbr.rel (%p372) target = $region12
      $region11: #{decoder_block_forward.1} parent=5 // pred_region
        %s376 = ssub.s32 %s27, 1
        // Predicated region
        $region13: #{decoder_block_forward.1} parent=11 // pred_check
          %p377 = pneg %p126
        $region14: #{decoder_block_forward.1} parent=11 // pred_check_branch
          %379 = sbr.rel (%p377) target = $region16
        $region15: #{decoder_block_forward.1} parent=11 // pred_region
          _
        $region16: #{decoder_block_forward.1} parent=11 // pred_fallthru
          _
        // Predicated region
        $region17: #{decoder_block_forward.1} parent=11 // pred_check
          %p380 = pneg %p147
        $region18: #{decoder_block_forward.1} parent=11 // pred_check_branch
          %382 = sbr.rel (%p380) target = $region20
        $region19: #{decoder_block_forward.1} parent=11 // pred_region
          _
        $region20: #{decoder_block_forward.1} parent=11 // pred_fallthru
          _
        // Predicated region
        $region21: #{decoder_block_forward.1} parent=11 // pred_check
          %p383 = pneg %p168
        $region22: #{decoder_block_forward.1} parent=11 // pred_check_branch
          %385 = sbr.rel (%p383) target = $region24
        $region23: #{decoder_block_forward.1} parent=11 // pred_region
          %387 = vsyncadd [#allocation3], 0
          %s388 = sshll.u32 %s5, 4
          %s389 = int_to_ptr.hbm [resolvable:$true] %s388
          %s390 = sshll.u32 [#allocation2], 4
          %s391 = int_to_ptr.vmem [resolvable:$true] %s390
          %396 = dma.hbm_to_vmem [thread:$0]  %s389, 3072, %s391, [#allocation3], 192, 192, 12
        $region24: #{decoder_block_forward.1} parent=11 // pred_fallthru
          _
        // Predicated region
        $region25: #{decoder_block_forward.1} parent=11 // pred_check
          %p397 = pneg %p189
        $region26: #{decoder_block_forward.1} parent=11 // pred_check_branch
          %399 = sbr.rel (%p397) target = $region28
        $region27: #{decoder_block_forward.1} parent=11 // pred_region
          %401 = vsyncadd [#allocation6], 0
          %s402 = sshll.u32 %s6, 4
          %s403 = int_to_ptr.hbm [resolvable:$true] %s402
          %s404 = sshll.u32 [#allocation5], 4
          %s405 = int_to_ptr.vmem [resolvable:$true] %s404
          %410 = dma.hbm_to_vmem [thread:$0]  %s403, 1024, %s405, [#allocation6], 64, 64, 4
        $region28: #{decoder_block_forward.1} parent=11 // pred_fallthru
          _
        // Predicated region
        $region29: #{decoder_block_forward.1} parent=11 // pred_check
          %p411 = pneg %p210
        $region30: #{decoder_block_forward.1} parent=11 // pred_check_branch
          %413 = sbr.rel (%p411) target = $region32
        $region31: #{decoder_block_forward.1} parent=11 // pred_region
          %415 = vsyncadd [#allocation6], 0
          %s416 = sshll.u32 %s7, 4
          %s417 = int_to_ptr.hbm [resolvable:$true] %s416
          %s418 = sshll.u32 [#allocation7], 4
          %s419 = int_to_ptr.vmem [resolvable:$true] %s418
          %424 = dma.hbm_to_vmem [thread:$0]  %s417, 1024, %s419, [#allocation6], 64, 64, 4
        $region32: #{decoder_block_forward.1} parent=11 // pred_fallthru
          _
        // Predicated region
        $region33: #{decoder_block_forward.1} parent=11 // pred_check
          %p425 = pneg %p231
        $region34: #{decoder_block_forward.1} parent=11 // pred_check_branch
          %427 = sbr.rel (%p425) target = $region36
        $region35: #{decoder_block_forward.1} parent=11 // pred_region
          _
        $region36: #{decoder_block_forward.1} parent=11 // pred_fallthru
          _
        // Predicated region
        $region37: #{decoder_block_forward.1} parent=11 // pred_check
          %p428 = pneg %p252
        $region38: #{decoder_block_forward.1} parent=11 // pred_check_branch
          %430 = sbr.rel (%p428) target = $region40
        $region39: #{decoder_block_forward.1} parent=11 // pred_region
          %432 = vsyncadd [#allocation9], 0
          %s433 = sshll.u32 %s9, 4
          %s434 = int_to_ptr.hbm [resolvable:$true] %s433
          %s435 = sshll.u32 [#allocation8], 4
          %s436 = int_to_ptr.vmem [resolvable:$true] %s435
          %441 = dma.hbm_to_vmem [thread:$0]  %s434, 1024, %s436, [#allocation9], 64, 64, 4
        $region40: #{decoder_block_forward.1} parent=11 // pred_fallthru
          _
        // Predicated region
        $region41: #{decoder_block_forward.1} parent=11 // pred_check
          %p442 = pneg %p273
        $region42: #{decoder_block_forward.1} parent=11 // pred_check_branch
          %444 = sbr.rel (%p442) target = $region44
        $region43: #{decoder_block_forward.1} parent=11 // pred_region
          %446 = vsyncadd [#allocation9], 0
          %s447 = sshll.u32 %s10, 4
          %s448 = int_to_ptr.hbm [resolvable:$true] %s447
          %s449 = sshll.u32 [#allocation10], 4
          %s450 = int_to_ptr.vmem [resolvable:$true] %s449
          %455 = dma.hbm_to_vmem [thread:$0]  %s448, 2048, %s450, [#allocation9], 128, 128, 8
        $region44: #{decoder_block_forward.1} parent=11 // pred_fallthru
          _
        // Predicated region
        $region45: #{decoder_block_forward.1} parent=11 // pred_check
          %p456 = pneg %p294
        $region46: #{decoder_block_forward.1} parent=11 // pred_check_branch
          %458 = sbr.rel (%p456) target = $region48
        $region47: #{decoder_block_forward.1} parent=11 // pred_region
          _
        $region48: #{decoder_block_forward.1} parent=11 // pred_fallthru
          _
        // Predicated region
        $region49: #{decoder_block_forward.1} parent=11 // pred_check
          %p459 = pneg %p315
        $region50: #{decoder_block_forward.1} parent=11 // pred_check_branch
          %461 = sbr.rel (%p459) target = $region52
        $region51: #{decoder_block_forward.1} parent=11 // pred_region
          %463 = vsyncadd [#allocation12], 0
          %s464 = sshll.u32 %s12, 4
          %s465 = int_to_ptr.hbm [resolvable:$true] %s464
          %s466 = sshll.u32 [#allocation11], 4
          %s467 = int_to_ptr.vmem [resolvable:$true] %s466
          %472 = dma.hbm_to_vmem [thread:$0]  %s465, 2048, %s467, [#allocation12], 64, 64, 4
        $region52: #{decoder_block_forward.1} parent=11 // pred_fallthru
          _
        // Predicated region
        $region53: #{decoder_block_forward.1} parent=11 // pred_check
          %p473 = pneg %p336
        $region54: #{decoder_block_forward.1} parent=11 // pred_check_branch
          %475 = sbr.rel (%p473) target = $region56
        $region55: #{decoder_block_forward.1} parent=11 // pred_region
          _
        $region56: #{decoder_block_forward.1} parent=11 // pred_fallthru
          _
      $region12: #{decoder_block_forward.1} parent=5 // pred_fallthru
        _
      %p476 = scmp.lt.s32.totalorder %s27, 2
      // Predicated region
      $region57: #{decoder_block_forward.1} parent=5 // pred_check
        %p477 = pneg %p476
      $region58: #{decoder_block_forward.1} parent=5 // pred_check_branch
        %479 = sbr.rel (%p477) target = $region60
      $region59: #{decoder_block_forward.1} parent=5 // pred_region
        // Predicated region
        $region61: #{decoder_block_forward.1} parent=59 // pred_check
          %p480 = pneg %p47
        $region62: #{decoder_block_forward.1} parent=59 // pred_check_branch
          %482 = sbr.rel (%p480) target = $region64
        $region63: #{decoder_block_forward.1} parent=59 // pred_region
          %p483 = scmp.lt.s32.totalorder %s27, 1
          %s484 = scalar_select %p483, %s27, 1
          %s485 = smul.addr %s484, 2
          %s486 = smul.addr %s485, 8
          %s487 = scalar_lea.vmem %s0, %s486
        $region64: #{decoder_block_forward.1} parent=59 // pred_fallthru
          _
        // Predicated region
        $region65: #{decoder_block_forward.1} parent=59 // pred_check
          %p488 = pneg %p73
        $region66: #{decoder_block_forward.1} parent=59 // pred_check_branch
          %490 = sbr.rel (%p488) target = $region68
        $region67: #{decoder_block_forward.1} parent=59 // pred_region
          %p491 = scmp.lt.s32.totalorder %s27, 1
          %s492 = scalar_select %p491, %s27, 1
          %s493 = smul.addr %s492, 2
          %s494 = smul.addr %s493, 8
          %s495 = scalar_lea.vmem %s1, %s494
        $region68: #{decoder_block_forward.1} parent=59 // pred_fallthru
          _
        // Predicated region
        $region69: #{decoder_block_forward.1} parent=59 // pred_check
          %p496 = pneg %p99
        $region70: #{decoder_block_forward.1} parent=59 // pred_check_branch
          %498 = sbr.rel (%p496) target = $region72
        $region71: #{decoder_block_forward.1} parent=59 // pred_region
          %p499 = scmp.lt.s32.totalorder %s27, 1
          %s500 = scalar_select %p499, %s27, 1
          %s501 = smul.addr %s500, 8
          %s502 = scalar_lea.vmem %s2, %s501
        $region72: #{decoder_block_forward.1} parent=59 // pred_fallthru
          _
      $region60: #{decoder_block_forward.1} parent=5 // pred_fallthru
        _
      %p503 = scmp.le.s32.totalorder 1, %s27
      %p504 = scmp.lt.s32.totalorder %s27, 3
      %p505 = pnand %p503, %p504
      %p506 = pneg %p505
      // Predicated region
      $region73: #{decoder_block_forward.1} parent=5 // pred_check
        _
      $region74: #{decoder_block_forward.1} parent=5 // pred_check_branch
        %508 = sbr.rel (%p505) target = $region76
      $region75: #{decoder_block_forward.1} parent=5 // pred_region
        %s509 = ssub.s32 %s27, 1
        // Predicated region
        $region77: #{decoder_block_forward.1} parent=75 // pred_check
          %p510 = pneg %p168
        $region78: #{decoder_block_forward.1} parent=75 // pred_check_branch
          %512 = sbr.rel (%p510) target = $region80
        $region79: #{decoder_block_forward.1} parent=75 // pred_region
          %514 = dma.done [#allocation3], 3072
        $region80: #{decoder_block_forward.1} parent=75 // pred_fallthru
          _
        // Predicated region
        $region81: #{decoder_block_forward.1} parent=75 // pred_check
          %p515 = pneg %p189
        $region82: #{decoder_block_forward.1} parent=75 // pred_check_branch
          %517 = sbr.rel (%p515) target = $region84
        $region83: #{decoder_block_forward.1} parent=75 // pred_region
          %519 = dma.done [#allocation6], 1024
        $region84: #{decoder_block_forward.1} parent=75 // pred_fallthru
          _
        // Predicated region
        $region85: #{decoder_block_forward.1} parent=75 // pred_check
          %p520 = pneg %p210
        $region86: #{decoder_block_forward.1} parent=75 // pred_check_branch
          %522 = sbr.rel (%p520) target = $region88
        $region87: #{decoder_block_forward.1} parent=75 // pred_region
          %524 = dma.done [#allocation6], 1024
        $region88: #{decoder_block_forward.1} parent=75 // pred_fallthru
          _
        // Predicated region
        $region89: #{decoder_block_forward.1} parent=75 // pred_check
          %p525 = pneg %p252
        $region90: #{decoder_block_forward.1} parent=75 // pred_check_branch
          %527 = sbr.rel (%p525) target = $region92
        $region91: #{decoder_block_forward.1} parent=75 // pred_region
          %529 = dma.done [#allocation9], 1024
        $region92: #{decoder_block_forward.1} parent=75 // pred_fallthru
          _
        // Predicated region
        $region93: #{decoder_block_forward.1} parent=75 // pred_check
          %p530 = pneg %p273
        $region94: #{decoder_block_forward.1} parent=75 // pred_check_branch
          %532 = sbr.rel (%p530) target = $region96
        $region95: #{decoder_block_forward.1} parent=75 // pred_region
          %534 = dma.done [#allocation9], 2048
        $region96: #{decoder_block_forward.1} parent=75 // pred_fallthru
          _
        // Predicated region
        $region97: #{decoder_block_forward.1} parent=75 // pred_check
          %p535 = pneg %p315
        $region98: #{decoder_block_forward.1} parent=75 // pred_check_branch
          %537 = sbr.rel (%p535) target = $region100
        $region99: #{decoder_block_forward.1} parent=75 // pred_region
          %539 = dma.done [#allocation12], 2048
        $region100: #{decoder_block_forward.1} parent=75 // pred_fallthru
          _
        %p540 = scmp.lt.s32.totalorder %s32, 1
        %s541 = scalar_select %p540, %s32, 1
        %s542 = smul.addr %s541, 2
        %s543 = smul.addr %s542, 8
        %s544 = scalar_lea.vmem %s0, %s543
        %p545 = pneg %p53
        %p546 = pneg %p50
        %p547 = scmp.lt.s32.totalorder %s32, 1
        %s548 = scalar_select %p547, %s32, 1
        %s549 = smul.addr %s548, 2
        %s550 = smul.addr %s549, 8
        %s551 = scalar_lea.vmem %s1, %s550
        %p552 = pneg %p79
        %p553 = pneg %p76
        %p554 = scmp.lt.s32.totalorder %s32, 1
        %s555 = scalar_select %p554, %s32, 1
        %s556 = smul.addr %s555, 8
        %s557 = scalar_lea.vmem %s2, %s556
        %p558 = pneg %p105
        %p559 = pneg %p102
        %p560 = pneg %p126
        %p561 = pneg %p123
        %p562 = pneg %p147
        %p563 = pneg %p144
        %p564 = pneg %p168
        %p565 = pneg %p165
        %p566 = pneg %p189
        %p567 = pneg %p186
        %p568 = pneg %p210
        %p569 = pneg %p207
        %p570 = pneg %p231
        %p571 = pneg %p228
        %p572 = pneg %p252
        %p573 = pneg %p249
        %p574 = pneg %p273
        %p575 = pneg %p270
        %p576 = pneg %p294
        %p577 = pneg %p291
        %p578 = pneg %p315
        %p579 = pneg %p312
        %p580 = pneg %p336
        %p581 = pneg %p333
        %p582 = pneg %p362
        %p583 = pneg %p359
        %s584 = sand.u32 %s349, 1
        %s585 = scalar_lea.sflag [#allocation4], %s584
        %s586 = sand.u32 %s349, 1
        %s587 = smul.addr %s586, 16
        %s588 = scalar_lea.vmem [#allocation13], %s587
        %p589 = scmp.lt.s32.totalorder %s32, 1
        %s590 = scalar_select %p589, %s32, 1
        %s591 = smul.addr %s590, 2
        %s592 = smul.addr %s591, 8
        %s593 = scalar_lea.vmem %s0, %s592
        %p594 = scmp.lt.s32.totalorder %s32, 1
        %s595 = scalar_select %p594, %s32, 1
        %s596 = smul.addr %s595, 2
        %s597 = smul.addr %s596, 8
        %s598 = scalar_lea.vmem %s1, %s597
        %p599 = scmp.lt.s32.totalorder %s32, 1
        %s600 = scalar_select %p599, %s32, 1
        %s601 = smul.addr %s600, 8
        %s602 = scalar_lea.vmem %s2, %s601
        %v604 = vld [vmem:[%s593] sm:$0xff]
        %v605 = vld [vmem:[%s593 + $0x8] sm:$0xff]
        %v606 = vld [vmem:[%s602] sm:$0x3f]
        %v607 = vld [vmem:[%s3] sm:$0xff]
        %v608 = vld [vmem:[%s3 + $0x8] sm:$0xff]
        %v609 = vld [vmem:[%s4] sm:$0xff]
        %v610 = vld [vmem:[%s4 + $0x8] sm:$0xff]
        %611 = vadd.xlane.f32.xlu0 %v604
        %v612 = vpop.xlane.xlu0 %611
        %613 = vadd.xlane.f32.xlu0 %v605
        %v614 = vpop.xlane.xlu0 %613
        %v615 = vrcp.pop 128.0
        %v616 = vmul.f32 128.0, %v615
        %v617 = vsub.f32 1.0, %v616
        %v618 = vmul.f32 %v615, %v617
        %v619 = vadd.f32 %v615, %v618
        %vm620 = vweird.f32 %v615
        %v621 = vsel %vm620, %v615, %v619
        %v622 = vmul.f32 %v612, %v621
        %v623 = vmul.f32 %v614, %v621
        %v624 = vsub.f32 %v604, %v622
        %v625 = vsub.f32 %v605, %v623
        %v626 = vmul.f32 %v624, %v624
        %v627 = vmul.f32 %v625, %v625
        %628 = vadd.xlane.f32.xlu0 %v626
        %v629 = vpop.xlane.xlu0 %628
        %630 = vadd.xlane.f32.xlu0 %v627
        %v631 = vpop.xlane.xlu0 %630
        %v632 = vmul.f32 %v629, 0.007874016
        %v633 = vmul.f32 %v631, 0.007874016
        %v634 = vrsqrt.pop %v632
        %v635 = vmul.f32 %v634, %v632
        %v636 = vmul.f32 %v635, %v634
        %v637 = vmul.f32 0.5, %v636
        %v638 = vsub.f32 1.5, %v637
        %v639 = vmul.f32 %v634, %v638
        %v640 = vmul.f32 %v632, %v639
        %vm641 = vcmp.eq.f32.partialorder %v632, inf
        %v642 = vsel %vm641, %v632, %v640
        %vm643 = vcmp.eq.f32.partialorder %v632, 0.0
        %v644 = vand.u32 %v632, 2147483648
        %v645 = vsel %vm643, %v644, %v642
        %v646 = vrsqrt.pop %v633
        %v647 = vmul.f32 %v646, %v633
        %v648 = vmul.f32 %v647, %v646
        %v649 = vmul.f32 0.5, %v648
        %v650 = vsub.f32 1.5, %v649
        %v651 = vmul.f32 %v646, %v650
        %v652 = vmul.f32 %v633, %v651
        %vm653 = vcmp.eq.f32.partialorder %v633, inf
        %v654 = vsel %vm653, %v633, %v652
        %vm655 = vcmp.eq.f32.partialorder %v633, 0.0
        %v656 = vand.u32 %v633, 2147483648
        %v657 = vsel %vm655, %v656, %v654
        %v658 = vadd.f32 %v645, 1e-06
        %v659 = vadd.f32 %v657, 1e-06
        %v660 = vrcp.pop %v658
        %v661 = vmul.f32 %v658, %v660
        %v662 = vsub.f32 1.0, %v661
        %v663 = vmul.f32 %v660, %v662
        %v664 = vadd.f32 %v660, %v663
        %vm665 = vweird.f32 %v658
        %vm666 = vweird.f32 %v660
        %vm667 = vmor %vm665, %vm666
        %v668 = vsel %vm667, %v660, %v664
        %v669 = vand.u32 2147483647, %v658
        %vm670 = vcmp.eq.f32.partialorder %v669, 8.507059e+37
        %v671 = vand.u32 %v658, 2147483648
        %v672 = vor.u32 1.1754944e-38, %v671
        %v673 = vsel %vm670, %v672, %v668
        %v674 = vmul.f32 1.0, %v673
        %v675 = vrcp.pop %v659
        %v676 = vmul.f32 %v659, %v675
        %v677 = vsub.f32 1.0, %v676
        %v678 = vmul.f32 %v675, %v677
        %v679 = vadd.f32 %v675, %v678
        %vm680 = vweird.f32 %v659
        %vm681 = vweird.f32 %v675
        %vm682 = vmor %vm680, %vm681
        %v683 = vsel %vm682, %v675, %v679
        %v684 = vand.u32 2147483647, %v659
        %vm685 = vcmp.eq.f32.partialorder %v684, 8.507059e+37
        %v686 = vand.u32 %v659, 2147483648
        %v687 = vor.u32 1.1754944e-38, %v686
        %v688 = vsel %vm685, %v687, %v683
        %v689 = vmul.f32 1.0, %v688
        %v690 = vmul.f32 %v624, %v674
        %v691 = vmul.f32 %v625, %v689
        %v692 = vperm.slane %v606, 0
        %v693 = vmul.f32 %v692, %v690
        %v694 = vmul.f32 %v692, %v691
        %v695 = vperm.slane %v606, 1
        %v696 = vadd.f32 %v693, %v695
        %v697 = vadd.f32 %v694, %v695
        %v698 = vpack.c.bf16 %v697, %v696
        %v699 = vld [vmem:[#allocation2] sm:$0xff]
        %v700 = vld [vmem:[#allocation2 + $0x8] sm:$0xf]
        %v701 = vld [vmem:[#allocation2 + $0xc] sm:$0xff]
        %v702 = vld [vmem:[#allocation2 + $0x14] sm:$0xf]
        %v703 = vld [vmem:[#allocation2 + $0x18] sm:$0xff]
        %v704 = vld [vmem:[#allocation2 + $0x20] sm:$0xf]
        %v705 = vld [vmem:[#allocation2 + $0x24] sm:$0xff]
        %v706 = vld [vmem:[#allocation2 + $0x2c] sm:$0xf]
        %v707 = vld [vmem:[#allocation2 + $0x30] sm:$0xff]
        %v708 = vld [vmem:[#allocation2 + $0x38] sm:$0xf]
        %v709 = vld [vmem:[#allocation2 + $0x3c] sm:$0xff]
        %v710 = vld [vmem:[#allocation2 + $0x44] sm:$0xf]
        %v711 = vld [vmem:[#allocation2 + $0x48] sm:$0xff]
        %v712 = vld [vmem:[#allocation2 + $0x50] sm:$0xf]
        %v713 = vld [vmem:[#allocation2 + $0x54] sm:$0xff]
        %v714 = vld [vmem:[#allocation2 + $0x5c] sm:$0xf]
        %v715 = vld [vmem:[#allocation2 + $0x60] sm:$0xff]
        %v716 = vld [vmem:[#allocation2 + $0x68] sm:$0xf]
        %v717 = vld [vmem:[#allocation2 + $0x6c] sm:$0xff]
        %v718 = vld [vmem:[#allocation2 + $0x74] sm:$0xf]
        %v719 = vld [vmem:[#allocation2 + $0x78] sm:$0xff]
        %v720 = vld [vmem:[#allocation2 + $0x80] sm:$0xf]
        %v721 = vld [vmem:[#allocation2 + $0x84] sm:$0xff]
        %v722 = vld [vmem:[#allocation2 + $0x8c] sm:$0xf]
        %v723 = vld [vmem:[#allocation2 + $0x90] sm:$0xff]
        %v724 = vld [vmem:[#allocation2 + $0x98] sm:$0xf]
        %v725 = vld [vmem:[#allocation2 + $0x9c] sm:$0xff]
        %v726 = vld [vmem:[#allocation2 + $0xa4] sm:$0xf]
        %v727 = vld [vmem:[#allocation2 + $0xa8] sm:$0xff]
        %v728 = vld [vmem:[#allocation2 + $0xb0] sm:$0xf]
        %v729 = vld [vmem:[#allocation2 + $0xb4] sm:$0xff]
        %v730 = vld [vmem:[#allocation2 + $0xbc] sm:$0xf]
        %v763 = vunpack.c.l.b16 %v699
        %v764 = vunpack.c.h.b16 %v699
        %v765 = vunpack.c.l.b16 %v700
        %v766 = vunpack.c.l.b16 %v701
        %v767 = vunpack.c.h.b16 %v701
        %v768 = vunpack.c.l.b16 %v702
        %v769 = vunpack.c.l.b16 %v703
        %v770 = vunpack.c.h.b16 %v703
        %v771 = vunpack.c.l.b16 %v704
        %v772 = vunpack.c.l.b16 %v705
        %v773 = vunpack.c.h.b16 %v705
        %v774 = vunpack.c.l.b16 %v706
        %v775 = vunpack.c.l.b16 %v707
        %v776 = vunpack.c.h.b16 %v707
        %v777 = vunpack.c.l.b16 %v708
        %v778 = vunpack.c.l.b16 %v709
        %v779 = vunpack.c.h.b16 %v709
        %v780 = vunpack.c.l.b16 %v710
        %v781 = vunpack.c.l.b16 %v711
        %v782 = vunpack.c.h.b16 %v711
        %v783 = vunpack.c.l.b16 %v712
        %v784 = vunpack.c.l.b16 %v713
        %v785 = vunpack.c.h.b16 %v713
        %v786 = vunpack.c.l.b16 %v714
        %v787 = vunpack.c.l.b16 %v715
        %v788 = vunpack.c.h.b16 %v715
        %v789 = vunpack.c.l.b16 %v716
        %v790 = vunpack.c.l.b16 %v717
        %v791 = vunpack.c.h.b16 %v717
        %v792 = vunpack.c.l.b16 %v718
        %v793 = vunpack.c.l.b16 %v719
        %v794 = vunpack.c.h.b16 %v719
        %v795 = vunpack.c.l.b16 %v720
        %v796 = vunpack.c.l.b16 %v721
        %v797 = vunpack.c.h.b16 %v721
        %v798 = vunpack.c.l.b16 %v722
        %v799 = vunpack.c.l.b16 %v723
        %v800 = vunpack.c.h.b16 %v723
        %v801 = vunpack.c.l.b16 %v724
        %v802 = vunpack.c.l.b16 %v725
        %v803 = vunpack.c.h.b16 %v725
        %v804 = vunpack.c.l.b16 %v726
        %v805 = vunpack.c.l.b16 %v727
        %v806 = vunpack.c.h.b16 %v727
        %v807 = vunpack.c.l.b16 %v728
        %v808 = vunpack.c.l.b16 %v729
        %v809 = vunpack.c.h.b16 %v729
        %v810 = vunpack.c.l.b16 %v730
        %v811 = vpack.c.b16 %v766, %v763
        %v812 = vpack.c.b16 %v767, %v764
        %v813 = vpack.c.b16 %v768, %v765
        %v814 = vpack.c.b16 %v772, %v769
        %v815 = vpack.c.b16 %v773, %v770
        %v816 = vpack.c.b16 %v774, %v771
        %v817 = vpack.c.b16 %v778, %v775
        %v818 = vpack.c.b16 %v779, %v776
        %v819 = vpack.c.b16 %v780, %v777
        %v820 = vpack.c.b16 %v784, %v781
        %v821 = vpack.c.b16 %v785, %v782
        %v822 = vpack.c.b16 %v786, %v783
        %v823 = vpack.c.b16 %v790, %v787
        %v824 = vpack.c.b16 %v791, %v788
        %v825 = vpack.c.b16 %v792, %v789
        %v826 = vpack.c.b16 %v796, %v793
        %v827 = vpack.c.b16 %v797, %v794
        %v828 = vpack.c.b16 %v798, %v795
        %v829 = vpack.c.b16 %v802, %v799
        %v830 = vpack.c.b16 %v803, %v800
        %v831 = vpack.c.b16 %v804, %v801
        %v832 = vpack.c.b16 %v808, %v805
        %v833 = vpack.c.b16 %v809, %v806
        %v834 = vpack.c.b16 %v810, %v807
        %859 = vmatpush.bf16.msra.mxu0 %v832
        %860 = vmatpush.bf16.msra.mxu0 %v829
        %861 = vmatpush.bf16.msra.mxu0 %v826
        %862 = vmatpush.bf16.msra.mxu0 %v823
        %863 = vmatpush.bf16.msra.mxu0 %v820
        %864 = vmatpush.bf16.msra.mxu0 %v817
        %865 = vmatpush.bf16.msra.mxu0 %v814
        %866 = vmatpush.bf16.msra.mxu0 %v811
        %867 = vmatmul.bf16.gmra.mxu0 %v698
        %v868 = vpop.f32.mrf.mxu0
        %v869 = vadd.f32 0.0, %v868
        %v870 = vpop.f32.mrf.mxu0
        %v871 = vadd.f32 0.0, %v870
        %872 = vdwg.mxu0
        %873 = vmatpush.bf16.msra.mxu0 %v833
        %874 = vmatpush.bf16.msra.mxu0 %v830
        %875 = vmatpush.bf16.msra.mxu0 %v827
        %876 = vmatpush.bf16.msra.mxu0 %v824
        %877 = vmatpush.bf16.msra.mxu0 %v821
        %878 = vmatpush.bf16.msra.mxu0 %v818
        %879 = vmatpush.bf16.msra.mxu0 %v815
        %880 = vmatpush.bf16.msra.mxu0 %v812
        %881 = vmatmul.bf16.gmra.mxu0 %v698
        %v882 = vpop.f32.mrf.mxu0
        %v883 = vadd.f32 0.0, %v882
        %v884 = vpop.f32.mrf.mxu0
        %v885 = vadd.f32 0.0, %v884
        %886 = vdwg.mxu0
        %887 = vmatpush.bf16.msra.mxu0 %v834
        %888 = vmatpush.bf16.msra.mxu0 %v831
        %889 = vmatpush.bf16.msra.mxu0 %v828
        %890 = vmatpush.bf16.msra.mxu0 %v825
        %891 = vmatpush.bf16.msra.mxu0 %v822
        %892 = vmatpush.bf16.msra.mxu0 %v819
        %893 = vmatpush.bf16.msra.mxu0 %v816
        %894 = vmatpush.bf16.msra.mxu0 %v813
        %895 = vmatmul.bf16.gmra.mxu0 %v698
        %v896 = vpop.f32.mrf.mxu0
        %v897 = vadd.f32 0.0, %v896
        %v898 = vpop.f32.mrf.mxu0
        %v899 = vadd.f32 0.0, %v898
        %900 = vdwg.mxu0
        %vm901 = vcmask 261120
        %v903 = vsel %vm901, %v869, 0
        %v906 = vsel %vm901, %v871, 0
        %v909 = vsel %vm901, %v883, 0
        %v912 = vsel %vm901, %v885, 0
        %914 = vmatpush.xpose.msra.mxu0 0.0
        %915 = vmatpush.xpose.msra.mxu0 0.0
        %916 = vmatpush.xpose.msra.mxu0 0.0
        %917 = vmatpush.xpose.msra.mxu0 0.0
        %918 = vmatpush.xpose.msra.mxu0 0.0
        %919 = vmatpush.xpose.msra.mxu0 0.0
        %920 = vmatpush.xpose.msra.mxu0 0.0
        %921 = vmatpush.xpose.msra.mxu0 0.0
        %922 = vmatpush.xpose.msra.mxu0 0.0
        %923 = vmatpush.xpose.msra.mxu0 0.0
        %924 = vmatpush.xpose.msra.mxu0 0.0
        %925 = vmatpush.xpose.msra.mxu0 0.0
        %926 = vmatpush.xpose.msra.mxu0 0.0
        %927 = vmatpush.xpose.msra.mxu0 0.0
        %928 = vmatpush.xpose.msra.mxu0 %v912
        %929 = vmatpush.xpose.msra.mxu0 %v909
        %930 = vmatmul.f32.gmra.mxu0 %v903
        %v931 = vpop.f32.mrf.mxu0
        %v932 = vadd.f32 0.0, %v931
        %933 = vmatmul.f32.gmra.mxu0 %v906
        %v934 = vpop.f32.mrf.mxu0
        %v935 = vadd.f32 0.0, %v934
        %936 = vdwg.mxu0
        %v937 = vmul.f32 %v932, 0.17677669
        %v938 = vmul.f32 %v935, 0.17677669
        %v939 = vmin.f32 %v937, %v607
        %v940 = vmin.f32 %v938, %v608
        %vm941 = vcmask 130048
        %v942 = vsel %vm941, %v939, -inf
        %943 = vmax.xlane.f32.xlu0 %v942
        %v944 = vpop.xlane.xlu0 %943
        %v945 = vsel %vm941, %v940, -inf
        %946 = vmax.xlane.f32.xlu0 %v945
        %v947 = vpop.xlane.xlu0 %946
        %v948 = vsub.f32 %v939, %v944
        %v949 = vsub.f32 %v940, %v947
        %v950 = vmul.f32 %v948, 1.442695
        %v951 = vpow.pop %v950
        %v952 = vmul.f32 %v949, 1.442695
        %v953 = vpow.pop %v952
        %v954 = vsel %vm941, %v951, 0.0
        %955 = vadd.xlane.f32.xlu0 %v954
        %v956 = vpop.xlane.xlu0 %955
        %v957 = vsel %vm941, %v953, 0.0
        %958 = vadd.xlane.f32.xlu0 %v957
        %v959 = vpop.xlane.xlu0 %958
        %v960 = vrcp.pop %v956
        %v961 = vrcp.pop %v959
        %v962 = vmul.f32 %v951, %v960
        %v963 = vmul.f32 %v953, %v961
        %v964 = vpack.c.bf16 %v963, %v962
        %v965 = vpack.c.bf16 %v899, %v897
        %v967 = vsel %vm941, %v964, 0
        %969 = vmatpush.bf16.msra.mxu0 0
        %970 = vmatpush.bf16.msra.mxu0 0
        %971 = vmatpush.bf16.msra.mxu0 0
        %972 = vmatpush.bf16.msra.mxu0 0
        %973 = vmatpush.bf16.msra.mxu0 0
        %974 = vmatpush.bf16.msra.mxu0 0
        %975 = vmatpush.bf16.msra.mxu0 0
        %976 = vmatpush.bf16.msra.mxu0 %v965
        %977 = vmatmul.bf16.gmra.mxu0 %v967
        %v978 = vpop.f32.mrf.mxu0
        %v979 = vadd.f32 0.0, %v978
        %v980 = vpop.f32.mrf.mxu0
        %v981 = vadd.f32 0.0, %v980
        %982 = vdwg.mxu0
        %v983 = vld [vmem:[#allocation5] sm:$0xf]
        %v984 = vld [vmem:[#allocation5 + $0x4] sm:$0xf]
        %v985 = vld [vmem:[#allocation5 + $0x8] sm:$0xf]
        %v986 = vld [vmem:[#allocation5 + $0xc] sm:$0xf]
        %v987 = vpack.c.bf16 %v981, %v979
        %988 = vrot.lane.b32.xlu0 %v869, 96
        %v989 = vpop.permute.xlu0 %988
        %990 = vrot.lane.b32.xlu0 %v871, 96
        %v991 = vpop.permute.xlu0 %990
        %992 = vrot.lane.b32.xlu0 %v883, 96
        %v993 = vpop.permute.xlu0 %992
        %994 = vrot.lane.b32.xlu0 %v885, 96
        %v995 = vpop.permute.xlu0 %994
        %v996 = vsel %vm901, %v989, 0
        %v998 = vsel %vm901, %v991, 0
        %v1000 = vsel %vm901, %v993, 0
        %v1002 = vsel %vm901, %v995, 0
        %1004 = vmatpush.xpose.msra.mxu0 0.0
        %1005 = vmatpush.xpose.msra.mxu0 0.0
        %1006 = vmatpush.xpose.msra.mxu0 0.0
        %1007 = vmatpush.xpose.msra.mxu0 0.0
        %1008 = vmatpush.xpose.msra.mxu0 0.0
        %1009 = vmatpush.xpose.msra.mxu0 0.0
        %1010 = vmatpush.xpose.msra.mxu0 0.0
        %1011 = vmatpush.xpose.msra.mxu0 0.0
        %1012 = vmatpush.xpose.msra.mxu0 0.0
        %1013 = vmatpush.xpose.msra.mxu0 0.0
        %1014 = vmatpush.xpose.msra.mxu0 0.0
        %1015 = vmatpush.xpose.msra.mxu0 0.0
        %1016 = vmatpush.xpose.msra.mxu0 0.0
        %1017 = vmatpush.xpose.msra.mxu0 0.0
        %1018 = vmatpush.xpose.msra.mxu0 %v1002
        %1019 = vmatpush.xpose.msra.mxu0 %v1000
        %1020 = vmatmul.f32.gmra.mxu0 %v996
        %v1021 = vpop.f32.mrf.mxu0
        %v1022 = vadd.f32 0.0, %v1021
        %1023 = vmatmul.f32.gmra.mxu0 %v998
        %v1024 = vpop.f32.mrf.mxu0
        %v1025 = vadd.f32 0.0, %v1024
        %1026 = vdwg.mxu0
        %v1027 = vmul.f32 %v1022, 0.17677669
        %v1028 = vmul.f32 %v1025, 0.17677669
        %v1029 = vmin.f32 %v1027, %v607
        %v1030 = vmin.f32 %v1028, %v608
        %v1031 = vsel %vm941, %v1029, -inf
        %1032 = vmax.xlane.f32.xlu0 %v1031
        %v1033 = vpop.xlane.xlu0 %1032
        %v1034 = vsel %vm941, %v1030, -inf
        %1035 = vmax.xlane.f32.xlu0 %v1034
        %v1036 = vpop.xlane.xlu0 %1035
        %v1037 = vsub.f32 %v1029, %v1033
        %v1038 = vsub.f32 %v1030, %v1036
        %v1039 = vmul.f32 %v1037, 1.442695
        %v1040 = vpow.pop %v1039
        %v1041 = vmul.f32 %v1038, 1.442695
        %v1042 = vpow.pop %v1041
        %v1043 = vsel %vm941, %v1040, 0.0
        %1044 = vadd.xlane.f32.xlu0 %v1043
        %v1045 = vpop.xlane.xlu0 %1044
        %v1046 = vsel %vm941, %v1042, 0.0
        %1047 = vadd.xlane.f32.xlu0 %v1046
        %v1048 = vpop.xlane.xlu0 %1047
        %v1049 = vrcp.pop %v1045
        %v1050 = vrcp.pop %v1048
        %v1051 = vmul.f32 %v1040, %v1049
        %v1052 = vmul.f32 %v1042, %v1050
        %v1053 = vpack.c.bf16 %v1052, %v1051
        %1055 = vrot.lane.b32.xlu0 %v965, 96
        %v1056 = vpop.permute.xlu0 %1055
        %v1059 = vsel %vm941, %v1053, 0
        %1061 = vmatpush.bf16.msra.mxu0 0
        %1062 = vmatpush.bf16.msra.mxu0 0
        %1063 = vmatpush.bf16.msra.mxu0 0
        %1064 = vmatpush.bf16.msra.mxu0 0
        %1065 = vmatpush.bf16.msra.mxu0 0
        %1066 = vmatpush.bf16.msra.mxu0 0
        %1067 = vmatpush.bf16.msra.mxu0 0
        %1068 = vmatpush.bf16.msra.mxu0 %v1056
        %1069 = vmatmul.bf16.gmra.mxu0 %v1059
        %v1070 = vpop.f32.mrf.mxu0
        %v1071 = vadd.f32 0.0, %v1070
        %v1072 = vpop.f32.mrf.mxu0
        %v1073 = vadd.f32 0.0, %v1072
        %1074 = vdwg.mxu0
        %v1075 = vld [vmem:[#allocation5 + $0x10] sm:$0xf]
        %v1076 = vld [vmem:[#allocation5 + $0x14] sm:$0xf]
        %v1077 = vld [vmem:[#allocation5 + $0x18] sm:$0xf]
        %v1078 = vld [vmem:[#allocation5 + $0x1c] sm:$0xf]
        %v1079 = vpack.c.bf16 %v1073, %v1071
        %v1084 = vunpack.c.l.b16 %v1075
        %v1085 = vunpack.c.l.b16 %v1076
        %v1086 = vunpack.c.l.b16 %v1077
        %v1087 = vunpack.c.l.b16 %v1078
        %v1088 = vpack.c.b16 %v1085, %v1084
        %v1089 = vpack.c.b16 %v1087, %v1086
        %v1093 = vsel %vm901, %v1079, 0
        %1095 = vmatpush.bf16.msra.mxu0 0
        %1096 = vmatpush.bf16.msra.mxu0 0
        %1097 = vmatpush.bf16.msra.mxu0 0
        %1098 = vmatpush.bf16.msra.mxu0 0
        %1099 = vmatpush.bf16.msra.mxu0 0
        %1100 = vmatpush.bf16.msra.mxu0 0
        %1101 = vmatpush.bf16.msra.mxu0 %v1089
        %1102 = vmatpush.bf16.msra.mxu0 %v1088
        %1103 = vmatmul.bf16.gmra.mxu0 %v1093
        %v1104 = vpop.f32.mrf.mxu0
        %v1105 = vadd.f32 0.0, %v1104
        %v1106 = vpop.f32.mrf.mxu0
        %v1107 = vadd.f32 0.0, %v1106
        %1108 = vdwg.mxu0
        %v1113 = vunpack.c.l.b16 %v983
        %v1114 = vunpack.c.l.b16 %v984
        %v1115 = vunpack.c.l.b16 %v985
        %v1116 = vunpack.c.l.b16 %v986
        %v1117 = vpack.c.b16 %v1114, %v1113
        %v1118 = vpack.c.b16 %v1116, %v1115
        %v1122 = vsel %vm901, %v987, 0
        %1124 = vmatpush.bf16.msra.mxu0 0
        %1125 = vmatpush.bf16.msra.mxu0 0
        %1126 = vmatpush.bf16.msra.mxu0 0
        %1127 = vmatpush.bf16.msra.mxu0 0
        %1128 = vmatpush.bf16.msra.mxu0 0
        %1129 = vmatpush.bf16.msra.mxu0 0
        %1130 = vmatpush.bf16.msra.mxu0 %v1118
        %1131 = vmatpush.bf16.msra.mxu0 %v1117
        %1132 = vmatmul.bf16.gmra.mxu0 %v1122
        %v1133 = vpop.f32.mrf.mxu0
        %v1134 = vadd.f32 %v1105, %v1133
        %v1135 = vpop.f32.mrf.mxu0
        %v1136 = vadd.f32 %v1107, %v1135
        %1137 = vdwg.mxu0
        %1138 = vrot.lane.b32.xlu0 %v869, 64
        %v1139 = vpop.permute.xlu0 %1138
        %1140 = vrot.lane.b32.xlu0 %v871, 64
        %v1141 = vpop.permute.xlu0 %1140
        %1142 = vrot.lane.b32.xlu0 %v883, 64
        %v1143 = vpop.permute.xlu0 %1142
        %1144 = vrot.lane.b32.xlu0 %v885, 64
        %v1145 = vpop.permute.xlu0 %1144
        %v1146 = vsel %vm901, %v1139, 0
        %v1148 = vsel %vm901, %v1141, 0
        %v1150 = vsel %vm901, %v1143, 0
        %v1152 = vsel %vm901, %v1145, 0
        %1154 = vmatpush.xpose.msra.mxu0 0.0
        %1155 = vmatpush.xpose.msra.mxu0 0.0
        %1156 = vmatpush.xpose.msra.mxu0 0.0
        %1157 = vmatpush.xpose.msra.mxu0 0.0
        %1158 = vmatpush.xpose.msra.mxu0 0.0
        %1159 = vmatpush.xpose.msra.mxu0 0.0
        %1160 = vmatpush.xpose.msra.mxu0 0.0
        %1161 = vmatpush.xpose.msra.mxu0 0.0
        %1162 = vmatpush.xpose.msra.mxu0 0.0
        %1163 = vmatpush.xpose.msra.mxu0 0.0
        %1164 = vmatpush.xpose.msra.mxu0 0.0
        %1165 = vmatpush.xpose.msra.mxu0 0.0
        %1166 = vmatpush.xpose.msra.mxu0 0.0
        %1167 = vmatpush.xpose.msra.mxu0 0.0
        %1168 = vmatpush.xpose.msra.mxu0 %v1152
        %1169 = vmatpush.xpose.msra.mxu0 %v1150
        %1170 = vmatmul.f32.gmra.mxu0 %v1146
        %v1171 = vpop.f32.mrf.mxu0
        %v1172 = vadd.f32 0.0, %v1171
        %1173 = vmatmul.f32.gmra.mxu0 %v1148
        %v1174 = vpop.f32.mrf.mxu0
        %v1175 = vadd.f32 0.0, %v1174
        %1176 = vdwg.mxu0
        %v1177 = vmul.f32 %v1172, 0.17677669
        %v1178 = vmul.f32 %v1175, 0.17677669
        %v1179 = vmin.f32 %v1177, %v607
        %v1180 = vmin.f32 %v1178, %v608
        %v1181 = vsel %vm941, %v1179, -inf
        %1182 = vmax.xlane.f32.xlu0 %v1181
        %v1183 = vpop.xlane.xlu0 %1182
        %v1184 = vsel %vm941, %v1180, -inf
        %1185 = vmax.xlane.f32.xlu0 %v1184
        %v1186 = vpop.xlane.xlu0 %1185
        %v1187 = vsub.f32 %v1179, %v1183
        %v1188 = vsub.f32 %v1180, %v1186
        %v1189 = vmul.f32 %v1187, 1.442695
        %v1190 = vpow.pop %v1189
        %v1191 = vmul.f32 %v1188, 1.442695
        %v1192 = vpow.pop %v1191
        %v1193 = vsel %vm941, %v1190, 0.0
        %1194 = vadd.xlane.f32.xlu0 %v1193
        %v1195 = vpop.xlane.xlu0 %1194
        %v1196 = vsel %vm941, %v1192, 0.0
        %1197 = vadd.xlane.f32.xlu0 %v1196
        %v1198 = vpop.xlane.xlu0 %1197
        %v1199 = vrcp.pop %v1195
        %v1200 = vrcp.pop %v1198
        %v1201 = vmul.f32 %v1190, %v1199
        %v1202 = vmul.f32 %v1192, %v1200
        %v1203 = vpack.c.bf16 %v1202, %v1201
        %1204 = vrot.lane.b32.xlu0 %v965, 64
        %v1205 = vpop.permute.xlu0 %1204
        %v1208 = vsel %vm941, %v1203, 0
        %1210 = vmatpush.bf16.msra.mxu0 0
        %1211 = vmatpush.bf16.msra.mxu0 0
        %1212 = vmatpush.bf16.msra.mxu0 0
        %1213 = vmatpush.bf16.msra.mxu0 0
        %1214 = vmatpush.bf16.msra.mxu0 0
        %1215 = vmatpush.bf16.msra.mxu0 0
        %1216 = vmatpush.bf16.msra.mxu0 0
        %1217 = vmatpush.bf16.msra.mxu0 %v1205
        %1218 = vmatmul.bf16.gmra.mxu0 %v1208
        %v1219 = vpop.f32.mrf.mxu0
        %v1220 = vadd.f32 0.0, %v1219
        %v1221 = vpop.f32.mrf.mxu0
        %v1222 = vadd.f32 0.0, %v1221
        %1223 = vdwg.mxu0
        %v1224 = vld [vmem:[#allocation5 + $0x20] sm:$0xf]
        %v1225 = vld [vmem:[#allocation5 + $0x24] sm:$0xf]
        %v1226 = vld [vmem:[#allocation5 + $0x28] sm:$0xf]
        %v1227 = vld [vmem:[#allocation5 + $0x2c] sm:$0xf]
        %v1228 = vpack.c.bf16 %v1222, %v1220
        %v1233 = vunpack.c.l.b16 %v1224
        %v1234 = vunpack.c.l.b16 %v1225
        %v1235 = vunpack.c.l.b16 %v1226
        %v1236 = vunpack.c.l.b16 %v1227
        %v1237 = vpack.c.b16 %v1234, %v1233
        %v1238 = vpack.c.b16 %v1236, %v1235
        %v1242 = vsel %vm901, %v1228, 0
        %1244 = vmatpush.bf16.msra.mxu0 0
        %1245 = vmatpush.bf16.msra.mxu0 0
        %1246 = vmatpush.bf16.msra.mxu0 0
        %1247 = vmatpush.bf16.msra.mxu0 0
        %1248 = vmatpush.bf16.msra.mxu0 0
        %1249 = vmatpush.bf16.msra.mxu0 0
        %1250 = vmatpush.bf16.msra.mxu0 %v1238
        %1251 = vmatpush.bf16.msra.mxu0 %v1237
        %1252 = vmatmul.bf16.gmra.mxu0 %v1242
        %v1253 = vpop.f32.mrf.mxu0
        %v1254 = vadd.f32 0.0, %v1253
        %v1255 = vpop.f32.mrf.mxu0
        %v1256 = vadd.f32 0.0, %v1255
        %1257 = vdwg.mxu0
        %v1258 = vadd.f32 %v1134, %v1254
        %v1259 = vadd.f32 %v1136, %v1256
        %1260 = vrot.lane.b32.xlu0 %v869, 32
        %v1261 = vpop.permute.xlu0 %1260
        %1262 = vrot.lane.b32.xlu0 %v871, 32
        %v1263 = vpop.permute.xlu0 %1262
        %1264 = vrot.lane.b32.xlu0 %v883, 32
        %v1265 = vpop.permute.xlu0 %1264
        %1266 = vrot.lane.b32.xlu0 %v885, 32
        %v1267 = vpop.permute.xlu0 %1266
        %v1268 = vsel %vm901, %v1261, 0
        %v1270 = vsel %vm901, %v1263, 0
        %v1272 = vsel %vm901, %v1265, 0
        %v1274 = vsel %vm901, %v1267, 0
        %1276 = vmatpush.xpose.msra.mxu0 0.0
        %1277 = vmatpush.xpose.msra.mxu0 0.0
        %1278 = vmatpush.xpose.msra.mxu0 0.0
        %1279 = vmatpush.xpose.msra.mxu0 0.0
        %1280 = vmatpush.xpose.msra.mxu0 0.0
        %1281 = vmatpush.xpose.msra.mxu0 0.0
        %1282 = vmatpush.xpose.msra.mxu0 0.0
        %1283 = vmatpush.xpose.msra.mxu0 0.0
        %1284 = vmatpush.xpose.msra.mxu0 0.0
        %1285 = vmatpush.xpose.msra.mxu0 0.0
        %1286 = vmatpush.xpose.msra.mxu0 0.0
        %1287 = vmatpush.xpose.msra.mxu0 0.0
        %1288 = vmatpush.xpose.msra.mxu0 0.0
        %1289 = vmatpush.xpose.msra.mxu0 0.0
        %1290 = vmatpush.xpose.msra.mxu0 %v1274
        %1291 = vmatpush.xpose.msra.mxu0 %v1272
        %1292 = vmatmul.f32.gmra.mxu0 %v1268
        %v1293 = vpop.f32.mrf.mxu0
        %v1294 = vadd.f32 0.0, %v1293
        %1295 = vmatmul.f32.gmra.mxu0 %v1270
        %v1296 = vpop.f32.mrf.mxu0
        %v1297 = vadd.f32 0.0, %v1296
        %1298 = vdwg.mxu0
        %v1299 = vmul.f32 %v1294, 0.17677669
        %v1300 = vmul.f32 %v1297, 0.17677669
        %v1301 = vmin.f32 %v1299, %v607
        %v1302 = vmin.f32 %v1300, %v608
        %v1303 = vsel %vm941, %v1301, -inf
        %1304 = vmax.xlane.f32.xlu0 %v1303
        %v1305 = vpop.xlane.xlu0 %1304
        %v1306 = vsel %vm941, %v1302, -inf
        %1307 = vmax.xlane.f32.xlu0 %v1306
        %v1308 = vpop.xlane.xlu0 %1307
        %v1309 = vsub.f32 %v1301, %v1305
        %v1310 = vsub.f32 %v1302, %v1308
        %v1311 = vmul.f32 %v1309, 1.442695
        %v1312 = vpow.pop %v1311
        %v1313 = vmul.f32 %v1310, 1.442695
        %v1314 = vpow.pop %v1313
        %v1315 = vsel %vm941, %v1312, 0.0
        %1316 = vadd.xlane.f32.xlu0 %v1315
        %v1317 = vpop.xlane.xlu0 %1316
        %v1318 = vsel %vm941, %v1314, 0.0
        %1319 = vadd.xlane.f32.xlu0 %v1318
        %v1320 = vpop.xlane.xlu0 %1319
        %v1321 = vrcp.pop %v1317
        %v1322 = vrcp.pop %v1320
        %v1323 = vmul.f32 %v1312, %v1321
        %v1324 = vmul.f32 %v1314, %v1322
        %v1325 = vpack.c.bf16 %v1324, %v1323
        %1326 = vrot.lane.b32.xlu0 %v965, 32
        %v1327 = vpop.permute.xlu0 %1326
        %v1330 = vsel %vm941, %v1325, 0
        %1332 = vmatpush.bf16.msra.mxu0 0
        %1333 = vmatpush.bf16.msra.mxu0 0
        %1334 = vmatpush.bf16.msra.mxu0 0
        %1335 = vmatpush.bf16.msra.mxu0 0
        %1336 = vmatpush.bf16.msra.mxu0 0
        %1337 = vmatpush.bf16.msra.mxu0 0
        %1338 = vmatpush.bf16.msra.mxu0 0
        %1339 = vmatpush.bf16.msra.mxu0 %v1327
        %1340 = vmatmul.bf16.gmra.mxu0 %v1330
        %v1341 = vpop.f32.mrf.mxu0
        %v1342 = vadd.f32 0.0, %v1341
        %v1343 = vpop.f32.mrf.mxu0
        %v1344 = vadd.f32 0.0, %v1343
        %1345 = vdwg.mxu0
        %v1346 = vld [vmem:[#allocation5 + $0x30] sm:$0xf]
        %v1347 = vld [vmem:[#allocation5 + $0x34] sm:$0xf]
        %v1348 = vld [vmem:[#allocation5 + $0x38] sm:$0xf]
        %v1349 = vld [vmem:[#allocation5 + $0x3c] sm:$0xf]
        %v1350 = vpack.c.bf16 %v1344, %v1342
        %v1355 = vunpack.c.l.b16 %v1346
        %v1356 = vunpack.c.l.b16 %v1347
        %v1357 = vunpack.c.l.b16 %v1348
        %v1358 = vunpack.c.l.b16 %v1349
        %v1359 = vpack.c.b16 %v1356, %v1355
        %v1360 = vpack.c.b16 %v1358, %v1357
        %v1364 = vsel %vm901, %v1350, 0
        %1366 = vmatpush.bf16.msra.mxu0 0
        %1367 = vmatpush.bf16.msra.mxu0 0
        %1368 = vmatpush.bf16.msra.mxu0 0
        %1369 = vmatpush.bf16.msra.mxu0 0
        %1370 = vmatpush.bf16.msra.mxu0 0
        %1371 = vmatpush.bf16.msra.mxu0 0
        %1372 = vmatpush.bf16.msra.mxu0 %v1360
        %1373 = vmatpush.bf16.msra.mxu0 %v1359
        %1374 = vmatmul.bf16.gmra.mxu0 %v1364
        %v1375 = vpop.f32.mrf.mxu0
        %v1376 = vadd.f32 0.0, %v1375
        %v1377 = vpop.f32.mrf.mxu0
        %v1378 = vadd.f32 0.0, %v1377
        %1379 = vdwg.mxu0
        %v1380 = vadd.f32 %v1258, %v1376
        %v1381 = vadd.f32 %v1259, %v1378
        %v1382 = vadd.f32 %v604, %v1380
        %v1383 = vadd.f32 %v605, %v1381
        %1384 = vadd.xlane.f32.xlu0 %v1382
        %v1385 = vpop.xlane.xlu0 %1384
        %1386 = vadd.xlane.f32.xlu0 %v1383
        %v1387 = vpop.xlane.xlu0 %1386
        %v1388 = vmul.f32 %v1385, %v621
        %v1389 = vmul.f32 %v1387, %v621
        %v1390 = vsub.f32 %v1382, %v1388
        %v1391 = vsub.f32 %v1383, %v1389
        %v1392 = vmul.f32 %v1390, %v1390
        %v1393 = vmul.f32 %v1391, %v1391
        %1394 = vadd.xlane.f32.xlu0 %v1392
        %v1395 = vpop.xlane.xlu0 %1394
        %1396 = vadd.xlane.f32.xlu0 %v1393
        %v1397 = vpop.xlane.xlu0 %1396
        %v1398 = vmul.f32 %v1395, 0.007874016
        %v1399 = vmul.f32 %v1397, 0.007874016
        %v1400 = vrsqrt.pop %v1398
        %v1401 = vmul.f32 %v1400, %v1398
        %v1402 = vmul.f32 %v1401, %v1400
        %v1403 = vmul.f32 0.5, %v1402
        %v1404 = vsub.f32 1.5, %v1403
        %v1405 = vmul.f32 %v1400, %v1404
        %v1406 = vmul.f32 %v1398, %v1405
        %vm1407 = vcmp.eq.f32.partialorder %v1398, inf
        %v1408 = vsel %vm1407, %v1398, %v1406
        %vm1409 = vcmp.eq.f32.partialorder %v1398, 0.0
        %v1410 = vand.u32 %v1398, 2147483648
        %v1411 = vsel %vm1409, %v1410, %v1408
        %v1412 = vrsqrt.pop %v1399
        %v1413 = vmul.f32 %v1412, %v1399
        %v1414 = vmul.f32 %v1413, %v1412
        %v1415 = vmul.f32 0.5, %v1414
        %v1416 = vsub.f32 1.5, %v1415
        %v1417 = vmul.f32 %v1412, %v1416
        %v1418 = vmul.f32 %v1399, %v1417
        %vm1419 = vcmp.eq.f32.partialorder %v1399, inf
        %v1420 = vsel %vm1419, %v1399, %v1418
        %vm1421 = vcmp.eq.f32.partialorder %v1399, 0.0
        %v1422 = vand.u32 %v1399, 2147483648
        %v1423 = vsel %vm1421, %v1422, %v1420
        %v1424 = vadd.f32 %v1411, 1e-06
        %v1425 = vadd.f32 %v1423, 1e-06
        %v1426 = vrcp.pop %v1424
        %v1427 = vmul.f32 %v1424, %v1426
        %v1428 = vsub.f32 1.0, %v1427
        %v1429 = vmul.f32 %v1426, %v1428
        %v1430 = vadd.f32 %v1426, %v1429
        %vm1431 = vweird.f32 %v1424
        %vm1432 = vweird.f32 %v1426
        %vm1433 = vmor %vm1431, %vm1432
        %v1434 = vsel %vm1433, %v1426, %v1430
        %v1435 = vand.u32 2147483647, %v1424
        %vm1436 = vcmp.eq.f32.partialorder %v1435, 8.507059e+37
        %v1437 = vand.u32 %v1424, 2147483648
        %v1438 = vor.u32 1.1754944e-38, %v1437
        %v1439 = vsel %vm1436, %v1438, %v1434
        %v1440 = vmul.f32 1.0, %v1439
        %v1441 = vrcp.pop %v1425
        %v1442 = vmul.f32 %v1425, %v1441
        %v1443 = vsub.f32 1.0, %v1442
        %v1444 = vmul.f32 %v1441, %v1443
        %v1445 = vadd.f32 %v1441, %v1444
        %vm1446 = vweird.f32 %v1425
        %vm1447 = vweird.f32 %v1441
        %vm1448 = vmor %vm1446, %vm1447
        %v1449 = vsel %vm1448, %v1441, %v1445
        %v1450 = vand.u32 2147483647, %v1425
        %vm1451 = vcmp.eq.f32.partialorder %v1450, 8.507059e+37
        %v1452 = vand.u32 %v1425, 2147483648
        %v1453 = vor.u32 1.1754944e-38, %v1452
        %v1454 = vsel %vm1451, %v1453, %v1449
        %v1455 = vmul.f32 1.0, %v1454
        %v1456 = vmul.f32 %v1390, %v1440
        %v1457 = vmul.f32 %v1391, %v1455
        %v1458 = vperm.slane %v606, 2
        %v1459 = vmul.f32 %v1458, %v1456
        %v1460 = vmul.f32 %v1458, %v1457
        %v1461 = vperm.slane %v606, 3
        %v1462 = vadd.f32 %v1459, %v1461
        %v1463 = vadd.f32 %v1460, %v1461
        %v1464 = vpack.c.bf16 %v1463, %v1462
        %v1465 = vld [vmem:[#allocation7] sm:$0xf]
        %v1466 = vld [vmem:[#allocation7 + $0x4] sm:$0xf]
        %v1467 = vld [vmem:[#allocation7 + $0x8] sm:$0xf]
        %v1468 = vld [vmem:[#allocation7 + $0xc] sm:$0xf]
        %v1469 = vld [vmem:[#allocation7 + $0x10] sm:$0xf]
        %v1470 = vld [vmem:[#allocation7 + $0x14] sm:$0xf]
        %v1471 = vld [vmem:[#allocation7 + $0x18] sm:$0xf]
        %v1472 = vld [vmem:[#allocation7 + $0x1c] sm:$0xf]
        %v1473 = vld [vmem:[#allocation7 + $0x20] sm:$0xf]
        %v1474 = vld [vmem:[#allocation7 + $0x24] sm:$0xf]
        %v1475 = vld [vmem:[#allocation7 + $0x28] sm:$0xf]
        %v1476 = vld [vmem:[#allocation7 + $0x2c] sm:$0xf]
        %v1477 = vld [vmem:[#allocation7 + $0x30] sm:$0xf]
        %v1478 = vld [vmem:[#allocation7 + $0x34] sm:$0xf]
        %v1479 = vld [vmem:[#allocation7 + $0x38] sm:$0xf]
        %v1480 = vld [vmem:[#allocation7 + $0x3c] sm:$0xf]
        %v1497 = vunpack.c.l.b16 %v1465
        %v1498 = vunpack.c.l.b16 %v1466
        %v1499 = vunpack.c.l.b16 %v1467
        %v1500 = vunpack.c.l.b16 %v1468
        %v1501 = vunpack.c.l.b16 %v1469
        %v1502 = vunpack.c.l.b16 %v1470
        %v1503 = vunpack.c.l.b16 %v1471
        %v1504 = vunpack.c.l.b16 %v1472
        %v1505 = vunpack.c.l.b16 %v1473
        %v1506 = vunpack.c.l.b16 %v1474
        %v1507 = vunpack.c.l.b16 %v1475
        %v1508 = vunpack.c.l.b16 %v1476
        %v1509 = vunpack.c.l.b16 %v1477
        %v1510 = vunpack.c.l.b16 %v1478
        %v1511 = vunpack.c.l.b16 %v1479
        %v1512 = vunpack.c.l.b16 %v1480
        %v1513 = vpack.c.b16 %v1498, %v1497
        %v1514 = vpack.c.b16 %v1500, %v1499
        %v1515 = vpack.c.b16 %v1502, %v1501
        %v1516 = vpack.c.b16 %v1504, %v1503
        %v1517 = vpack.c.b16 %v1506, %v1505
        %v1518 = vpack.c.b16 %v1508, %v1507
        %v1519 = vpack.c.b16 %v1510, %v1509
        %v1520 = vpack.c.b16 %v1512, %v1511
        %1529 = vmatpush.bf16.msra.mxu0 %v1520
        %1530 = vmatpush.bf16.msra.mxu0 %v1519
        %1531 = vmatpush.bf16.msra.mxu0 %v1518
        %1532 = vmatpush.bf16.msra.mxu0 %v1517
        %1533 = vmatpush.bf16.msra.mxu0 %v1516
        %1534 = vmatpush.bf16.msra.mxu0 %v1515
        %1535 = vmatpush.bf16.msra.mxu0 %v1514
        %1536 = vmatpush.bf16.msra.mxu0 %v1513
        %1537 = vmatmul.bf16.gmra.mxu0 %v1464
        %v1538 = vpop.f32.mrf.mxu0
        %v1539 = vadd.f32 0.0, %v1538
        %v1540 = vpop.f32.mrf.mxu0
        %v1541 = vadd.f32 0.0, %v1540
        %1542 = vdwg.mxu0
        %v1543 = vld [vmem:[%s598] sm:$0xff]
        %v1544 = vld [vmem:[%s598 + $0x8] sm:$0xff]
        %v1545 = vpack.c.bf16 %v1544, %v1543
        %v1546 = vld [vmem:[%s8] sm:$0xff]
        %v1547 = vld [vmem:[%s8 + $0x8] sm:$0xff]
        %v1548 = vld [vmem:[%s8 + $0x10] sm:$0xff]
        %v1549 = vld [vmem:[%s8 + $0x18] sm:$0xff]
        %v1550 = vld [vmem:[%s8 + $0x20] sm:$0xff]
        %v1551 = vld [vmem:[%s8 + $0x28] sm:$0xff]
        %v1552 = vld [vmem:[%s8 + $0x30] sm:$0xff]
        %v1553 = vld [vmem:[%s8 + $0x38] sm:$0xff]
        %v1554 = vld [vmem:[%s8 + $0x40] sm:$0xff]
        %v1555 = vld [vmem:[%s8 + $0x48] sm:$0xff]
        %v1556 = vld [vmem:[%s8 + $0x50] sm:$0xff]
        %v1557 = vld [vmem:[%s8 + $0x58] sm:$0xff]
        %v1558 = vld [vmem:[%s8 + $0x60] sm:$0xff]
        %v1559 = vld [vmem:[%s8 + $0x68] sm:$0xff]
        %v1560 = vld [vmem:[%s8 + $0x70] sm:$0xff]
        %v1561 = vld [vmem:[%s8 + $0x78] sm:$0xff]
        %v1578 = vunpack.c.l.b16 %v1546
        %v1579 = vunpack.c.h.b16 %v1546
        %v1580 = vunpack.c.l.b16 %v1547
        %v1581 = vunpack.c.h.b16 %v1547
        %v1582 = vunpack.c.l.b16 %v1548
        %v1583 = vunpack.c.h.b16 %v1548
        %v1584 = vunpack.c.l.b16 %v1549
        %v1585 = vunpack.c.h.b16 %v1549
        %v1586 = vunpack.c.l.b16 %v1550
        %v1587 = vunpack.c.h.b16 %v1550
        %v1588 = vunpack.c.l.b16 %v1551
        %v1589 = vunpack.c.h.b16 %v1551
        %v1590 = vunpack.c.l.b16 %v1552
        %v1591 = vunpack.c.h.b16 %v1552
        %v1592 = vunpack.c.l.b16 %v1553
        %v1593 = vunpack.c.h.b16 %v1553
        %v1594 = vunpack.c.l.b16 %v1554
        %v1595 = vunpack.c.h.b16 %v1554
        %v1596 = vunpack.c.l.b16 %v1555
        %v1597 = vunpack.c.h.b16 %v1555
        %v1598 = vunpack.c.l.b16 %v1556
        %v1599 = vunpack.c.h.b16 %v1556
        %v1600 = vunpack.c.l.b16 %v1557
        %v1601 = vunpack.c.h.b16 %v1557
        %v1602 = vunpack.c.l.b16 %v1558
        %v1603 = vunpack.c.h.b16 %v1558
        %v1604 = vunpack.c.l.b16 %v1559
        %v1605 = vunpack.c.h.b16 %v1559
        %v1606 = vunpack.c.l.b16 %v1560
        %v1607 = vunpack.c.h.b16 %v1560
        %v1608 = vunpack.c.l.b16 %v1561
        %v1609 = vunpack.c.h.b16 %v1561
        %v1610 = vpack.c.b16 %v1580, %v1578
        %v1611 = vpack.c.b16 %v1581, %v1579
        %v1612 = vpack.c.b16 %v1584, %v1582
        %v1613 = vpack.c.b16 %v1585, %v1583
        %v1614 = vpack.c.b16 %v1588, %v1586
        %v1615 = vpack.c.b16 %v1589, %v1587
        %v1616 = vpack.c.b16 %v1592, %v1590
        %v1617 = vpack.c.b16 %v1593, %v1591
        %v1618 = vpack.c.b16 %v1596, %v1594
        %v1619 = vpack.c.b16 %v1597, %v1595
        %v1620 = vpack.c.b16 %v1600, %v1598
        %v1621 = vpack.c.b16 %v1601, %v1599
        %v1622 = vpack.c.b16 %v1604, %v1602
        %v1623 = vpack.c.b16 %v1605, %v1603
        %v1624 = vpack.c.b16 %v1608, %v1606
        %v1625 = vpack.c.b16 %v1609, %v1607
        %1642 = vmatpush.bf16.msra.mxu0 %v1624
        %1643 = vmatpush.bf16.msra.mxu0 %v1622
        %1644 = vmatpush.bf16.msra.mxu0 %v1620
        %1645 = vmatpush.bf16.msra.mxu0 %v1618
        %1646 = vmatpush.bf16.msra.mxu0 %v1616
        %1647 = vmatpush.bf16.msra.mxu0 %v1614
        %1648 = vmatpush.bf16.msra.mxu0 %v1612
        %1649 = vmatpush.bf16.msra.mxu0 %v1610
        %1650 = vmatmul.bf16.gmra.mxu0 %v1545
        %v1651 = vpop.f32.mrf.mxu0
        %v1652 = vadd.f32 0.0, %v1651
        %v1653 = vpop.f32.mrf.mxu0
        %v1654 = vadd.f32 0.0, %v1653
        %1655 = vdwg.mxu0
        %1656 = vmatpush.bf16.msra.mxu0 %v1625
        %1657 = vmatpush.bf16.msra.mxu0 %v1623
        %1658 = vmatpush.bf16.msra.mxu0 %v1621
        %1659 = vmatpush.bf16.msra.mxu0 %v1619
        %1660 = vmatpush.bf16.msra.mxu0 %v1617
        %1661 = vmatpush.bf16.msra.mxu0 %v1615
        %1662 = vmatpush.bf16.msra.mxu0 %v1613
        %1663 = vmatpush.bf16.msra.mxu0 %v1611
        %1664 = vmatmul.bf16.gmra.mxu0 %v1545
        %v1665 = vpop.f32.mrf.mxu0
        %v1666 = vadd.f32 0.0, %v1665
        %v1667 = vpop.f32.mrf.mxu0
        %v1668 = vadd.f32 0.0, %v1667
        %1669 = vdwg.mxu0
        %v1671 = vsel %vm901, %v1539, 0
        %v1674 = vsel %vm901, %v1541, 0
        %v1677 = vsel %vm901, %v1652, 0
        %v1680 = vsel %vm901, %v1654, 0
        %1682 = vmatpush.xpose.msra.mxu0 0.0
        %1683 = vmatpush.xpose.msra.mxu0 0.0
        %1684 = vmatpush.xpose.msra.mxu0 0.0
        %1685 = vmatpush.xpose.msra.mxu0 0.0
        %1686 = vmatpush.xpose.msra.mxu0 0.0
        %1687 = vmatpush.xpose.msra.mxu0 0.0
        %1688 = vmatpush.xpose.msra.mxu0 0.0
        %1689 = vmatpush.xpose.msra.mxu0 0.0
        %1690 = vmatpush.xpose.msra.mxu0 0.0
        %1691 = vmatpush.xpose.msra.mxu0 0.0
        %1692 = vmatpush.xpose.msra.mxu0 0.0
        %1693 = vmatpush.xpose.msra.mxu0 0.0
        %1694 = vmatpush.xpose.msra.mxu0 0.0
        %1695 = vmatpush.xpose.msra.mxu0 0.0
        %1696 = vmatpush.xpose.msra.mxu0 %v1680
        %1697 = vmatpush.xpose.msra.mxu0 %v1677
        %1698 = vmatmul.f32.gmra.mxu0 %v1671
        %v1699 = vpop.f32.mrf.mxu0
        %v1700 = vadd.f32 0.0, %v1699
        %1701 = vmatmul.f32.gmra.mxu0 %v1674
        %v1702 = vpop.f32.mrf.mxu0
        %v1703 = vadd.f32 0.0, %v1702
        %1704 = vdwg.mxu0
        %v1705 = vmul.f32 %v1700, 0.17677669
        %v1706 = vmul.f32 %v1703, 0.17677669
        %v1707 = vmin.f32 %v1705, %v609
        %v1708 = vmin.f32 %v1706, %v610
        %v1709 = vsel %vm941, %v1707, -inf
        %1710 = vmax.xlane.f32.xlu0 %v1709
        %v1711 = vpop.xlane.xlu0 %1710
        %v1712 = vsel %vm941, %v1708, -inf
        %1713 = vmax.xlane.f32.xlu0 %v1712
        %v1714 = vpop.xlane.xlu0 %1713
        %v1715 = vsub.f32 %v1707, %v1711
        %v1716 = vsub.f32 %v1708, %v1714
        %v1717 = vmul.f32 %v1715, 1.442695
        %v1718 = vpow.pop %v1717
        %v1719 = vmul.f32 %v1716, 1.442695
        %v1720 = vpow.pop %v1719
        %v1721 = vsel %vm941, %v1718, 0.0
        %1722 = vadd.xlane.f32.xlu0 %v1721
        %v1723 = vpop.xlane.xlu0 %1722
        %v1724 = vsel %vm941, %v1720, 0.0
        %1725 = vadd.xlane.f32.xlu0 %v1724
        %v1726 = vpop.xlane.xlu0 %1725
        %v1727 = vrcp.pop %v1723
        %v1728 = vrcp.pop %v1726
        %v1729 = vmul.f32 %v1718, %v1727
        %v1730 = vmul.f32 %v1720, %v1728
        %v1731 = vpack.c.bf16 %v1730, %v1729
        %v1732 = vpack.c.bf16 %v1668, %v1666
        %v1734 = vsel %vm941, %v1731, 0
        %1736 = vmatpush.bf16.msra.mxu0 0
        %1737 = vmatpush.bf16.msra.mxu0 0
        %1738 = vmatpush.bf16.msra.mxu0 0
        %1739 = vmatpush.bf16.msra.mxu0 0
        %1740 = vmatpush.bf16.msra.mxu0 0
        %1741 = vmatpush.bf16.msra.mxu0 0
        %1742 = vmatpush.bf16.msra.mxu0 0
        %1743 = vmatpush.bf16.msra.mxu0 %v1732
        %1744 = vmatmul.bf16.gmra.mxu0 %v1734
        %v1745 = vpop.f32.mrf.mxu0
        %v1746 = vadd.f32 0.0, %v1745
        %v1747 = vpop.f32.mrf.mxu0
        %v1748 = vadd.f32 0.0, %v1747
        %1749 = vdwg.mxu0
        %v1750 = vld [vmem:[#allocation8] sm:$0xf]
        %v1751 = vld [vmem:[#allocation8 + $0x4] sm:$0xf]
        %v1752 = vld [vmem:[#allocation8 + $0x8] sm:$0xf]
        %v1753 = vld [vmem:[#allocation8 + $0xc] sm:$0xf]
        %v1754 = vpack.c.bf16 %v1748, %v1746
        %1755 = vrot.lane.b32.xlu0 %v1539, 96
        %v1756 = vpop.permute.xlu0 %1755
        %1757 = vrot.lane.b32.xlu0 %v1541, 96
        %v1758 = vpop.permute.xlu0 %1757
        %1759 = vrot.lane.b32.xlu0 %v1652, 96
        %v1760 = vpop.permute.xlu0 %1759
        %1761 = vrot.lane.b32.xlu0 %v1654, 96
        %v1762 = vpop.permute.xlu0 %1761
        %v1763 = vsel %vm901, %v1756, 0
        %v1765 = vsel %vm901, %v1758, 0
        %v1767 = vsel %vm901, %v1760, 0
        %v1769 = vsel %vm901, %v1762, 0
        %1771 = vmatpush.xpose.msra.mxu0 0.0
        %1772 = vmatpush.xpose.msra.mxu0 0.0
        %1773 = vmatpush.xpose.msra.mxu0 0.0
        %1774 = vmatpush.xpose.msra.mxu0 0.0
        %1775 = vmatpush.xpose.msra.mxu0 0.0
        %1776 = vmatpush.xpose.msra.mxu0 0.0
        %1777 = vmatpush.xpose.msra.mxu0 0.0
        %1778 = vmatpush.xpose.msra.mxu0 0.0
        %1779 = vmatpush.xpose.msra.mxu0 0.0
        %1780 = vmatpush.xpose.msra.mxu0 0.0
        %1781 = vmatpush.xpose.msra.mxu0 0.0
        %1782 = vmatpush.xpose.msra.mxu0 0.0
        %1783 = vmatpush.xpose.msra.mxu0 0.0
        %1784 = vmatpush.xpose.msra.mxu0 0.0
        %1785 = vmatpush.xpose.msra.mxu0 %v1769
        %1786 = vmatpush.xpose.msra.mxu0 %v1767
        %1787 = vmatmul.f32.gmra.mxu0 %v1763
        %v1788 = vpop.f32.mrf.mxu0
        %v1789 = vadd.f32 0.0, %v1788
        %1790 = vmatmul.f32.gmra.mxu0 %v1765
        %v1791 = vpop.f32.mrf.mxu0
        %v1792 = vadd.f32 0.0, %v1791
        %1793 = vdwg.mxu0
        %v1794 = vmul.f32 %v1789, 0.17677669
        %v1795 = vmul.f32 %v1792, 0.17677669
        %v1796 = vmin.f32 %v1794, %v609
        %v1797 = vmin.f32 %v1795, %v610
        %v1798 = vsel %vm941, %v1796, -inf
        %1799 = vmax.xlane.f32.xlu0 %v1798
        %v1800 = vpop.xlane.xlu0 %1799
        %v1801 = vsel %vm941, %v1797, -inf
        %1802 = vmax.xlane.f32.xlu0 %v1801
        %v1803 = vpop.xlane.xlu0 %1802
        %v1804 = vsub.f32 %v1796, %v1800
        %v1805 = vsub.f32 %v1797, %v1803
        %v1806 = vmul.f32 %v1804, 1.442695
        %v1807 = vpow.pop %v1806
        %v1808 = vmul.f32 %v1805, 1.442695
        %v1809 = vpow.pop %v1808
        %v1810 = vsel %vm941, %v1807, 0.0
        %1811 = vadd.xlane.f32.xlu0 %v1810
        %v1812 = vpop.xlane.xlu0 %1811
        %v1813 = vsel %vm941, %v1809, 0.0
        %1814 = vadd.xlane.f32.xlu0 %v1813
        %v1815 = vpop.xlane.xlu0 %1814
        %v1816 = vrcp.pop %v1812
        %v1817 = vrcp.pop %v1815
        %v1818 = vmul.f32 %v1807, %v1816
        %v1819 = vmul.f32 %v1809, %v1817
        %v1820 = vpack.c.bf16 %v1819, %v1818
        %1822 = vrot.lane.b32.xlu0 %v1732, 96
        %v1823 = vpop.permute.xlu0 %1822
        %v1826 = vsel %vm941, %v1820, 0
        %1828 = vmatpush.bf16.msra.mxu0 0
        %1829 = vmatpush.bf16.msra.mxu0 0
        %1830 = vmatpush.bf16.msra.mxu0 0
        %1831 = vmatpush.bf16.msra.mxu0 0
        %1832 = vmatpush.bf16.msra.mxu0 0
        %1833 = vmatpush.bf16.msra.mxu0 0
        %1834 = vmatpush.bf16.msra.mxu0 0
        %1835 = vmatpush.bf16.msra.mxu0 %v1823
        %1836 = vmatmul.bf16.gmra.mxu0 %v1826
        %v1837 = vpop.f32.mrf.mxu0
        %v1838 = vadd.f32 0.0, %v1837
        %v1839 = vpop.f32.mrf.mxu0
        %v1840 = vadd.f32 0.0, %v1839
        %1841 = vdwg.mxu0
        %v1842 = vld [vmem:[#allocation8 + $0x10] sm:$0xf]
        %v1843 = vld [vmem:[#allocation8 + $0x14] sm:$0xf]
        %v1844 = vld [vmem:[#allocation8 + $0x18] sm:$0xf]
        %v1845 = vld [vmem:[#allocation8 + $0x1c] sm:$0xf]
        %v1846 = vpack.c.bf16 %v1840, %v1838
        %v1851 = vunpack.c.l.b16 %v1842
        %v1852 = vunpack.c.l.b16 %v1843
        %v1853 = vunpack.c.l.b16 %v1844
        %v1854 = vunpack.c.l.b16 %v1845
        %v1855 = vpack.c.b16 %v1852, %v1851
        %v1856 = vpack.c.b16 %v1854, %v1853
        %v1860 = vsel %vm901, %v1846, 0
        %1862 = vmatpush.bf16.msra.mxu0 0
        %1863 = vmatpush.bf16.msra.mxu0 0
        %1864 = vmatpush.bf16.msra.mxu0 0
        %1865 = vmatpush.bf16.msra.mxu0 0
        %1866 = vmatpush.bf16.msra.mxu0 0
        %1867 = vmatpush.bf16.msra.mxu0 0
        %1868 = vmatpush.bf16.msra.mxu0 %v1856
        %1869 = vmatpush.bf16.msra.mxu0 %v1855
        %1870 = vmatmul.bf16.gmra.mxu0 %v1860
        %v1871 = vpop.f32.mrf.mxu0
        %v1872 = vadd.f32 0.0, %v1871
        %v1873 = vpop.f32.mrf.mxu0
        %v1874 = vadd.f32 0.0, %v1873
        %1875 = vdwg.mxu0
        %v1880 = vunpack.c.l.b16 %v1750
        %v1881 = vunpack.c.l.b16 %v1751
        %v1882 = vunpack.c.l.b16 %v1752
        %v1883 = vunpack.c.l.b16 %v1753
        %v1884 = vpack.c.b16 %v1881, %v1880
        %v1885 = vpack.c.b16 %v1883, %v1882
        %v1889 = vsel %vm901, %v1754, 0
        %1891 = vmatpush.bf16.msra.mxu0 0
        %1892 = vmatpush.bf16.msra.mxu0 0
        %1893 = vmatpush.bf16.msra.mxu0 0
        %1894 = vmatpush.bf16.msra.mxu0 0
        %1895 = vmatpush.bf16.msra.mxu0 0
        %1896 = vmatpush.bf16.msra.mxu0 0
        %1897 = vmatpush.bf16.msra.mxu0 %v1885
        %1898 = vmatpush.bf16.msra.mxu0 %v1884
        %1899 = vmatmul.bf16.gmra.mxu0 %v1889
        %v1900 = vpop.f32.mrf.mxu0
        %v1901 = vadd.f32 %v1872, %v1900
        %v1902 = vpop.f32.mrf.mxu0
        %v1903 = vadd.f32 %v1874, %v1902
        %1904 = vdwg.mxu0
        %1905 = vrot.lane.b32.xlu0 %v1539, 64
        %v1906 = vpop.permute.xlu0 %1905
        %1907 = vrot.lane.b32.xlu0 %v1541, 64
        %v1908 = vpop.permute.xlu0 %1907
        %1909 = vrot.lane.b32.xlu0 %v1652, 64
        %v1910 = vpop.permute.xlu0 %1909
        %1911 = vrot.lane.b32.xlu0 %v1654, 64
        %v1912 = vpop.permute.xlu0 %1911
        %v1913 = vsel %vm901, %v1906, 0
        %v1915 = vsel %vm901, %v1908, 0
        %v1917 = vsel %vm901, %v1910, 0
        %v1919 = vsel %vm901, %v1912, 0
        %1921 = vmatpush.xpose.msra.mxu0 0.0
        %1922 = vmatpush.xpose.msra.mxu0 0.0
        %1923 = vmatpush.xpose.msra.mxu0 0.0
        %1924 = vmatpush.xpose.msra.mxu0 0.0
        %1925 = vmatpush.xpose.msra.mxu0 0.0
        %1926 = vmatpush.xpose.msra.mxu0 0.0
        %1927 = vmatpush.xpose.msra.mxu0 0.0
        %1928 = vmatpush.xpose.msra.mxu0 0.0
        %1929 = vmatpush.xpose.msra.mxu0 0.0
        %1930 = vmatpush.xpose.msra.mxu0 0.0
        %1931 = vmatpush.xpose.msra.mxu0 0.0
        %1932 = vmatpush.xpose.msra.mxu0 0.0
        %1933 = vmatpush.xpose.msra.mxu0 0.0
        %1934 = vmatpush.xpose.msra.mxu0 0.0
        %1935 = vmatpush.xpose.msra.mxu0 %v1919
        %1936 = vmatpush.xpose.msra.mxu0 %v1917
        %1937 = vmatmul.f32.gmra.mxu0 %v1913
        %v1938 = vpop.f32.mrf.mxu0
        %v1939 = vadd.f32 0.0, %v1938
        %1940 = vmatmul.f32.gmra.mxu0 %v1915
        %v1941 = vpop.f32.mrf.mxu0
        %v1942 = vadd.f32 0.0, %v1941
        %1943 = vdwg.mxu0
        %v1944 = vmul.f32 %v1939, 0.17677669
        %v1945 = vmul.f32 %v1942, 0.17677669
        %v1946 = vmin.f32 %v1944, %v609
        %v1947 = vmin.f32 %v1945, %v610
        %v1948 = vsel %vm941, %v1946, -inf
        %1949 = vmax.xlane.f32.xlu0 %v1948
        %v1950 = vpop.xlane.xlu0 %1949
        %v1951 = vsel %vm941, %v1947, -inf
        %1952 = vmax.xlane.f32.xlu0 %v1951
        %v1953 = vpop.xlane.xlu0 %1952
        %v1954 = vsub.f32 %v1946, %v1950
        %v1955 = vsub.f32 %v1947, %v1953
        %v1956 = vmul.f32 %v1954, 1.442695
        %v1957 = vpow.pop %v1956
        %v1958 = vmul.f32 %v1955, 1.442695
        %v1959 = vpow.pop %v1958
        %v1960 = vsel %vm941, %v1957, 0.0
        %1961 = vadd.xlane.f32.xlu0 %v1960
        %v1962 = vpop.xlane.xlu0 %1961
        %v1963 = vsel %vm941, %v1959, 0.0
        %1964 = vadd.xlane.f32.xlu0 %v1963
        %v1965 = vpop.xlane.xlu0 %1964
        %v1966 = vrcp.pop %v1962
        %v1967 = vrcp.pop %v1965
        %v1968 = vmul.f32 %v1957, %v1966
        %v1969 = vmul.f32 %v1959, %v1967
        %v1970 = vpack.c.bf16 %v1969, %v1968
        %1971 = vrot.lane.b32.xlu0 %v1732, 64
        %v1972 = vpop.permute.xlu0 %1971
        %v1975 = vsel %vm941, %v1970, 0
        %1977 = vmatpush.bf16.msra.mxu0 0
        %1978 = vmatpush.bf16.msra.mxu0 0
        %1979 = vmatpush.bf16.msra.mxu0 0
        %1980 = vmatpush.bf16.msra.mxu0 0
        %1981 = vmatpush.bf16.msra.mxu0 0
        %1982 = vmatpush.bf16.msra.mxu0 0
        %1983 = vmatpush.bf16.msra.mxu0 0
        %1984 = vmatpush.bf16.msra.mxu0 %v1972
        %1985 = vmatmul.bf16.gmra.mxu0 %v1975
        %v1986 = vpop.f32.mrf.mxu0
        %v1987 = vadd.f32 0.0, %v1986
        %v1988 = vpop.f32.mrf.mxu0
        %v1989 = vadd.f32 0.0, %v1988
        %1990 = vdwg.mxu0
        %v1991 = vld [vmem:[#allocation8 + $0x20] sm:$0xf]
        %v1992 = vld [vmem:[#allocation8 + $0x24] sm:$0xf]
        %v1993 = vld [vmem:[#allocation8 + $0x28] sm:$0xf]
        %v1994 = vld [vmem:[#allocation8 + $0x2c] sm:$0xf]
        %v1995 = vpack.c.bf16 %v1989, %v1987
        %v2000 = vunpack.c.l.b16 %v1991
        %v2001 = vunpack.c.l.b16 %v1992
        %v2002 = vunpack.c.l.b16 %v1993
        %v2003 = vunpack.c.l.b16 %v1994
        %v2004 = vpack.c.b16 %v2001, %v2000
        %v2005 = vpack.c.b16 %v2003, %v2002
        %v2009 = vsel %vm901, %v1995, 0
        %2011 = vmatpush.bf16.msra.mxu0 0
        %2012 = vmatpush.bf16.msra.mxu0 0
        %2013 = vmatpush.bf16.msra.mxu0 0
        %2014 = vmatpush.bf16.msra.mxu0 0
        %2015 = vmatpush.bf16.msra.mxu0 0
        %2016 = vmatpush.bf16.msra.mxu0 0
        %2017 = vmatpush.bf16.msra.mxu0 %v2005
        %2018 = vmatpush.bf16.msra.mxu0 %v2004
        %2019 = vmatmul.bf16.gmra.mxu0 %v2009
        %v2020 = vpop.f32.mrf.mxu0
        %v2021 = vadd.f32 0.0, %v2020
        %v2022 = vpop.f32.mrf.mxu0
        %v2023 = vadd.f32 0.0, %v2022
        %2024 = vdwg.mxu0
        %v2025 = vadd.f32 %v1901, %v2021
        %v2026 = vadd.f32 %v1903, %v2023
        %2027 = vrot.lane.b32.xlu0 %v1539, 32
        %v2028 = vpop.permute.xlu0 %2027
        %2029 = vrot.lane.b32.xlu0 %v1541, 32
        %v2030 = vpop.permute.xlu0 %2029
        %2031 = vrot.lane.b32.xlu0 %v1652, 32
        %v2032 = vpop.permute.xlu0 %2031
        %2033 = vrot.lane.b32.xlu0 %v1654, 32
        %v2034 = vpop.permute.xlu0 %2033
        %v2035 = vsel %vm901, %v2028, 0
        %v2037 = vsel %vm901, %v2030, 0
        %v2039 = vsel %vm901, %v2032, 0
        %v2041 = vsel %vm901, %v2034, 0
        %2043 = vmatpush.xpose.msra.mxu0 0.0
        %2044 = vmatpush.xpose.msra.mxu0 0.0
        %2045 = vmatpush.xpose.msra.mxu0 0.0
        %2046 = vmatpush.xpose.msra.mxu0 0.0
        %2047 = vmatpush.xpose.msra.mxu0 0.0
        %2048 = vmatpush.xpose.msra.mxu0 0.0
        %2049 = vmatpush.xpose.msra.mxu0 0.0
        %2050 = vmatpush.xpose.msra.mxu0 0.0
        %2051 = vmatpush.xpose.msra.mxu0 0.0
        %2052 = vmatpush.xpose.msra.mxu0 0.0
        %2053 = vmatpush.xpose.msra.mxu0 0.0
        %2054 = vmatpush.xpose.msra.mxu0 0.0
        %2055 = vmatpush.xpose.msra.mxu0 0.0
        %2056 = vmatpush.xpose.msra.mxu0 0.0
        %2057 = vmatpush.xpose.msra.mxu0 %v2041
        %2058 = vmatpush.xpose.msra.mxu0 %v2039
        %2059 = vmatmul.f32.gmra.mxu0 %v2035
        %v2060 = vpop.f32.mrf.mxu0
        %v2061 = vadd.f32 0.0, %v2060
        %2062 = vmatmul.f32.gmra.mxu0 %v2037
        %v2063 = vpop.f32.mrf.mxu0
        %v2064 = vadd.f32 0.0, %v2063
        %2065 = vdwg.mxu0
        %v2066 = vmul.f32 %v2061, 0.17677669
        %v2067 = vmul.f32 %v2064, 0.17677669
        %v2068 = vmin.f32 %v2066, %v609
        %v2069 = vmin.f32 %v2067, %v610
        %v2070 = vsel %vm941, %v2068, -inf
        %2071 = vmax.xlane.f32.xlu0 %v2070
        %v2072 = vpop.xlane.xlu0 %2071
        %v2073 = vsel %vm941, %v2069, -inf
        %2074 = vmax.xlane.f32.xlu0 %v2073
        %v2075 = vpop.xlane.xlu0 %2074
        %v2076 = vsub.f32 %v2068, %v2072
        %v2077 = vsub.f32 %v2069, %v2075
        %v2078 = vmul.f32 %v2076, 1.442695
        %v2079 = vpow.pop %v2078
        %v2080 = vmul.f32 %v2077, 1.442695
        %v2081 = vpow.pop %v2080
        %v2082 = vsel %vm941, %v2079, 0.0
        %2083 = vadd.xlane.f32.xlu0 %v2082
        %v2084 = vpop.xlane.xlu0 %2083
        %v2085 = vsel %vm941, %v2081, 0.0
        %2086 = vadd.xlane.f32.xlu0 %v2085
        %v2087 = vpop.xlane.xlu0 %2086
        %v2088 = vrcp.pop %v2084
        %v2089 = vrcp.pop %v2087
        %v2090 = vmul.f32 %v2079, %v2088
        %v2091 = vmul.f32 %v2081, %v2089
        %v2092 = vpack.c.bf16 %v2091, %v2090
        %2093 = vrot.lane.b32.xlu0 %v1732, 32
        %v2094 = vpop.permute.xlu0 %2093
        %v2097 = vsel %vm941, %v2092, 0
        %2099 = vmatpush.bf16.msra.mxu0 0
        %2100 = vmatpush.bf16.msra.mxu0 0
        %2101 = vmatpush.bf16.msra.mxu0 0
        %2102 = vmatpush.bf16.msra.mxu0 0
        %2103 = vmatpush.bf16.msra.mxu0 0
        %2104 = vmatpush.bf16.msra.mxu0 0
        %2105 = vmatpush.bf16.msra.mxu0 0
        %2106 = vmatpush.bf16.msra.mxu0 %v2094
        %2107 = vmatmul.bf16.gmra.mxu0 %v2097
        %v2108 = vpop.f32.mrf.mxu0
        %v2109 = vadd.f32 0.0, %v2108
        %v2110 = vpop.f32.mrf.mxu0
        %v2111 = vadd.f32 0.0, %v2110
        %2112 = vdwg.mxu0
        %v2113 = vld [vmem:[#allocation8 + $0x30] sm:$0xf]
        %v2114 = vld [vmem:[#allocation8 + $0x34] sm:$0xf]
        %v2115 = vld [vmem:[#allocation8 + $0x38] sm:$0xf]
        %v2116 = vld [vmem:[#allocation8 + $0x3c] sm:$0xf]
        %v2117 = vpack.c.bf16 %v2111, %v2109
        %v2122 = vunpack.c.l.b16 %v2113
        %v2123 = vunpack.c.l.b16 %v2114
        %v2124 = vunpack.c.l.b16 %v2115
        %v2125 = vunpack.c.l.b16 %v2116
        %v2126 = vpack.c.b16 %v2123, %v2122
        %v2127 = vpack.c.b16 %v2125, %v2124
        %v2131 = vsel %vm901, %v2117, 0
        %2133 = vmatpush.bf16.msra.mxu0 0
        %2134 = vmatpush.bf16.msra.mxu0 0
        %2135 = vmatpush.bf16.msra.mxu0 0
        %2136 = vmatpush.bf16.msra.mxu0 0
        %2137 = vmatpush.bf16.msra.mxu0 0
        %2138 = vmatpush.bf16.msra.mxu0 0
        %2139 = vmatpush.bf16.msra.mxu0 %v2127
        %2140 = vmatpush.bf16.msra.mxu0 %v2126
        %2141 = vmatmul.bf16.gmra.mxu0 %v2131
        %v2142 = vpop.f32.mrf.mxu0
        %v2143 = vadd.f32 0.0, %v2142
        %v2144 = vpop.f32.mrf.mxu0
        %v2145 = vadd.f32 0.0, %v2144
        %2146 = vdwg.mxu0
        %v2147 = vadd.f32 %v2025, %v2143
        %v2148 = vadd.f32 %v2026, %v2145
        %v2149 = vadd.f32 %v1382, %v2147
        %v2150 = vadd.f32 %v1383, %v2148
        %2151 = vadd.xlane.f32.xlu0 %v2149
        %v2152 = vpop.xlane.xlu0 %2151
        %2153 = vadd.xlane.f32.xlu0 %v2150
        %v2154 = vpop.xlane.xlu0 %2153
        %v2155 = vmul.f32 %v2152, %v621
        %v2156 = vmul.f32 %v2154, %v621
        %v2157 = vsub.f32 %v2149, %v2155
        %v2158 = vsub.f32 %v2150, %v2156
        %v2159 = vmul.f32 %v2157, %v2157
        %v2160 = vmul.f32 %v2158, %v2158
        %2161 = vadd.xlane.f32.xlu0 %v2159
        %v2162 = vpop.xlane.xlu0 %2161
        %2163 = vadd.xlane.f32.xlu0 %v2160
        %v2164 = vpop.xlane.xlu0 %2163
        %v2165 = vmul.f32 %v2162, 0.007874016
        %v2166 = vmul.f32 %v2164, 0.007874016
        %v2167 = vrsqrt.pop %v2165
        %v2168 = vmul.f32 %v2167, %v2165
        %v2169 = vmul.f32 %v2168, %v2167
        %v2170 = vmul.f32 0.5, %v2169
        %v2171 = vsub.f32 1.5, %v2170
        %v2172 = vmul.f32 %v2167, %v2171
        %v2173 = vmul.f32 %v2165, %v2172
        %vm2174 = vcmp.eq.f32.partialorder %v2165, inf
        %v2175 = vsel %vm2174, %v2165, %v2173
        %vm2176 = vcmp.eq.f32.partialorder %v2165, 0.0
        %v2177 = vand.u32 %v2165, 2147483648
        %v2178 = vsel %vm2176, %v2177, %v2175
        %v2179 = vrsqrt.pop %v2166
        %v2180 = vmul.f32 %v2179, %v2166
        %v2181 = vmul.f32 %v2180, %v2179
        %v2182 = vmul.f32 0.5, %v2181
        %v2183 = vsub.f32 1.5, %v2182
        %v2184 = vmul.f32 %v2179, %v2183
        %v2185 = vmul.f32 %v2166, %v2184
        %vm2186 = vcmp.eq.f32.partialorder %v2166, inf
        %v2187 = vsel %vm2186, %v2166, %v2185
        %vm2188 = vcmp.eq.f32.partialorder %v2166, 0.0
        %v2189 = vand.u32 %v2166, 2147483648
        %v2190 = vsel %vm2188, %v2189, %v2187
        %v2191 = vadd.f32 %v2178, 1e-06
        %v2192 = vadd.f32 %v2190, 1e-06
        %v2193 = vrcp.pop %v2191
        %v2194 = vmul.f32 %v2191, %v2193
        %v2195 = vsub.f32 1.0, %v2194
        %v2196 = vmul.f32 %v2193, %v2195
        %v2197 = vadd.f32 %v2193, %v2196
        %vm2198 = vweird.f32 %v2191
        %vm2199 = vweird.f32 %v2193
        %vm2200 = vmor %vm2198, %vm2199
        %v2201 = vsel %vm2200, %v2193, %v2197
        %v2202 = vand.u32 2147483647, %v2191
        %vm2203 = vcmp.eq.f32.partialorder %v2202, 8.507059e+37
        %v2204 = vand.u32 %v2191, 2147483648
        %v2205 = vor.u32 1.1754944e-38, %v2204
        %v2206 = vsel %vm2203, %v2205, %v2201
        %v2207 = vmul.f32 1.0, %v2206
        %v2208 = vrcp.pop %v2192
        %v2209 = vmul.f32 %v2192, %v2208
        %v2210 = vsub.f32 1.0, %v2209
        %v2211 = vmul.f32 %v2208, %v2210
        %v2212 = vadd.f32 %v2208, %v2211
        %vm2213 = vweird.f32 %v2192
        %vm2214 = vweird.f32 %v2208
        %vm2215 = vmor %vm2213, %vm2214
        %v2216 = vsel %vm2215, %v2208, %v2212
        %v2217 = vand.u32 2147483647, %v2192
        %vm2218 = vcmp.eq.f32.partialorder %v2217, 8.507059e+37
        %v2219 = vand.u32 %v2192, 2147483648
        %v2220 = vor.u32 1.1754944e-38, %v2219
        %v2221 = vsel %vm2218, %v2220, %v2216
        %v2222 = vmul.f32 1.0, %v2221
        %v2223 = vmul.f32 %v2157, %v2207
        %v2224 = vmul.f32 %v2158, %v2222
        %v2225 = vperm.slane %v606, 4
        %v2226 = vmul.f32 %v2225, %v2223
        %v2227 = vmul.f32 %v2225, %v2224
        %v2228 = vperm.slane %v606, 5
        %v2229 = vadd.f32 %v2226, %v2228
        %v2230 = vadd.f32 %v2227, %v2228
        %v2231 = vpack.c.bf16 %v2230, %v2229
        %v2232 = vld [vmem:[#allocation10] sm:$0xff]
        %v2233 = vld [vmem:[#allocation10 + $0x8] sm:$0xff]
        %v2234 = vld [vmem:[#allocation10 + $0x10] sm:$0xff]
        %v2235 = vld [vmem:[#allocation10 + $0x18] sm:$0xff]
        %v2236 = vld [vmem:[#allocation10 + $0x20] sm:$0xff]
        %v2237 = vld [vmem:[#allocation10 + $0x28] sm:$0xff]
        %v2238 = vld [vmem:[#allocation10 + $0x30] sm:$0xff]
        %v2239 = vld [vmem:[#allocation10 + $0x38] sm:$0xff]
        %v2240 = vld [vmem:[#allocation10 + $0x40] sm:$0xff]
        %v2241 = vld [vmem:[#allocation10 + $0x48] sm:$0xff]
        %v2242 = vld [vmem:[#allocation10 + $0x50] sm:$0xff]
        %v2243 = vld [vmem:[#allocation10 + $0x58] sm:$0xff]
        %v2244 = vld [vmem:[#allocation10 + $0x60] sm:$0xff]
        %v2245 = vld [vmem:[#allocation10 + $0x68] sm:$0xff]
        %v2246 = vld [vmem:[#allocation10 + $0x70] sm:$0xff]
        %v2247 = vld [vmem:[#allocation10 + $0x78] sm:$0xff]
        %v2248 = vld [vmem:[%s11] sm:$0x3]
        %v2250 = vperm.slane %v2248, 0
        %v2251 = vperm.slane %v2248, 1
        %v2270 = vunpack.c.l.b16 %v2232
        %v2271 = vunpack.c.h.b16 %v2232
        %v2272 = vunpack.c.l.b16 %v2233
        %v2273 = vunpack.c.h.b16 %v2233
        %v2274 = vunpack.c.l.b16 %v2234
        %v2275 = vunpack.c.h.b16 %v2234
        %v2276 = vunpack.c.l.b16 %v2235
        %v2277 = vunpack.c.h.b16 %v2235
        %v2278 = vunpack.c.l.b16 %v2236
        %v2279 = vunpack.c.h.b16 %v2236
        %v2280 = vunpack.c.l.b16 %v2237
        %v2281 = vunpack.c.h.b16 %v2237
        %v2282 = vunpack.c.l.b16 %v2238
        %v2283 = vunpack.c.h.b16 %v2238
        %v2284 = vunpack.c.l.b16 %v2239
        %v2285 = vunpack.c.h.b16 %v2239
        %v2286 = vunpack.c.l.b16 %v2240
        %v2287 = vunpack.c.h.b16 %v2240
        %v2288 = vunpack.c.l.b16 %v2241
        %v2289 = vunpack.c.h.b16 %v2241
        %v2290 = vunpack.c.l.b16 %v2242
        %v2291 = vunpack.c.h.b16 %v2242
        %v2292 = vunpack.c.l.b16 %v2243
        %v2293 = vunpack.c.h.b16 %v2243
        %v2294 = vunpack.c.l.b16 %v2244
        %v2295 = vunpack.c.h.b16 %v2244
        %v2296 = vunpack.c.l.b16 %v2245
        %v2297 = vunpack.c.h.b16 %v2245
        %v2298 = vunpack.c.l.b16 %v2246
        %v2299 = vunpack.c.h.b16 %v2246
        %v2300 = vunpack.c.l.b16 %v2247
        %v2301 = vunpack.c.h.b16 %v2247
        %v2302 = vpack.c.b16 %v2272, %v2270
        %v2303 = vpack.c.b16 %v2273, %v2271
        %v2304 = vpack.c.b16 %v2276, %v2274
        %v2305 = vpack.c.b16 %v2277, %v2275
        %v2306 = vpack.c.b16 %v2280, %v2278
        %v2307 = vpack.c.b16 %v2281, %v2279
        %v2308 = vpack.c.b16 %v2284, %v2282
        %v2309 = vpack.c.b16 %v2285, %v2283
        %v2310 = vpack.c.b16 %v2288, %v2286
        %v2311 = vpack.c.b16 %v2289, %v2287
        %v2312 = vpack.c.b16 %v2292, %v2290
        %v2313 = vpack.c.b16 %v2293, %v2291
        %v2314 = vpack.c.b16 %v2296, %v2294
        %v2315 = vpack.c.b16 %v2297, %v2295
        %v2316 = vpack.c.b16 %v2300, %v2298
        %v2317 = vpack.c.b16 %v2301, %v2299
        %2334 = vmatpush.bf16.msra.mxu0 %v2316
        %2335 = vmatpush.bf16.msra.mxu0 %v2314
        %2336 = vmatpush.bf16.msra.mxu0 %v2312
        %2337 = vmatpush.bf16.msra.mxu0 %v2310
        %2338 = vmatpush.bf16.msra.mxu0 %v2308
        %2339 = vmatpush.bf16.msra.mxu0 %v2306
        %2340 = vmatpush.bf16.msra.mxu0 %v2304
        %2341 = vmatpush.bf16.msra.mxu0 %v2302
        %2342 = vmatmul.bf16.gmra.mxu0 %v2231
        %v2343 = vpop.f32.mrf.mxu0
        %v2344 = vadd.f32 %v2250, %v2343
        %v2345 = vpop.f32.mrf.mxu0
        %v2346 = vadd.f32 %v2250, %v2345
        %2347 = vdwg.mxu0
        %2348 = vmatpush.bf16.msra.mxu0 %v2317
        %2349 = vmatpush.bf16.msra.mxu0 %v2315
        %2350 = vmatpush.bf16.msra.mxu0 %v2313
        %2351 = vmatpush.bf16.msra.mxu0 %v2311
        %2352 = vmatpush.bf16.msra.mxu0 %v2309
        %2353 = vmatpush.bf16.msra.mxu0 %v2307
        %2354 = vmatpush.bf16.msra.mxu0 %v2305
        %2355 = vmatpush.bf16.msra.mxu0 %v2303
        %2356 = vmatmul.bf16.gmra.mxu0 %v2231
        %v2357 = vpop.f32.mrf.mxu0
        %v2358 = vadd.f32 %v2251, %v2357
        %v2359 = vpop.f32.mrf.mxu0
        %v2360 = vadd.f32 %v2251, %v2359
        %2361 = vdwg.mxu0
        %v2362 = vmax.f32 %v2344, 0.0
        %v2363 = vmax.f32 %v2358, 0.0
        %v2364 = vmax.f32 %v2346, 0.0
        %v2365 = vmax.f32 %v2360, 0.0
        %v2366 = vpack.c.bf16 %v2364, %v2362
        %v2367 = vpack.c.bf16 %v2365, %v2363
        %v2368 = vld [vmem:[#allocation11] sm:$0xf]
        %v2369 = vld [vmem:[#allocation11 + $0x4] sm:$0xf]
        %v2370 = vld [vmem:[#allocation11 + $0x8] sm:$0xf]
        %v2371 = vld [vmem:[#allocation11 + $0xc] sm:$0xf]
        %v2372 = vld [vmem:[#allocation11 + $0x10] sm:$0xf]
        %v2373 = vld [vmem:[#allocation11 + $0x14] sm:$0xf]
        %v2374 = vld [vmem:[#allocation11 + $0x18] sm:$0xf]
        %v2375 = vld [vmem:[#allocation11 + $0x1c] sm:$0xf]
        %v2376 = vld [vmem:[#allocation11 + $0x20] sm:$0xf]
        %v2377 = vld [vmem:[#allocation11 + $0x24] sm:$0xf]
        %v2378 = vld [vmem:[#allocation11 + $0x28] sm:$0xf]
        %v2379 = vld [vmem:[#allocation11 + $0x2c] sm:$0xf]
        %v2380 = vld [vmem:[#allocation11 + $0x30] sm:$0xf]
        %v2381 = vld [vmem:[#allocation11 + $0x34] sm:$0xf]
        %v2382 = vld [vmem:[#allocation11 + $0x38] sm:$0xf]
        %v2383 = vld [vmem:[#allocation11 + $0x3c] sm:$0xf]
        %v2384 = vld [vmem:[#allocation11 + $0x40] sm:$0xf]
        %v2385 = vld [vmem:[#allocation11 + $0x44] sm:$0xf]
        %v2386 = vld [vmem:[#allocation11 + $0x48] sm:$0xf]
        %v2387 = vld [vmem:[#allocation11 + $0x4c] sm:$0xf]
        %v2388 = vld [vmem:[#allocation11 + $0x50] sm:$0xf]
        %v2389 = vld [vmem:[#allocation11 + $0x54] sm:$0xf]
        %v2390 = vld [vmem:[#allocation11 + $0x58] sm:$0xf]
        %v2391 = vld [vmem:[#allocation11 + $0x5c] sm:$0xf]
        %v2392 = vld [vmem:[#allocation11 + $0x60] sm:$0xf]
        %v2393 = vld [vmem:[#allocation11 + $0x64] sm:$0xf]
        %v2394 = vld [vmem:[#allocation11 + $0x68] sm:$0xf]
        %v2395 = vld [vmem:[#allocation11 + $0x6c] sm:$0xf]
        %v2396 = vld [vmem:[#allocation11 + $0x70] sm:$0xf]
        %v2397 = vld [vmem:[#allocation11 + $0x74] sm:$0xf]
        %v2398 = vld [vmem:[#allocation11 + $0x78] sm:$0xf]
        %v2399 = vld [vmem:[#allocation11 + $0x7c] sm:$0xf]
        %v2400 = vld [vmem:[%s13] sm:$0x1]
        %v2402 = vperm.slane %v2400, 0
        %v2436 = vunpack.c.l.b16 %v2368
        %v2437 = vunpack.c.l.b16 %v2369
        %v2438 = vunpack.c.l.b16 %v2370
        %v2439 = vunpack.c.l.b16 %v2371
        %v2440 = vunpack.c.l.b16 %v2372
        %v2441 = vunpack.c.l.b16 %v2373
        %v2442 = vunpack.c.l.b16 %v2374
        %v2443 = vunpack.c.l.b16 %v2375
        %v2444 = vunpack.c.l.b16 %v2376
        %v2445 = vunpack.c.l.b16 %v2377
        %v2446 = vunpack.c.l.b16 %v2378
        %v2447 = vunpack.c.l.b16 %v2379
        %v2448 = vunpack.c.l.b16 %v2380
        %v2449 = vunpack.c.l.b16 %v2381
        %v2450 = vunpack.c.l.b16 %v2382
        %v2451 = vunpack.c.l.b16 %v2383
        %v2452 = vunpack.c.l.b16 %v2384
        %v2453 = vunpack.c.l.b16 %v2385
        %v2454 = vunpack.c.l.b16 %v2386
        %v2455 = vunpack.c.l.b16 %v2387
        %v2456 = vunpack.c.l.b16 %v2388
        %v2457 = vunpack.c.l.b16 %v2389
        %v2458 = vunpack.c.l.b16 %v2390
        %v2459 = vunpack.c.l.b16 %v2391
        %v2460 = vunpack.c.l.b16 %v2392
        %v2461 = vunpack.c.l.b16 %v2393
        %v2462 = vunpack.c.l.b16 %v2394
        %v2463 = vunpack.c.l.b16 %v2395
        %v2464 = vunpack.c.l.b16 %v2396
        %v2465 = vunpack.c.l.b16 %v2397
        %v2466 = vunpack.c.l.b16 %v2398
        %v2467 = vunpack.c.l.b16 %v2399
        %v2468 = vpack.c.b16 %v2437, %v2436
        %v2469 = vpack.c.b16 %v2439, %v2438
        %v2470 = vpack.c.b16 %v2441, %v2440
        %v2471 = vpack.c.b16 %v2443, %v2442
        %v2472 = vpack.c.b16 %v2445, %v2444
        %v2473 = vpack.c.b16 %v2447, %v2446
        %v2474 = vpack.c.b16 %v2449, %v2448
        %v2475 = vpack.c.b16 %v2451, %v2450
        %v2476 = vpack.c.b16 %v2453, %v2452
        %v2477 = vpack.c.b16 %v2455, %v2454
        %v2478 = vpack.c.b16 %v2457, %v2456
        %v2479 = vpack.c.b16 %v2459, %v2458
        %v2480 = vpack.c.b16 %v2461, %v2460
        %v2481 = vpack.c.b16 %v2463, %v2462
        %v2482 = vpack.c.b16 %v2465, %v2464
        %v2483 = vpack.c.b16 %v2467, %v2466
        %2500 = vmatpush.bf16.msra.mxu0 %v2475
        %2501 = vmatpush.bf16.msra.mxu0 %v2474
        %2502 = vmatpush.bf16.msra.mxu0 %v2473
        %2503 = vmatpush.bf16.msra.mxu0 %v2472
        %2504 = vmatpush.bf16.msra.mxu0 %v2471
        %2505 = vmatpush.bf16.msra.mxu0 %v2470
        %2506 = vmatpush.bf16.msra.mxu0 %v2469
        %2507 = vmatpush.bf16.msra.mxu0 %v2468
        %2508 = vmatmul.bf16.gmra.mxu0 %v2366
        %v2509 = vpop.f32.mrf.mxu0
        %v2510 = vadd.f32 %v2402, %v2509
        %v2511 = vpop.f32.mrf.mxu0
        %v2512 = vadd.f32 %v2402, %v2511
        %2513 = vdwg.mxu0
        %2514 = vmatpush.bf16.msra.mxu0 %v2483
        %2515 = vmatpush.bf16.msra.mxu0 %v2482
        %2516 = vmatpush.bf16.msra.mxu0 %v2481
        %2517 = vmatpush.bf16.msra.mxu0 %v2480
        %2518 = vmatpush.bf16.msra.mxu0 %v2479
        %2519 = vmatpush.bf16.msra.mxu0 %v2478
        %2520 = vmatpush.bf16.msra.mxu0 %v2477
        %2521 = vmatpush.bf16.msra.mxu0 %v2476
        %2522 = vmatmul.bf16.gmra.mxu0 %v2367
        %v2523 = vpop.f32.mrf.mxu0
        %v2524 = vadd.f32 %v2510, %v2523
        %v2525 = vpop.f32.mrf.mxu0
        %v2526 = vadd.f32 %v2512, %v2525
        %2527 = vdwg.mxu0
        %v2528 = vadd.f32 %v2149, %v2524
        %v2529 = vadd.f32 %v2150, %v2526
        %2530 = vst [vmem:[%s588] sm:$0xff] %v2528
        %2531 = vst [vmem:[%s588 + $0x8] sm:$0xff] %v2529
        %s2532 = sand.u32 %s349, 1
        %s2533 = scalar_lea.sflag [#allocation4], %s2532
        %s2534 = sand.u32 %s349, 1
        %s2535 = smul.addr %s2534, 16
        %s2536 = scalar_lea.vmem [#allocation13], %s2535
        // Predicated region
        $region101: #{decoder_block_forward.1} parent=75 // pred_check
          %p2537 = pneg %p359
        $region102: #{decoder_block_forward.1} parent=75 // pred_check_branch
          %2539 = sbr.rel (%p2537) target = $region104
        $region103: #{decoder_block_forward.1} parent=75 // pred_region
          %2541 = vsyncadd %s2533, 0
          %s2542 = smul.addr %s32, 2
          %s2543 = smul.addr %s2542, 8
          %s2544 = scalar_lea.hbm %s14, %s2543
          %s2545 = sshll.u32 %s2536, 4
          %s2546 = int_to_ptr.vmem [resolvable:$true] %s2545
          %s2547 = sshll.u32 %s2544, 4
          %s2548 = int_to_ptr.hbm [resolvable:$true] %s2547
          %2553 = dma.vmem_to_hbm [thread:$0]  %s2546, 256, %s2548, %s2533, 128, 128, 8
        $region104: #{decoder_block_forward.1} parent=75 // pred_fallthru
          _
      $region76: #{decoder_block_forward.1} parent=5 // pred_fallthru
        _
      %p2554 = scmp.le.s32.totalorder 2, %s27
      // Predicated region
      $region105: #{decoder_block_forward.1} parent=5 // pred_check
        %p2555 = pneg %p2554
      $region106: #{decoder_block_forward.1} parent=5 // pred_check_branch
        %2557 = sbr.rel (%p2555) target = $region108
      $region107: #{decoder_block_forward.1} parent=5 // pred_region
        %s2558 = ssub.s32 %s27, 2
        // Predicated region
        $region109: #{decoder_block_forward.1} parent=107 // pred_check
          %p2559 = pneg %p365
        $region110: #{decoder_block_forward.1} parent=107 // pred_check_branch
          %2561 = sbr.rel (%p2559) target = $region112
        $region111: #{decoder_block_forward.1} parent=107 // pred_region
          %s2562 = sand.u32 %s350, 1
          %s2563 = scalar_lea.sflag [#allocation4], %s2562
          %s2564 = sand.u32 %s350, 1
          %s2565 = smul.addr %s2564, 16
          %s2566 = scalar_lea.vmem [#allocation13], %s2565
          %2568 = dma.done %s2563, 256
        $region112: #{decoder_block_forward.1} parent=107 // pred_fallthru
          _
      $region108: #{decoder_block_forward.1} parent=5 // pred_fallthru
        _
    $region6: #{decoder_block_forward.1} parent=1 // loop_footer
      %s31 = sadd.s32 1, %s27
    $region7: #{decoder_block_forward.1} parent=1 // loop_footer_branch
      %26 = sbr.rel target = $region3
    $region8: #{decoder_block_forward.1} parent=1 // loop_exit
      _
    %2569 = vsyncpa [#allocation3], 1
    %s2570 = scalar_lea.sflag [#allocation3], 1
    %2571 = vsyncpa %s2570, 1
    %2572 = vsyncpa [#allocation6], 1
    %2573 = vsyncpa [#allocation9], 1
    %2574 = vsyncpa [#allocation12], 1
    %2575 = vsyncpa [#allocation4], 1
    %s2576 = scalar_lea.sflag [#allocation4], 1
    %2577 = vsyncpa %s2576, 1

</llo_original>
